<compile_context>
chip_gen: v6e
topology: v6e:2x2x1
jax: 0.10.0
libtpu: 0.0.40
codegen_flags: <defaults>
</compile_context>

<pallas_src>
import functools

import jax
import jax.numpy as jnp
from jax.experimental import pallas as pl
from jax.experimental.pallas import tpu as pltpu

_LANE = 128
_EPS = 1e-5
_VMEM_LIMIT = 32 * 1024 * 1024   # fits v7x (64 MiB) with headroom; fine on v5e/v6e


def _round_up(x, m):
    return (x + m - 1) // m * m


# ----------------------------- Pallas kernels ------------------------------

def _zero_border(xpad_ref, ho, wo, cin):
    """Zero only the 1-pixel border of the padded scratch (interior is fully
    overwritten every step).  Done per-step so it is safe when the batch grid
    axis is split across TensorCores."""
    dt = xpad_ref.dtype
    xpad_ref[0:1, :, :] = jnp.zeros((1, wo + 2, cin), dt)
    xpad_ref[ho + 1:ho + 2, :, :] = jnp.zeros((1, wo + 2, cin), dt)
    xpad_ref[:, 0:1, :] = jnp.zeros((ho + 2, 1, cin), dt)
    xpad_ref[:, wo + 1:wo + 2, :] = jnp.zeros((ho + 2, 1, cin), dt)


def _conv3x3_s1_bn_kernel(*refs, ho, wo, cin, has_sc):
    """3x3 conv (pad=1, stride=1) + per-image BN partial stats.

    The spatial zero-pad is built in a bf16 VMEM scratch (no wrapper HBM pass).
    Optionally fuses the 1x1 channel-changing shortcut conv (+ its BN stats);
    the shortcut input is exactly the center tap of the loaded tile.
    """
    if has_sc:
        (x_ref, w_ref, wsc_ref,
         y_ref, s_ref, q_ref, ysc_ref, ssc_ref, qsc_ref, xpad_ref) = refs
    else:
        x_ref, w_ref, y_ref, s_ref, q_ref, xpad_ref = refs

    _zero_border(xpad_ref, ho, wo, cin)
    xpad_ref[1:ho + 1, 1:wo + 1, :] = x_ref[0]          # already bf16

    hw = ho * wo
    acc = None
    asc = None
    for kh in range(3):
        for kw in range(3):
            tap = xpad_ref[kh:kh + ho, kw:kw + wo, :].reshape(hw, cin)
            t = kh * 3 + kw
            part = jnp.dot(tap, w_ref[t * cin:(t + 1) * cin, :],
                           preferred_element_type=jnp.float32)
            acc = part if acc is None else acc + part
            if has_sc and kh == 1 and kw == 1:
                asc = jnp.dot(tap, wsc_ref[...],
                              preferred_element_type=jnp.float32)

    y_ref[0] = acc.astype(y_ref.dtype)
    s_ref[...] = jnp.sum(acc, axis=0, keepdims=True)[None]
    q_ref[...] = jnp.sum(acc * acc, axis=0, keepdims=True)[None]
    if has_sc:
        ysc_ref[0] = asc.astype(ysc_ref.dtype)
        ssc_ref[...] = jnp.sum(asc, axis=0, keepdims=True)[None]
        qsc_ref[...] = jnp.sum(asc * asc, axis=0, keepdims=True)[None]


def _conv3x3_phase_bn_kernel(*refs, stride, ho, wo, cin, has_sc):
    """Strided 3x3 conv (pad=1) on a phase-decomposed input + BN partial stats.

    The wrapper rearranges the (already spatially padded) input so that every
    tap is a unit-stride slice with static offsets.  Optionally fuses the 1x1
    downsample-shortcut conv (center tap) + its BN stats.
    """
    if has_sc:
        (xph_ref, w_ref, wsc_ref,
         y_ref, s_ref, q_ref, ysc_ref, ssc_ref, qsc_ref) = refs
    else:
        xph_ref, w_ref, y_ref, s_ref, q_ref = refs

    hw = ho * wo
    acc = None
    asc = None
    for kh in range(3):
        for kw in range(3):
            p = (kh % stride) * stride + (kw % stride)    # phase index
            qh, qw = kh // stride, kw // stride           # phase-local offset
            tap = xph_ref[p, qh:qh + ho, qw:qw + wo, :].reshape(hw, cin)
            t = kh * 3 + kw
            part = jnp.dot(tap, w_ref[t * cin:(t + 1) * cin, :],
                           preferred_element_type=jnp.float32)
            acc = part if acc is None else acc + part
            if has_sc and kh == 1 and kw == 1:
                asc = jnp.dot(tap, wsc_ref[...],
                              preferred_element_type=jnp.float32)

    y_ref[0] = acc.astype(y_ref.dtype)
    s_ref[...] = jnp.sum(acc, axis=0, keepdims=True)[None]
    q_ref[...] = jnp.sum(acc * acc, axis=0, keepdims=True)[None]
    if has_sc:
        ysc_ref[0] = asc.astype(ysc_ref.dtype)
        ssc_ref[...] = jnp.sum(asc, axis=0, keepdims=True)[None]
        qsc_ref[...] = jnp.sum(asc * asc, axis=0, keepdims=True)[None]


def _affine_relu_conv3x3_bn_kernel(y1_ref, w_ref, s1_ref, b1_ref,
                                   y_ref, s_ref, q_ref, xpad_ref,
                                   *, ho, wo, cin):
    """Fused: bn1 affine + ReLU prologue -> 3x3 (pad=1, stride=1) conv -> BN stats."""
    _zero_border(xpad_ref, ho, wo, cin)
    # bn1 affine + ReLU in f32, single cast to bf16 into the padded scratch.
    a = jnp.maximum(y1_ref[0].astype(jnp.float32) * s1_ref[...] + b1_ref[...],
                    0.0)
    xpad_ref[1:ho + 1, 1:wo + 1, :] = a.astype(xpad_ref.dtype)

    hw = ho * wo
    acc = None
    for kh in range(3):
        for kw in range(3):
            tap = xpad_ref[kh:kh + ho, kw:kw + wo, :].reshape(hw, cin)
            t = kh * 3 + kw
            part = jnp.dot(tap, w_ref[t * cin:(t + 1) * cin, :],
                           preferred_element_type=jnp.float32)
            acc = part if acc is None else acc + part

    y_ref[0] = acc.astype(y_ref.dtype)
    s_ref[...] = jnp.sum(acc, axis=0, keepdims=True)[None]
    q_ref[...] = jnp.sum(acc * acc, axis=0, keepdims=True)[None]


def _residual_relu_kernel(y2_ref, r_ref, s2_ref, b2_ref, sr_ref, br_ref, o_ref):
    # relu( bn2(conv2) + shortcut ), both branches folded to x*scale + bias.
    main = y2_ref[...].astype(jnp.float32) * s2_ref[...] + b2_ref[...]
    res = r_ref[...].astype(jnp.float32) * sr_ref[...] + br_ref[...]
    o_ref[...] = jnp.maximum(main + res, 0.0)


# ------------------------------ Pallas wrappers -----------------------------

def _conv1_s1(x, w1m, wscm, n, ho, wo, cin_p, cp):
    hw = ho * wo
    has_sc = wscm is not None
    kern = functools.partial(_conv3x3_s1_bn_kernel, ho=ho, wo=wo, cin=cin_p,
                             has_sc=has_sc)

    x_spec = pl.BlockSpec((1, ho, wo, cin_p), lambda i: (i, 0, 0, 0))
    w_spec = pl.BlockSpec((9 * cin_p, cp), lambda i: (0, 0))
    y_spec = pl.BlockSpec((1, hw, cp), lambda i: (i, 0, 0))
    v_spec = pl.BlockSpec((1, 1, cp), lambda i: (i, 0, 0))
    y_shape = jax.ShapeDtypeStruct((n, hw, cp), jnp.bfloat16)
    v_shape = jax.ShapeDtypeStruct((n, 1, cp), jnp.float32)

    in_specs = [x_spec, w_spec]
    args = [x, w1m]
    out_specs = [y_spec, v_spec, v_spec]
    out_shape = [y_shape, v_shape, v_shape]
    if has_sc:
        in_specs.append(pl.BlockSpec((cin_p, cp), lambda i: (0, 0)))
        args.append(wscm)
        out_specs += [y_spec, v_spec, v_spec]
        out_shape += [y_shape, v_shape, v_shape]

    return pl.pallas_call(
        kern,
        grid=(n,),
        in_specs=in_specs,
        out_specs=tuple(out_specs),
        out_shape=tuple(out_shape),
        scratch_shapes=[pltpu.VMEM((ho + 2, wo + 2, cin_p), jnp.bfloat16)],
        compiler_params=pltpu.CompilerParams(
            dimension_semantics=("parallel",),
            vmem_limit_bytes=_VMEM_LIMIT),
    )(*args)


def _conv1_phase(xph, w1m, wscm, n, stride, ho, wo, cin_p, cp):
    hw = ho * wo
    ss = stride * stride
    ph_h, ph_w = xph.shape[1], xph.shape[2]
    has_sc = wscm is not None
    kern = functools.partial(_conv3x3_phase_bn_kernel, stride=stride,
                             ho=ho, wo=wo, cin=cin_p, has_sc=has_sc)

    x_spec = pl.BlockSpec((ss, ph_h, ph_w, cin_p), lambda i: (i, 0, 0, 0))
    w_spec = pl.BlockSpec((9 * cin_p, cp), lambda i: (0, 0))
    y_spec = pl.BlockSpec((1, hw, cp), lambda i: (i, 0, 0))
    v_spec = pl.BlockSpec((1, 1, cp), lambda i: (i, 0, 0))
    y_shape = jax.ShapeDtypeStruct((n, hw, cp), jnp.bfloat16)
    v_shape = jax.ShapeDtypeStruct((n, 1, cp), jnp.float32)

    in_specs = [x_spec, w_spec]
    args = [xph, w1m]
    out_specs = [y_spec, v_spec, v_spec]
    out_shape = [y_shape, v_shape, v_shape]
    if has_sc:
        in_specs.append(pl.BlockSpec((cin_p, cp), lambda i: (0, 0)))
        args.append(wscm)
        out_specs += [y_spec, v_spec, v_spec]
        out_shape += [y_shape, v_shape, v_shape]

    return pl.pallas_call(
        kern,
        grid=(n,),
        in_specs=in_specs,
        out_specs=tuple(out_specs),
        out_shape=tuple(out_shape),
        compiler_params=pltpu.CompilerParams(
            dimension_semantics=("parallel",),
            vmem_limit_bytes=_VMEM_LIMIT),
    )(*args)


def _conv2(y1img, w2m, s1, b1, n, ho, wo, cp):
    hw = ho * wo
    kern = functools.partial(_affine_relu_conv3x3_bn_kernel,
                             ho=ho, wo=wo, cin=cp)
    return pl.pallas_call(
        kern,
        grid=(n,),
        in_specs=[
            pl.BlockSpec((1, ho, wo, cp), lambda i: (i, 0, 0, 0)),
            pl.BlockSpec((9 * cp, cp), lambda i: (0, 0)),
            pl.BlockSpec((1, 1, cp), lambda i: (0, 0, 0)),
            pl.BlockSpec((1, 1, cp), lambda i: (0, 0, 0)),
        ],
        out_specs=(
            pl.BlockSpec((1, hw, cp), lambda i: (i, 0, 0)),
            pl.BlockSpec((1, 1, cp), lambda i: (i, 0, 0)),
            pl.BlockSpec((1, 1, cp), lambda i: (i, 0, 0)),
        ),
        out_shape=(
            jax.ShapeDtypeStruct((n, hw, cp), jnp.bfloat16),
            jax.ShapeDtypeStruct((n, 1, cp), jnp.float32),
            jax.ShapeDtypeStruct((n, 1, cp), jnp.float32),
        ),
        scratch_shapes=[pltpu.VMEM((ho + 2, wo + 2, cp), jnp.bfloat16)],
        compiler_params=pltpu.CompilerParams(
            dimension_semantics=("parallel",),
            vmem_limit_bytes=_VMEM_LIMIT),
    )(y1img, w2m, s1, b1)


def _residual(y2, res, s2, b2, sr, br):
    m, cp = y2.shape
    tm = m if m <= 1024 else 1024            # large tiles; ragged tail handled
    mat = pl.BlockSpec((tm, cp), lambda i: (i, 0))
    vec = pl.BlockSpec((1, cp), lambda i: (0, 0))
    return pl.pallas_call(
        _residual_relu_kernel,
        grid=(pl.cdiv(m, tm),),
        in_specs=[mat, mat, vec, vec, vec, vec],
        out_specs=pl.BlockSpec((tm, cp), lambda i: (i, 0)),
        out_shape=jax.ShapeDtypeStruct((m, cp), jnp.float32),
        compiler_params=pltpu.CompilerParams(
            dimension_semantics=("parallel",),
            vmem_limit_bytes=_VMEM_LIMIT),
    )(y2, res, s2, b2, sr, br)


# ------------------------------ forward (glue) ------------------------------

@functools.partial(jax.jit, static_argnums=2)
def basic_block_forward(x_nchw, params, stride):
    n, cin, h, w = x_nchw.shape
    planes = params["w1"].shape[0]
    cin_p = _round_up(cin, _LANE)
    cp = _round_up(planes, _LANE)
    s = int(stride)
    ho = (h - 1) // s + 1
    wo = (w - 1) // s + 1
    m = n * ho * wo
    has_sc = (s != 1) or (cin != planes)

    # NHWC, channel-padded, bf16 activations in HBM (f32 accumulation in-kernel).
    x = jnp.transpose(x_nchw, (0, 2, 3, 1)).astype(jnp.bfloat16)
    x = jnp.pad(x, ((0, 0), (0, 0), (0, 0), (0, cin_p - cin)))

    def pack_w3x3(wt, ci, ci_p):
        wt = jnp.transpose(wt.astype(jnp.float32), (2, 3, 1, 0))   # (3,3,ci,co)
        wt = jnp.pad(wt, ((0, 0), (0, 0), (0, ci_p - ci), (0, cp - planes)))
        return wt.reshape(9 * ci_p, cp).astype(jnp.bfloat16)

    w1m = pack_w3x3(params["w1"], cin, cin_p)
    w2m = pack_w3x3(params["w2"], planes, cp)

    wscm = None
    if has_sc:
        wsc = params["wsc"][:, :, 0, 0].astype(jnp.float32).T      # (cin, planes)
        wscm = jnp.pad(wsc, ((0, cin_p - cin),
                             (0, cp - planes))).astype(jnp.bfloat16)

    if s == 1:
        # Spatial zero-pad built in VMEM inside the kernel (no extra HBM pass).
        outs = _conv1_s1(x, w1m, wscm, n, ho, wo, cin_p, cp)
    else:
        # Phase (space-to-depth) decomposition: stride handled once here so
        # every in-kernel tap slice is unit-stride with static offsets.
        qmax = 2 // s
        ph_h, ph_w = ho + qmax, wo + qmax
        need_h, need_w = s * ph_h, s * ph_w
        xpad = jnp.pad(x, ((0, 0),
                           (1, max(need_h - h - 1, 0)),
                           (1, max(need_w - w - 1, 0)),
                           (0, 0)))[:, :need_h, :need_w, :]
        xph = xpad.reshape(n, ph_h, s, ph_w, s, cin_p)
        xph = jnp.transpose(xph, (0, 2, 4, 1, 3, 5)).reshape(
            n * s * s, ph_h, ph_w, cin_p)
        outs = _conv1_phase(xph, w1m, wscm, n, s, ho, wo, cin_p, cp)

    if has_sc:
        y1, s1p, q1p, ysc, sscp, qscp = outs
    else:
        y1, s1p, q1p = outs

    def fold(sp, qp, gamma, beta):
        su = jnp.sum(sp, axis=0)                       # (1, cp)
        sq = jnp.sum(qp, axis=0)
        mean = su / m
        var = jnp.maximum(sq / m - mean * mean, 0.0)   # clamp tiny negatives
        g = jnp.pad(gamma.astype(jnp.float32), (0, cp - planes)).reshape(1, cp)
        b = jnp.pad(beta.astype(jnp.float32), (0, cp - planes)).reshape(1, cp)
        scale = g / jnp.sqrt(var + _EPS)
        return scale, b - mean * scale

    s1, b1 = fold(s1p, q1p, params["g1"], params["be1"])

    # conv2 consumes raw y1; bn1 affine + ReLU are fused into its prologue.
    y1img = y1.reshape(n, ho, wo, cp)
    y2, s2p, q2p = _conv2(y1img, w2m, s1.reshape(1, 1, cp),
                          b1.reshape(1, 1, cp), n, ho, wo, cp)
    s2, b2 = fold(s2p, q2p, params["g2"], params["be2"])

    if has_sc:
        ssc, bsc = fold(sscp, qscp, params["gsc"], params["besc"])
        res = ysc.reshape(m, cp)
    else:
        # identity shortcut: stride==1 and cin==planes -> x already matches.
        res = x.reshape(m, cp)
        ssc = jnp.ones((1, cp), jnp.float32)
        bsc = jnp.zeros((1, cp), jnp.float32)

    out = _residual(y2.reshape(m, cp), res, s2, b2, ssc, bsc)
    out = out[:, :planes].reshape(n, ho, wo, planes)
    return jnp.transpose(out, (0, 3, 1, 2))            # back to NCHW


# --------------------------- parameter construction -------------------------

def init_params(key, in_planes, planes, stride):
    keys = jax.random.split(key, 9)
    params = {
        "w1": 0.1 * jax.random.normal(keys[0], (planes, in_planes, 3, 3), jnp.float32),
        "g1": 1.0 + 0.1 * jax.random.normal(keys[1], (planes,), jnp.float32),
        "be1": 0.1 * jax.random.normal(keys[2], (planes,), jnp.float32),
        "w2": 0.1 * jax.random.normal(keys[3], (planes, planes, 3, 3), jnp.float32),
        "g2": 1.0 + 0.1 * jax.random.normal(keys[4], (planes,), jnp.float32),
        "be2": 0.1 * jax.random.normal(keys[5], (planes,), jnp.float32),
    }
    if stride != 1 or in_planes != planes:
        params["wsc"] = 0.1 * jax.random.normal(
            keys[6], (planes, in_planes, 1, 1), jnp.float32)
        params["gsc"] = 1.0 + 0.1 * jax.random.normal(keys[7], (planes,), jnp.float32)
        params["besc"] = 0.1 * jax.random.normal(keys[8], (planes,), jnp.float32)
    return params


# ------------------------------ pure-JAX reference --------------------------

def _ref_bn(y, gamma, beta, eps=1e-5):
    mean = jnp.mean(y, axis=(0, 2, 3), keepdims=True)
    var = jnp.mean((y - mean) ** 2, axis=(0, 2, 3), keepdims=True)
    return ((y - mean) / jnp.sqrt(var + eps)) * gamma.reshape(1, -1, 1, 1) \
        + beta.reshape(1, -1, 1, 1)


def _ref_conv(x, w, stride, pad):
    return jax.lax.conv_general_dilated(
        x, w, (stride, stride), ((pad, pad), (pad, pad)),
        dimension_numbers=("NCHW", "OIHW", "NCHW"))


def ref_basic_block(x, params, stride):
    in_planes = x.shape[1]
    planes = params["w1"].shape[0]
    out = jax.nn.relu(_ref_bn(_ref_conv(x, params["w1"], stride, 1),
                              params["g1"], params["be1"]))
    out = _ref_bn(_ref_conv(out, params["w2"], 1, 1),
                  params["g2"], params["be2"])
    if stride != 1 or in_planes != planes:
        sc = _ref_bn(_ref_conv(x, params["wsc"], stride, 0),
                     params["gsc"], params["besc"])
    else:
        sc = x
    return jax.nn.relu(out + sc)


# ----------------------------------- main -----------------------------------

if __name__ == "__main__":
    key = jax.random.PRNGKey(0)
    kx, kp1, kp2 = jax.random.split(key, 3)

    # bf16 activations/weights on the MXU vs f32 reference -> loose tolerance.
    TOL = 5e-2
    ok = True

    # Case 1: downsampling block (stride=2, in_planes != planes) -> conv shortcut
    in_planes, planes, stride = 4, 8, 2
    x = jax.random.normal(kx, (2, in_planes, 16, 16), jnp.float32)
    params = init_params(kp1, in_planes, planes, stride)
    out = jax.block_until_ready(basic_block_forward(x, params, stride))
    ref = ref_basic_block(x, params, stride)
    err1 = float(jnp.max(jnp.abs(out - ref)))
    ok &= err1 < TOL

    # Case 2: identity shortcut (stride=1, in_planes == planes)
    in_planes2, planes2, stride2 = 8, 8, 1
    x2 = jax.random.normal(kx, (2, in_planes2, 16, 16), jnp.float32)
    params2 = init_params(kp2, in_planes2, planes2, stride2)
    out2 = jax.block_until_ready(basic_block_forward(x2, params2, stride2))
    ref2 = ref_basic_block(x2, params2, stride2)
    err2 = float(jnp.max(jnp.abs(out2 - ref2)))
    ok &= err2 < TOL

    if ok:
        print("KERNEL_OK")
    else:
        print("MISMATCH", err1, err2)
</pallas_src>

<mosaic_0001>
module attributes {stable_mosaic.version = 11 : i64} {
  func.func @_conv3x3_phase_bn_kernel(%arg0: i32, %arg1: memref<4x9x9x128xbf16, #tpu.memory_space<vmem>>, %arg2: memref<1152x128xbf16, #tpu.memory_space<vmem>>, %arg3: memref<128x128xbf16, #tpu.memory_space<vmem>>, %arg4: memref<1x64x128xbf16, #tpu.memory_space<vmem>>, %arg5: memref<1x1x128xf32, #tpu.memory_space<vmem>>, %arg6: memref<1x1x128xf32, #tpu.memory_space<vmem>>, %arg7: memref<1x64x128xbf16, #tpu.memory_space<vmem>>, %arg8: memref<1x1x128xf32, #tpu.memory_space<vmem>>, %arg9: memref<1x1x128xf32, #tpu.memory_space<vmem>>) attributes {dimension_semantics = [#tpu.dimension_semantics<parallel>], iteration_bounds = array<i64: 2>, scalar_prefetch = 0 : i64, scratch_operands = 0 : i64, tpu.core_type = #tpu.core_type<tc>, window_params = [{transform_indices = @transform_0, window_bounds = array<i64: 4, 9, 9, 128>}, {pipeline_mode = #tpu.pipeline_mode<synchronous>, transform_indices = @transform_1, window_bounds = array<i64: 1152, 128>}, {pipeline_mode = #tpu.pipeline_mode<synchronous>, transform_indices = @transform_2, window_bounds = array<i64: 128, 128>}, {transform_indices = @transform_3, window_bounds = array<i64: 1, 64, 128>}, {transform_indices = @transform_4, window_bounds = array<i64: 1, 1, 128>}, {transform_indices = @transform_5, window_bounds = array<i64: 1, 1, 128>}, {transform_indices = @transform_6, window_bounds = array<i64: 1, 64, 128>}, {transform_indices = @transform_7, window_bounds = array<i64: 1, 1, 128>}, {transform_indices = @transform_8, window_bounds = array<i64: 1, 1, 128>}]} {
    %c0 = arith.constant 0 : index
    %c0_0 = arith.constant 0 : index
    %c0_1 = arith.constant 0 : index
    %c0_2 = arith.constant 0 : index
    %0 = vector.load %arg1[%c0, %c0_0, %c0_1, %c0_2] : memref<4x9x9x128xbf16, #tpu.memory_space<vmem>>, vector<1x8x8x128xbf16>
    %1 = vector.shape_cast %0 : vector<1x8x8x128xbf16> to vector<8x8x128xbf16>
    %2 = vector.shape_cast %1 : vector<8x8x128xbf16> to vector<64x128xbf16>
    %c0_3 = arith.constant 0 : index
    %c0_4 = arith.constant 0 : index
    %3 = vector.load %arg2[%c0_3, %c0_4] : memref<1152x128xbf16, #tpu.memory_space<vmem>>, vector<128x128xbf16>
    %cst = arith.constant dense<0.000000e+00> : vector<64x128xf32>
    %4 = tpu.matmul %2, %3, %cst {dimension_numbers = #tpu.dot_dimension_numbers<[1], [0], [0], [1], [0, 0, 1, 1], [], []>} : vector<64x128xbf16>, vector<128x128xbf16>, vector<64x128xf32> -> vector<64x128xf32>
    %c1 = arith.constant 1 : index
    %c0_5 = arith.constant 0 : index
    %c0_6 = arith.constant 0 : index
    %c0_7 = arith.constant 0 : index
    %5 = vector.load %arg1[%c1, %c0_5, %c0_6, %c0_7] : memref<4x9x9x128xbf16, #tpu.memory_space<vmem>>, vector<1x8x8x128xbf16>
    %6 = vector.shape_cast %5 : vector<1x8x8x128xbf16> to vector<8x8x128xbf16>
    %7 = vector.shape_cast %6 : vector<8x8x128xbf16> to vector<64x128xbf16>
    %c128 = arith.constant 128 : index
    %c0_8 = arith.constant 0 : index
    %8 = vector.load %arg2[%c128, %c0_8] : memref<1152x128xbf16, #tpu.memory_space<vmem>>, vector<128x128xbf16>
    %cst_9 = arith.constant dense<0.000000e+00> : vector<64x128xf32>
    %9 = tpu.matmul %7, %8, %cst_9 {dimension_numbers = #tpu.dot_dimension_numbers<[1], [0], [0], [1], [0, 0, 1, 1], [], []>} : vector<64x128xbf16>, vector<128x128xbf16>, vector<64x128xf32> -> vector<64x128xf32>
    %10 = arith.addf %4, %9 : vector<64x128xf32>
    %c0_10 = arith.constant 0 : index
    %c0_11 = arith.constant 0 : index
    %c1_12 = arith.constant 1 : index
    %c0_13 = arith.constant 0 : index
    %11 = vector.load %arg1[%c0_10, %c0_11, %c1_12, %c0_13] : memref<4x9x9x128xbf16, #tpu.memory_space<vmem>>, vector<1x8x8x128xbf16>
    %12 = vector.shape_cast %11 : vector<1x8x8x128xbf16> to vector<8x8x128xbf16>
    %13 = vector.shape_cast %12 : vector<8x8x128xbf16> to vector<64x128xbf16>
    %c256 = arith.constant 256 : index
    %c0_14 = arith.constant 0 : index
    %14 = vector.load %arg2[%c256, %c0_14] : memref<1152x128xbf16, #tpu.memory_space<vmem>>, vector<128x128xbf16>
    %cst_15 = arith.constant dense<0.000000e+00> : vector<64x128xf32>
    %15 = tpu.matmul %13, %14, %cst_15 {dimension_numbers = #tpu.dot_dimension_numbers<[1], [0], [0], [1], [0, 0, 1, 1], [], []>} : vector<64x128xbf16>, vector<128x128xbf16>, vector<64x128xf32> -> vector<64x128xf32>
    %16 = arith.addf %10, %15 : vector<64x128xf32>
    %c2 = arith.constant 2 : index
    %c0_16 = arith.constant 0 : index
    %c0_17 = arith.constant 0 : index
    %c0_18 = arith.constant 0 : index
    %17 = vector.load %arg1[%c2, %c0_16, %c0_17, %c0_18] : memref<4x9x9x128xbf16, #tpu.memory_space<vmem>>, vector<1x8x8x128xbf16>
    %18 = vector.shape_cast %17 : vector<1x8x8x128xbf16> to vector<8x8x128xbf16>
    %19 = vector.shape_cast %18 : vector<8x8x128xbf16> to vector<64x128xbf16>
    %c384 = arith.constant 384 : index
    %c0_19 = arith.constant 0 : index
    %20 = vector.load %arg2[%c384, %c0_19] : memref<1152x128xbf16, #tpu.memory_space<vmem>>, vector<128x128xbf16>
    %cst_20 = arith.constant dense<0.000000e+00> : vector<64x128xf32>
    %21 = tpu.matmul %19, %20, %cst_20 {dimension_numbers = #tpu.dot_dimension_numbers<[1], [0], [0], [1], [0, 0, 1, 1], [], []>} : vector<64x128xbf16>, vector<128x128xbf16>, vector<64x128xf32> -> vector<64x128xf32>
    %22 = arith.addf %16, %21 : vector<64x128xf32>
    %c3 = arith.constant 3 : index
    %c0_21 = arith.constant 0 : index
    %c0_22 = arith.constant 0 : index
    %c0_23 = arith.constant 0 : index
    %23 = vector.load %arg1[%c3, %c0_21, %c0_22, %c0_23] : memref<4x9x9x128xbf16, #tpu.memory_space<vmem>>, vector<1x8x8x128xbf16>
    %24 = vector.shape_cast %23 : vector<1x8x8x128xbf16> to vector<8x8x128xbf16>
    %25 = vector.shape_cast %24 : vector<8x8x128xbf16> to vector<64x128xbf16>
    %c512 = arith.constant 512 : index
    %c0_24 = arith.constant 0 : index
    %26 = vector.load %arg2[%c512, %c0_24] : memref<1152x128xbf16, #tpu.memory_space<vmem>>, vector<128x128xbf16>
    %cst_25 = arith.constant dense<0.000000e+00> : vector<64x128xf32>
    %27 = tpu.matmul %25, %26, %cst_25 {dimension_numbers = #tpu.dot_dimension_numbers<[1], [0], [0], [1], [0, 0, 1, 1], [], []>} : vector<64x128xbf16>, vector<128x128xbf16>, vector<64x128xf32> -> vector<64x128xf32>
    %28 = arith.addf %22, %27 : vector<64x128xf32>
    %c0_26 = arith.constant 0 : index
    %c0_27 = arith.constant 0 : index
    %29 = vector.load %arg3[%c0_26, %c0_27] : memref<128x128xbf16, #tpu.memory_space<vmem>>, vector<128x128xbf16>
    %cst_28 = arith.constant dense<0.000000e+00> : vector<64x128xf32>
    %30 = tpu.matmul %25, %29, %cst_28 {dimension_numbers = #tpu.dot_dimension_numbers<[1], [0], [0], [1], [0, 0, 1, 1], [], []>} : vector<64x128xbf16>, vector<128x128xbf16>, vector<64x128xf32> -> vector<64x128xf32>
    %c2_29 = arith.constant 2 : index
    %c0_30 = arith.constant 0 : index
    %c1_31 = arith.constant 1 : index
    %c0_32 = arith.constant 0 : index
    %31 = vector.load %arg1[%c2_29, %c0_30, %c1_31, %c0_32] : memref<4x9x9x128xbf16, #tpu.memory_space<vmem>>, vector<1x8x8x128xbf16>
    %32 = vector.shape_cast %31 : vector<1x8x8x128xbf16> to vector<8x8x128xbf16>
    %33 = vector.shape_cast %32 : vector<8x8x128xbf16> to vector<64x128xbf16>
    %c640 = arith.constant 640 : index
    %c0_33 = arith.constant 0 : index
    %34 = vector.load %arg2[%c640, %c0_33] : memref<1152x128xbf16, #tpu.memory_space<vmem>>, vector<128x128xbf16>
    %cst_34 = arith.constant dense<0.000000e+00> : vector<64x128xf32>
    %35 = tpu.matmul %33, %34, %cst_34 {dimension_numbers = #tpu.dot_dimension_numbers<[1], [0], [0], [1], [0, 0, 1, 1], [], []>} : vector<64x128xbf16>, vector<128x128xbf16>, vector<64x128xf32> -> vector<64x128xf32>
    %36 = arith.addf %28, %35 : vector<64x128xf32>
    %c0_35 = arith.constant 0 : index
    %c1_36 = arith.constant 1 : index
    %c0_37 = arith.constant 0 : index
    %c0_38 = arith.constant 0 : index
    %37 = vector.load %arg1[%c0_35, %c1_36, %c0_37, %c0_38] : memref<4x9x9x128xbf16, #tpu.memory_space<vmem>>, vector<1x8x8x128xbf16>
    %38 = vector.shape_cast %37 : vector<1x8x8x128xbf16> to vector<8x8x128xbf16>
    %39 = vector.shape_cast %38 : vector<8x8x128xbf16> to vector<64x128xbf16>
    %c768 = arith.constant 768 : index
    %c0_39 = arith.constant 0 : index
    %40 = vector.load %arg2[%c768, %c0_39] : memref<1152x128xbf16, #tpu.memory_space<vmem>>, vector<128x128xbf16>
    %cst_40 = arith.constant dense<0.000000e+00> : vector<64x128xf32>
    %41 = tpu.matmul %39, %40, %cst_40 {dimension_numbers = #tpu.dot_dimension_numbers<[1], [0], [0], [1], [0, 0, 1, 1], [], []>} : vector<64x128xbf16>, vector<128x128xbf16>, vector<64x128xf32> -> vector<64x128xf32>
    %42 = arith.addf %36, %41 : vector<64x128xf32>
    %c1_41 = arith.constant 1 : index
    %c1_42 = arith.constant 1 : index
    %c0_43 = arith.constant 0 : index
    %c0_44 = arith.constant 0 : index
    %43 = vector.load %arg1[%c1_41, %c1_42, %c0_43, %c0_44] : memref<4x9x9x128xbf16, #tpu.memory_space<vmem>>, vector<1x8x8x128xbf16>
    %44 = vector.shape_cast %43 : vector<1x8x8x128xbf16> to vector<8x8x128xbf16>
    %45 = vector.shape_cast %44 : vector<8x8x128xbf16> to vector<64x128xbf16>
    %c896 = arith.constant 896 : index
    %c0_45 = arith.constant 0 : index
    %46 = vector.load %arg2[%c896, %c0_45] : memref<1152x128xbf16, #tpu.memory_space<vmem>>, vector<128x128xbf16>
    %cst_46 = arith.constant dense<0.000000e+00> : vector<64x128xf32>
    %47 = tpu.matmul %45, %46, %cst_46 {dimension_numbers = #tpu.dot_dimension_numbers<[1], [0], [0], [1], [0, 0, 1, 1], [], []>} : vector<64x128xbf16>, vector<128x128xbf16>, vector<64x128xf32> -> vector<64x128xf32>
    %48 = arith.addf %42, %47 : vector<64x128xf32>
    %c0_47 = arith.constant 0 : index
    %c1_48 = arith.constant 1 : index
    %c1_49 = arith.constant 1 : index
    %c0_50 = arith.constant 0 : index
    %49 = vector.load %arg1[%c0_47, %c1_48, %c1_49, %c0_50] : memref<4x9x9x128xbf16, #tpu.memory_space<vmem>>, vector<1x8x8x128xbf16>
    %50 = vector.shape_cast %49 : vector<1x8x8x128xbf16> to vector<8x8x128xbf16>
    %51 = vector.shape_cast %50 : vector<8x8x128xbf16> to vector<64x128xbf16>
    %c1024 = arith.constant 1024 : index
    %c0_51 = arith.constant 0 : index
    %52 = vector.load %arg2[%c1024, %c0_51] : memref<1152x128xbf16, #tpu.memory_space<vmem>>, vector<128x128xbf16>
    %cst_52 = arith.constant dense<0.000000e+00> : vector<64x128xf32>
    %53 = tpu.matmul %51, %52, %cst_52 {dimension_numbers = #tpu.dot_dimension_numbers<[1], [0], [0], [1], [0, 0, 1, 1], [], []>} : vector<64x128xbf16>, vector<128x128xbf16>, vector<64x128xf32> -> vector<64x128xf32>
    %54 = arith.addf %48, %53 : vector<64x128xf32>
    %55 = arith.truncf %54 : vector<64x128xf32> to vector<64x128xbf16>
    %c0_53 = arith.constant 0 : index
    %c0_54 = arith.constant 0 : index
    %c0_55 = arith.constant 0 : index
    %56 = vector.load %arg4[%c0_53, %c0_54, %c0_55] : memref<1x64x128xbf16, #tpu.memory_space<vmem>>, vector<1x64x128xbf16>
    %57 = vector.shape_cast %56 : vector<1x64x128xbf16> to vector<64x128xbf16>
    %58 = vector.shape_cast %55 : vector<64x128xbf16> to vector<1x64x128xbf16>
    tpu.vector_store %arg4[%c0_53, %c0_54, %c0_55], %58 {strides = array<i32>} : memref<1x64x128xbf16, #tpu.memory_space<vmem>>, vector<1x64x128xbf16>,
    %cst_56 = arith.constant dense<0.000000e+00> : vector<128xf32>
    %59 = vector.multi_reduction <add>, %54, %cst_56 [0] : vector<64x128xf32> to vector<128xf32>
    %60 = vector.shape_cast %59 : vector<128xf32> to vector<1x128xf32>
    %61 = vector.shape_cast %60 : vector<1x128xf32> to vector<1x1x128xf32>
    %c0_57 = arith.constant 0 : index
    %c0_58 = arith.constant 0 : index
    %c0_59 = arith.constant 0 : index
    %62 = vector.load %arg5[%c0_57, %c0_58, %c0_59] : memref<1x1x128xf32, #tpu.memory_space<vmem>>, vector<1x1x128xf32>
    tpu.vector_store %arg5[%c0_57, %c0_58, %c0_59], %61 {strides = array<i32>} : memref<1x1x128xf32, #tpu.memory_space<vmem>>, vector<1x1x128xf32>,
    %63 = arith.mulf %54, %54 : vector<64x128xf32>
    %cst_60 = arith.constant dense<0.000000e+00> : vector<128xf32>
    %64 = vector.multi_reduction <add>, %63, %cst_60 [0] : vector<64x128xf32> to vector<128xf32>
    %65 = vector.shape_cast %64 : vector<128xf32> to vector<1x128xf32>
    %66 = vector.shape_cast %65 : vector<1x128xf32> to vector<1x1x128xf32>
    %c0_61 = arith.constant 0 : index
    %c0_62 = arith.constant 0 : index
    %c0_63 = arith.constant 0 : index
    %67 = vector.load %arg6[%c0_61, %c0_62, %c0_63] : memref<1x1x128xf32, #tpu.memory_space<vmem>>, vector<1x1x128xf32>
    tpu.vector_store %arg6[%c0_61, %c0_62, %c0_63], %66 {strides = array<i32>} : memref<1x1x128xf32, #tpu.memory_space<vmem>>, vector<1x1x128xf32>,
    %68 = arith.truncf %30 : vector<64x128xf32> to vector<64x128xbf16>
    %c0_64 = arith.constant 0 : index
    %c0_65 = arith.constant 0 : index
    %c0_66 = arith.constant 0 : index
    %69 = vector.load %arg7[%c0_64, %c0_65, %c0_66] : memref<1x64x128xbf16, #tpu.memory_space<vmem>>, vector<1x64x128xbf16>
    %70 = vector.shape_cast %69 : vector<1x64x128xbf16> to vector<64x128xbf16>
    %71 = vector.shape_cast %68 : vector<64x128xbf16> to vector<1x64x128xbf16>
    tpu.vector_store %arg7[%c0_64, %c0_65, %c0_66], %71 {strides = array<i32>} : memref<1x64x128xbf16, #tpu.memory_space<vmem>>, vector<1x64x128xbf16>,
    %cst_67 = arith.constant dense<0.000000e+00> : vector<128xf32>
    %72 = vector.multi_reduction <add>, %30, %cst_67 [0] : vector<64x128xf32> to vector<128xf32>
    %73 = vector.shape_cast %72 : vector<128xf32> to vector<1x128xf32>
    %74 = vector.shape_cast %73 : vector<1x128xf32> to vector<1x1x128xf32>
    %c0_68 = arith.constant 0 : index
    %c0_69 = arith.constant 0 : index
    %c0_70 = arith.constant 0 : index
    %75 = vector.load %arg8[%c0_68, %c0_69, %c0_70] : memref<1x1x128xf32, #tpu.memory_space<vmem>>, vector<1x1x128xf32>
    tpu.vector_store %arg8[%c0_68, %c0_69, %c0_70], %74 {strides = array<i32>} : memref<1x1x128xf32, #tpu.memory_space<vmem>>, vector<1x1x128xf32>,
    %76 = arith.mulf %30, %30 : vector<64x128xf32>
    %cst_71 = arith.constant dense<0.000000e+00> : vector<128xf32>
    %77 = vector.multi_reduction <add>, %76, %cst_71 [0] : vector<64x128xf32> to vector<128xf32>
    %78 = vector.shape_cast %77 : vector<128xf32> to vector<1x128xf32>
    %79 = vector.shape_cast %78 : vector<1x128xf32> to vector<1x1x128xf32>
    %c0_72 = arith.constant 0 : index
    %c0_73 = arith.constant 0 : index
    %c0_74 = arith.constant 0 : index
    %80 = vector.load %arg9[%c0_72, %c0_73, %c0_74] : memref<1x1x128xf32, #tpu.memory_space<vmem>>, vector<1x1x128xf32>
    tpu.vector_store %arg9[%c0_72, %c0_73, %c0_74], %79 {strides = array<i32>} : memref<1x1x128xf32, #tpu.memory_space<vmem>>, vector<1x1x128xf32>,
    return
  }
  func.func @transform_0(%arg0: i32) -> (i32, i32, i32, i32) {
    %c0_i32 = arith.constant 0 : i32
    %c0_i32_0 = arith.constant 0 : i32
    %c0_i32_1 = arith.constant 0 : i32
    %c0_i32_2 = arith.constant 0 : i32
    return %arg0, %c0_i32, %c0_i32_0, %c0_i32_1 : i32, i32, i32, i32
  }
  func.func @transform_1(%arg0: i32) -> (i32, i32) {
    %c0_i32 = arith.constant 0 : i32
    %c0_i32_0 = arith.constant 0 : i32
    %c0_i32_1 = arith.constant 0 : i32
    return %c0_i32, %c0_i32_0 : i32, i32
  }
  func.func @transform_2(%arg0: i32) -> (i32, i32) {
    %c0_i32 = arith.constant 0 : i32
    %c0_i32_0 = arith.constant 0 : i32
    %c0_i32_1 = arith.constant 0 : i32
    return %c0_i32, %c0_i32_0 : i32, i32
  }
  func.func @transform_3(%arg0: i32) -> (i32, i32, i32) {
    %c0_i32 = arith.constant 0 : i32
    %c0_i32_0 = arith.constant 0 : i32
    %c0_i32_1 = arith.constant 0 : i32
    return %arg0, %c0_i32, %c0_i32_0 : i32, i32, i32
  }
  func.func @transform_4(%arg0: i32) -> (i32, i32, i32) {
    %c0_i32 = arith.constant 0 : i32
    %c0_i32_0 = arith.constant 0 : i32
    %c0_i32_1 = arith.constant 0 : i32
    return %arg0, %c0_i32, %c0_i32_0 : i32, i32, i32
  }
  func.func @transform_5(%arg0: i32) -> (i32, i32, i32) {
    %c0_i32 = arith.constant 0 : i32
    %c0_i32_0 = arith.constant 0 : i32
    %c0_i32_1 = arith.constant 0 : i32
    return %arg0, %c0_i32, %c0_i32_0 : i32, i32, i32
  }
  func.func @transform_6(%arg0: i32) -> (i32, i32, i32) {
    %c0_i32 = arith.constant 0 : i32
    %c0_i32_0 = arith.constant 0 : i32
    %c0_i32_1 = arith.constant 0 : i32
    return %arg0, %c0_i32, %c0_i32_0 : i32, i32, i32
  }
  func.func @transform_7(%arg0: i32) -> (i32, i32, i32) {
    %c0_i32 = arith.constant 0 : i32
    %c0_i32_0 = arith.constant 0 : i32
    %c0_i32_1 = arith.constant 0 : i32
    return %arg0, %c0_i32, %c0_i32_0 : i32, i32, i32
  }
  func.func @transform_8(%arg0: i32) -> (i32, i32, i32) {
    %c0_i32 = arith.constant 0 : i32
    %c0_i32_0 = arith.constant 0 : i32
    %c0_i32_1 = arith.constant 0 : i32
    return %arg0, %c0_i32, %c0_i32_0 : i32, i32, i32
  }
}

module attributes {stable_mosaic.version = 11 : i64} {
  func.func @_affine_relu_conv3x3_bn_kernel(%arg0: i32, %arg1: memref<1x8x8x128xbf16, #tpu.memory_space<vmem>>, %arg2: memref<1152x128xbf16, #tpu.memory_space<vmem>>, %arg3: memref<1x1x128xf32, #tpu.memory_space<vmem>>, %arg4: memref<1x1x128xf32, #tpu.memory_space<vmem>>, %arg5: memref<1x64x128xbf16, #tpu.memory_space<vmem>>, %arg6: memref<1x1x128xf32, #tpu.memory_space<vmem>>, %arg7: memref<1x1x128xf32, #tpu.memory_space<vmem>>, %arg8: memref<10x10x128xbf16, #tpu.memory_space<vmem>>) attributes {dimension_semantics = [#tpu.dimension_semantics<parallel>], iteration_bounds = array<i64: 2>, scalar_prefetch = 0 : i64, scratch_operands = 1 : i64, tpu.core_type = #tpu.core_type<tc>, window_params = [{transform_indices = @transform_0, window_bounds = array<i64: 1, 8, 8, 128>}, {pipeline_mode = #tpu.pipeline_mode<synchronous>, transform_indices = @transform_1, window_bounds = array<i64: 1152, 128>}, {pipeline_mode = #tpu.pipeline_mode<synchronous>, transform_indices = @transform_2, window_bounds = array<i64: 1, 1, 128>}, {pipeline_mode = #tpu.pipeline_mode<synchronous>, transform_indices = @transform_3, window_bounds = array<i64: 1, 1, 128>}, {transform_indices = @transform_4, window_bounds = array<i64: 1, 64, 128>}, {transform_indices = @transform_5, window_bounds = array<i64: 1, 1, 128>}, {transform_indices = @transform_6, window_bounds = array<i64: 1, 1, 128>}]} {
    %cst = arith.constant 0.000000e+00 : bf16
    %0 = vector.broadcast %cst : bf16 to vector<1x10x128xbf16>
    %c0 = arith.constant 0 : index
    %c0_0 = arith.constant 0 : index
    %c0_1 = arith.constant 0 : index
    %1 = vector.load %arg8[%c0, %c0_0, %c0_1] : memref<10x10x128xbf16, #tpu.memory_space<vmem>>, vector<1x10x128xbf16>
    tpu.vector_store %arg8[%c0, %c0_0, %c0_1], %0 {strides = array<i32>} : memref<10x10x128xbf16, #tpu.memory_space<vmem>>, vector<1x10x128xbf16>,
    %cst_2 = arith.constant 0.000000e+00 : bf16
    %2 = vector.broadcast %cst_2 : bf16 to vector<1x10x128xbf16>
    %c9 = arith.constant 9 : index
    %c0_3 = arith.constant 0 : index
    %c0_4 = arith.constant 0 : index
    %3 = vector.load %arg8[%c9, %c0_3, %c0_4] : memref<10x10x128xbf16, #tpu.memory_space<vmem>>, vector<1x10x128xbf16>
    tpu.vector_store %arg8[%c9, %c0_3, %c0_4], %2 {strides = array<i32>} : memref<10x10x128xbf16, #tpu.memory_space<vmem>>, vector<1x10x128xbf16>,
    %cst_5 = arith.constant 0.000000e+00 : bf16
    %4 = vector.broadcast %cst_5 : bf16 to vector<10x1x128xbf16>
    %c0_6 = arith.constant 0 : index
    %c0_7 = arith.constant 0 : index
    %c0_8 = arith.constant 0 : index
    %5 = vector.load %arg8[%c0_6, %c0_7, %c0_8] : memref<10x10x128xbf16, #tpu.memory_space<vmem>>, vector<10x1x128xbf16>
    tpu.vector_store %arg8[%c0_6, %c0_7, %c0_8], %4 {strides = array<i32>} : memref<10x10x128xbf16, #tpu.memory_space<vmem>>, vector<10x1x128xbf16>,
    %cst_9 = arith.constant 0.000000e+00 : bf16
    %6 = vector.broadcast %cst_9 : bf16 to vector<10x1x128xbf16>
    %c0_10 = arith.constant 0 : index
    %c9_11 = arith.constant 9 : index
    %c0_12 = arith.constant 0 : index
    %7 = vector.load %arg8[%c0_10, %c9_11, %c0_12] : memref<10x10x128xbf16, #tpu.memory_space<vmem>>, vector<10x1x128xbf16>
    tpu.vector_store %arg8[%c0_10, %c9_11, %c0_12], %6 {strides = array<i32>} : memref<10x10x128xbf16, #tpu.memory_space<vmem>>, vector<10x1x128xbf16>,
    %c0_13 = arith.constant 0 : index
    %c0_14 = arith.constant 0 : index
    %c0_15 = arith.constant 0 : index
    %c0_16 = arith.constant 0 : index
    %8 = vector.load %arg1[%c0_13, %c0_14, %c0_15, %c0_16] : memref<1x8x8x128xbf16, #tpu.memory_space<vmem>>, vector<1x8x8x128xbf16>
    %9 = vector.shape_cast %8 : vector<1x8x8x128xbf16> to vector<8x8x128xbf16>
    %10 = arith.extf %9 : vector<8x8x128xbf16> to vector<8x8x128xf32>
    %c0_17 = arith.constant 0 : index
    %c0_18 = arith.constant 0 : index
    %c0_19 = arith.constant 0 : index
    %11 = vector.load %arg3[%c0_17, %c0_18, %c0_19] : memref<1x1x128xf32, #tpu.memory_space<vmem>>, vector<1x1x128xf32>
    %12 = vector.broadcast %11 : vector<1x1x128xf32> to vector<8x8x128xf32>
    %13 = arith.mulf %10, %12 : vector<8x8x128xf32>
    %c0_20 = arith.constant 0 : index
    %c0_21 = arith.constant 0 : index
    %c0_22 = arith.constant 0 : index
    %14 = vector.load %arg4[%c0_20, %c0_21, %c0_22] : memref<1x1x128xf32, #tpu.memory_space<vmem>>, vector<1x1x128xf32>
    %15 = vector.broadcast %14 : vector<1x1x128xf32> to vector<8x8x128xf32>
    %16 = arith.addf %13, %15 : vector<8x8x128xf32>
    %cst_23 = arith.constant 0.000000e+00 : f32
    %17 = vector.broadcast %cst_23 : f32 to vector<8x8x128xf32>
    %18 = arith.maximumf %16, %17 : vector<8x8x128xf32>
    %19 = arith.truncf %18 : vector<8x8x128xf32> to vector<8x8x128xbf16>
    %c1 = arith.constant 1 : index
    %c1_24 = arith.constant 1 : index
    %c0_25 = arith.constant 0 : index
    %20 = vector.load %arg8[%c1, %c1_24, %c0_25] : memref<10x10x128xbf16, #tpu.memory_space<vmem>>, vector<8x8x128xbf16>
    tpu.vector_store %arg8[%c1, %c1_24, %c0_25], %19 {strides = array<i32>} : memref<10x10x128xbf16, #tpu.memory_space<vmem>>, vector<8x8x128xbf16>,
    %c0_26 = arith.constant 0 : index
    %c0_27 = arith.constant 0 : index
    %c0_28 = arith.constant 0 : index
    %21 = vector.load %arg8[%c0_26, %c0_27, %c0_28] : memref<10x10x128xbf16, #tpu.memory_space<vmem>>, vector<8x8x128xbf16>
    %22 = vector.shape_cast %21 : vector<8x8x128xbf16> to vector<64x128xbf16>
    %c0_29 = arith.constant 0 : index
    %c0_30 = arith.constant 0 : index
    %23 = vector.load %arg2[%c0_29, %c0_30] : memref<1152x128xbf16, #tpu.memory_space<vmem>>, vector<128x128xbf16>
    %cst_31 = arith.constant dense<0.000000e+00> : vector<64x128xf32>
    %24 = tpu.matmul %22, %23, %cst_31 {dimension_numbers = #tpu.dot_dimension_numbers<[1], [0], [0], [1], [0, 0, 1, 1], [], []>} : vector<64x128xbf16>, vector<128x128xbf16>, vector<64x128xf32> -> vector<64x128xf32>
    %c0_32 = arith.constant 0 : index
    %c1_33 = arith.constant 1 : index
    %c0_34 = arith.constant 0 : index
    %25 = vector.load %arg8[%c0_32, %c1_33, %c0_34] : memref<10x10x128xbf16, #tpu.memory_space<vmem>>, vector<8x8x128xbf16>
    %26 = vector.shape_cast %25 : vector<8x8x128xbf16> to vector<64x128xbf16>
    %c128 = arith.constant 128 : index
    %c0_35 = arith.constant 0 : index
    %27 = vector.load %arg2[%c128, %c0_35] : memref<1152x128xbf16, #tpu.memory_space<vmem>>, vector<128x128xbf16>
    %cst_36 = arith.constant dense<0.000000e+00> : vector<64x128xf32>
    %28 = tpu.matmul %26, %27, %cst_36 {dimension_numbers = #tpu.dot_dimension_numbers<[1], [0], [0], [1], [0, 0, 1, 1], [], []>} : vector<64x128xbf16>, vector<128x128xbf16>, vector<64x128xf32> -> vector<64x128xf32>
    %29 = arith.addf %24, %28 : vector<64x128xf32>
    %c0_37 = arith.constant 0 : index
    %c2 = arith.constant 2 : index
    %c0_38 = arith.constant 0 : index
    %30 = vector.load %arg8[%c0_37, %c2, %c0_38] : memref<10x10x128xbf16, #tpu.memory_space<vmem>>, vector<8x8x128xbf16>
    %31 = vector.shape_cast %30 : vector<8x8x128xbf16> to vector<64x128xbf16>
    %c256 = arith.constant 256 : index
    %c0_39 = arith.constant 0 : index
    %32 = vector.load %arg2[%c256, %c0_39] : memref<1152x128xbf16, #tpu.memory_space<vmem>>, vector<128x128xbf16>
    %cst_40 = arith.constant dense<0.000000e+00> : vector<64x128xf32>
    %33 = tpu.matmul %31, %32, %cst_40 {dimension_numbers = #tpu.dot_dimension_numbers<[1], [0], [0], [1], [0, 0, 1, 1], [], []>} : vector<64x128xbf16>, vector<128x128xbf16>, vector<64x128xf32> -> vector<64x128xf32>
    %34 = arith.addf %29, %33 : vector<64x128xf32>
    %c1_41 = arith.constant 1 : index
    %c0_42 = arith.constant 0 : index
    %c0_43 = arith.constant 0 : index
    %35 = vector.load %arg8[%c1_41, %c0_42, %c0_43] : memref<10x10x128xbf16, #tpu.memory_space<vmem>>, vector<8x8x128xbf16>
    %36 = vector.shape_cast %35 : vector<8x8x128xbf16> to vector<64x128xbf16>
    %c384 = arith.constant 384 : index
    %c0_44 = arith.constant 0 : index
    %37 = vector.load %arg2[%c384, %c0_44] : memref<1152x128xbf16, #tpu.memory_space<vmem>>, vector<128x128xbf16>
    %cst_45 = arith.constant dense<0.000000e+00> : vector<64x128xf32>
    %38 = tpu.matmul %36, %37, %cst_45 {dimension_numbers = #tpu.dot_dimension_numbers<[1], [0], [0], [1], [0, 0, 1, 1], [], []>} : vector<64x128xbf16>, vector<128x128xbf16>, vector<64x128xf32> -> vector<64x128xf32>
    %39 = arith.addf %34, %38 : vector<64x128xf32>
    %c1_46 = arith.constant 1 : index
    %c1_47 = arith.constant 1 : index
    %c0_48 = arith.constant 0 : index
    %40 = vector.load %arg8[%c1_46, %c1_47, %c0_48] : memref<10x10x128xbf16, #tpu.memory_space<vmem>>, vector<8x8x128xbf16>
    %41 = vector.shape_cast %40 : vector<8x8x128xbf16> to vector<64x128xbf16>
    %c512 = arith.constant 512 : index
    %c0_49 = arith.constant 0 : index
    %42 = vector.load %arg2[%c512, %c0_49] : memref<1152x128xbf16, #tpu.memory_space<vmem>>, vector<128x128xbf16>
    %cst_50 = arith.constant dense<0.000000e+00> : vector<64x128xf32>
    %43 = tpu.matmul %41, %42, %cst_50 {dimension_numbers = #tpu.dot_dimension_numbers<[1], [0], [0], [1], [0, 0, 1, 1], [], []>} : vector<64x128xbf16>, vector<128x128xbf16>, vector<64x128xf32> -> vector<64x128xf32>
    %44 = arith.addf %39, %43 : vector<64x128xf32>
    %c1_51 = arith.constant 1 : index
    %c2_52 = arith.constant 2 : index
    %c0_53 = arith.constant 0 : index
    %45 = vector.load %arg8[%c1_51, %c2_52, %c0_53] : memref<10x10x128xbf16, #tpu.memory_space<vmem>>, vector<8x8x128xbf16>
    %46 = vector.shape_cast %45 : vector<8x8x128xbf16> to vector<64x128xbf16>
    %c640 = arith.constant 640 : index
    %c0_54 = arith.constant 0 : index
    %47 = vector.load %arg2[%c640, %c0_54] : memref<1152x128xbf16, #tpu.memory_space<vmem>>, vector<128x128xbf16>
    %cst_55 = arith.constant dense<0.000000e+00> : vector<64x128xf32>
    %48 = tpu.matmul %46, %47, %cst_55 {dimension_numbers = #tpu.dot_dimension_numbers<[1], [0], [0], [1], [0, 0, 1, 1], [], []>} : vector<64x128xbf16>, vector<128x128xbf16>, vector<64x128xf32> -> vector<64x128xf32>
    %49 = arith.addf %44, %48 : vector<64x128xf32>
    %c2_56 = arith.constant 2 : index
    %c0_57 = arith.constant 0 : index
    %c0_58 = arith.constant 0 : index
    %50 = vector.load %arg8[%c2_56, %c0_57, %c0_58] : memref<10x10x128xbf16, #tpu.memory_space<vmem>>, vector<8x8x128xbf16>
    %51 = vector.shape_cast %50 : vector<8x8x128xbf16> to vector<64x128xbf16>
    %c768 = arith.constant 768 : index
    %c0_59 = arith.constant 0 : index
    %52 = vector.load %arg2[%c768, %c0_59] : memref<1152x128xbf16, #tpu.memory_space<vmem>>, vector<128x128xbf16>
    %cst_60 = arith.constant dense<0.000000e+00> : vector<64x128xf32>
    %53 = tpu.matmul %51, %52, %cst_60 {dimension_numbers = #tpu.dot_dimension_numbers<[1], [0], [0], [1], [0, 0, 1, 1], [], []>} : vector<64x128xbf16>, vector<128x128xbf16>, vector<64x128xf32> -> vector<64x128xf32>
    %54 = arith.addf %49, %53 : vector<64x128xf32>
    %c2_61 = arith.constant 2 : index
    %c1_62 = arith.constant 1 : index
    %c0_63 = arith.constant 0 : index
    %55 = vector.load %arg8[%c2_61, %c1_62, %c0_63] : memref<10x10x128xbf16, #tpu.memory_space<vmem>>, vector<8x8x128xbf16>
    %56 = vector.shape_cast %55 : vector<8x8x128xbf16> to vector<64x128xbf16>
    %c896 = arith.constant 896 : index
    %c0_64 = arith.constant 0 : index
    %57 = vector.load %arg2[%c896, %c0_64] : memref<1152x128xbf16, #tpu.memory_space<vmem>>, vector<128x128xbf16>
    %cst_65 = arith.constant dense<0.000000e+00> : vector<64x128xf32>
    %58 = tpu.matmul %56, %57, %cst_65 {dimension_numbers = #tpu.dot_dimension_numbers<[1], [0], [0], [1], [0, 0, 1, 1], [], []>} : vector<64x128xbf16>, vector<128x128xbf16>, vector<64x128xf32> -> vector<64x128xf32>
    %59 = arith.addf %54, %58 : vector<64x128xf32>
    %c2_66 = arith.constant 2 : index
    %c2_67 = arith.constant 2 : index
    %c0_68 = arith.constant 0 : index
    %60 = vector.load %arg8[%c2_66, %c2_67, %c0_68] : memref<10x10x128xbf16, #tpu.memory_space<vmem>>, vector<8x8x128xbf16>
    %61 = vector.shape_cast %60 : vector<8x8x128xbf16> to vector<64x128xbf16>
    %c1024 = arith.constant 1024 : index
    %c0_69 = arith.constant 0 : index
    %62 = vector.load %arg2[%c1024, %c0_69] : memref<1152x128xbf16, #tpu.memory_space<vmem>>, vector<128x128xbf16>
    %cst_70 = arith.constant dense<0.000000e+00> : vector<64x128xf32>
    %63 = tpu.matmul %61, %62, %cst_70 {dimension_numbers = #tpu.dot_dimension_numbers<[1], [0], [0], [1], [0, 0, 1, 1], [], []>} : vector<64x128xbf16>, vector<128x128xbf16>, vector<64x128xf32> -> vector<64x128xf32>
    %64 = arith.addf %59, %63 : vector<64x128xf32>
    %65 = arith.truncf %64 : vector<64x128xf32> to vector<64x128xbf16>
    %c0_71 = arith.constant 0 : index
    %c0_72 = arith.constant 0 : index
    %c0_73 = arith.constant 0 : index
    %66 = vector.load %arg5[%c0_71, %c0_72, %c0_73] : memref<1x64x128xbf16, #tpu.memory_space<vmem>>, vector<1x64x128xbf16>
    %67 = vector.shape_cast %66 : vector<1x64x128xbf16> to vector<64x128xbf16>
    %68 = vector.shape_cast %65 : vector<64x128xbf16> to vector<1x64x128xbf16>
    tpu.vector_store %arg5[%c0_71, %c0_72, %c0_73], %68 {strides = array<i32>} : memref<1x64x128xbf16, #tpu.memory_space<vmem>>, vector<1x64x128xbf16>,
    %cst_74 = arith.constant dense<0.000000e+00> : vector<128xf32>
    %69 = vector.multi_reduction <add>, %64, %cst_74 [0] : vector<64x128xf32> to vector<128xf32>
    %70 = vector.shape_cast %69 : vector<128xf32> to vector<1x128xf32>
    %71 = vector.shape_cast %70 : vector<1x128xf32> to vector<1x1x128xf32>
    %c0_75 = arith.constant 0 : index
    %c0_76 = arith.constant 0 : index
    %c0_77 = arith.constant 0 : index
    %72 = vector.load %arg6[%c0_75, %c0_76, %c0_77] : memref<1x1x128xf32, #tpu.memory_space<vmem>>, vector<1x1x128xf32>
    tpu.vector_store %arg6[%c0_75, %c0_76, %c0_77], %71 {strides = array<i32>} : memref<1x1x128xf32, #tpu.memory_space<vmem>>, vector<1x1x128xf32>,
    %73 = arith.mulf %64, %64 : vector<64x128xf32>
    %cst_78 = arith.constant dense<0.000000e+00> : vector<128xf32>
    %74 = vector.multi_reduction <add>, %73, %cst_78 [0] : vector<64x128xf32> to vector<128xf32>
    %75 = vector.shape_cast %74 : vector<128xf32> to vector<1x128xf32>
    %76 = vector.shape_cast %75 : vector<1x128xf32> to vector<1x1x128xf32>
    %c0_79 = arith.constant 0 : index
    %c0_80 = arith.constant 0 : index
    %c0_81 = arith.constant 0 : index
    %77 = vector.load %arg7[%c0_79, %c0_80, %c0_81] : memref<1x1x128xf32, #tpu.memory_space<vmem>>, vector<1x1x128xf32>
    tpu.vector_store %arg7[%c0_79, %c0_80, %c0_81], %76 {strides = array<i32>} : memref<1x1x128xf32, #tpu.memory_space<vmem>>, vector<1x1x128xf32>,
    return
  }
  func.func @transform_0(%arg0: i32) -> (i32, i32, i32, i32) {
    %c0_i32 = arith.constant 0 : i32
    %c0_i32_0 = arith.constant 0 : i32
    %c0_i32_1 = arith.constant 0 : i32
    %c0_i32_2 = arith.constant 0 : i32
    return %arg0, %c0_i32, %c0_i32_0, %c0_i32_1 : i32, i32, i32, i32
  }
  func.func @transform_1(%arg0: i32) -> (i32, i32) {
    %c0_i32 = arith.constant 0 : i32
    %c0_i32_0 = arith.constant 0 : i32
    %c0_i32_1 = arith.constant 0 : i32
    return %c0_i32, %c0_i32_0 : i32, i32
  }
  func.func @transform_2(%arg0: i32) -> (i32, i32, i32) {
    %c0_i32 = arith.constant 0 : i32
    %c0_i32_0 = arith.constant 0 : i32
    %c0_i32_1 = arith.constant 0 : i32
    %c0_i32_2 = arith.constant 0 : i32
    return %c0_i32, %c0_i32_0, %c0_i32_1 : i32, i32, i32
  }
  func.func @transform_3(%arg0: i32) -> (i32, i32, i32) {
    %c0_i32 = arith.constant 0 : i32
    %c0_i32_0 = arith.constant 0 : i32
    %c0_i32_1 = arith.constant 0 : i32
    %c0_i32_2 = arith.constant 0 : i32
    return %c0_i32, %c0_i32_0, %c0_i32_1 : i32, i32, i32
  }
  func.func @transform_4(%arg0: i32) -> (i32, i32, i32) {
    %c0_i32 = arith.constant 0 : i32
    %c0_i32_0 = arith.constant 0 : i32
    %c0_i32_1 = arith.constant 0 : i32
    return %arg0, %c0_i32, %c0_i32_0 : i32, i32, i32
  }
  func.func @transform_5(%arg0: i32) -> (i32, i32, i32) {
    %c0_i32 = arith.constant 0 : i32
    %c0_i32_0 = arith.constant 0 : i32
    %c0_i32_1 = arith.constant 0 : i32
    return %arg0, %c0_i32, %c0_i32_0 : i32, i32, i32
  }
  func.func @transform_6(%arg0: i32) -> (i32, i32, i32) {
    %c0_i32 = arith.constant 0 : i32
    %c0_i32_0 = arith.constant 0 : i32
    %c0_i32_1 = arith.constant 0 : i32
    return %arg0, %c0_i32, %c0_i32_0 : i32, i32, i32
  }
}

module attributes {stable_mosaic.version = 11 : i64} {
  func.func @_residual_relu_kernel(%arg0: i32, %arg1: memref<128x128xbf16, #tpu.memory_space<vmem>>, %arg2: memref<128x128xbf16, #tpu.memory_space<vmem>>, %arg3: memref<1x128xf32, #tpu.memory_space<vmem>>, %arg4: memref<1x128xf32, #tpu.memory_space<vmem>>, %arg5: memref<1x128xf32, #tpu.memory_space<vmem>>, %arg6: memref<1x128xf32, #tpu.memory_space<vmem>>, %arg7: memref<128x128xf32, #tpu.memory_space<vmem>>) attributes {dimension_semantics = [#tpu.dimension_semantics<parallel>], iteration_bounds = array<i64: 1>, scalar_prefetch = 0 : i64, scratch_operands = 0 : i64, tpu.core_type = #tpu.core_type<tc>, window_params = [{transform_indices = @transform_0, window_bounds = array<i64: 128, 128>}, {transform_indices = @transform_1, window_bounds = array<i64: 128, 128>}, {pipeline_mode = #tpu.pipeline_mode<synchronous>, transform_indices = @transform_2, window_bounds = array<i64: 1, 128>}, {pipeline_mode = #tpu.pipeline_mode<synchronous>, transform_indices = @transform_3, window_bounds = array<i64: 1, 128>}, {pipeline_mode = #tpu.pipeline_mode<synchronous>, transform_indices = @transform_4, window_bounds = array<i64: 1, 128>}, {pipeline_mode = #tpu.pipeline_mode<synchronous>, transform_indices = @transform_5, window_bounds = array<i64: 1, 128>}, {transform_indices = @transform_6, window_bounds = array<i64: 128, 128>}]} {
    %c0 = arith.constant 0 : index
    %c0_0 = arith.constant 0 : index
    %0 = vector.load %arg1[%c0, %c0_0] : memref<128x128xbf16, #tpu.memory_space<vmem>>, vector<128x128xbf16>
    %1 = arith.extf %0 : vector<128x128xbf16> to vector<128x128xf32>
    %c0_1 = arith.constant 0 : index
    %c0_2 = arith.constant 0 : index
    %2 = vector.load %arg3[%c0_1, %c0_2] : memref<1x128xf32, #tpu.memory_space<vmem>>, vector<1x128xf32>
    %3 = vector.broadcast %2 : vector<1x128xf32> to vector<128x128xf32>
    %4 = arith.mulf %1, %3 : vector<128x128xf32>
    %c0_3 = arith.constant 0 : index
    %c0_4 = arith.constant 0 : index
    %5 = vector.load %arg4[%c0_3, %c0_4] : memref<1x128xf32, #tpu.memory_space<vmem>>, vector<1x128xf32>
    %6 = vector.broadcast %5 : vector<1x128xf32> to vector<128x128xf32>
    %7 = arith.addf %4, %6 : vector<128x128xf32>
    %c0_5 = arith.constant 0 : index
    %c0_6 = arith.constant 0 : index
    %8 = vector.load %arg2[%c0_5, %c0_6] : memref<128x128xbf16, #tpu.memory_space<vmem>>, vector<128x128xbf16>
    %9 = arith.extf %8 : vector<128x128xbf16> to vector<128x128xf32>
    %c0_7 = arith.constant 0 : index
    %c0_8 = arith.constant 0 : index
    %10 = vector.load %arg5[%c0_7, %c0_8] : memref<1x128xf32, #tpu.memory_space<vmem>>, vector<1x128xf32>
    %11 = vector.broadcast %10 : vector<1x128xf32> to vector<128x128xf32>
    %12 = arith.mulf %9, %11 : vector<128x128xf32>
    %c0_9 = arith.constant 0 : index
    %c0_10 = arith.constant 0 : index
    %13 = vector.load %arg6[%c0_9, %c0_10] : memref<1x128xf32, #tpu.memory_space<vmem>>, vector<1x128xf32>
    %14 = vector.broadcast %13 : vector<1x128xf32> to vector<128x128xf32>
    %15 = arith.addf %12, %14 : vector<128x128xf32>
    %16 = arith.addf %7, %15 : vector<128x128xf32>
    %cst = arith.constant 0.000000e+00 : f32
    %17 = vector.broadcast %cst : f32 to vector<128x128xf32>
    %18 = arith.maximumf %16, %17 : vector<128x128xf32>
    %c0_11 = arith.constant 0 : index
    %c0_12 = arith.constant 0 : index
    %19 = vector.load %arg7[%c0_11, %c0_12] : memref<128x128xf32, #tpu.memory_space<vmem>>, vector<128x128xf32>
    tpu.vector_store %arg7[%c0_11, %c0_12], %18 {strides = array<i32>} : memref<128x128xf32, #tpu.memory_space<vmem>>, vector<128x128xf32>,
    return
  }
  func.func @transform_0(%arg0: i32) -> (i32, i32) {
    %c0_i32 = arith.constant 0 : i32
    %c0_i32_0 = arith.constant 0 : i32
    return %arg0, %c0_i32 : i32, i32
  }
  func.func @transform_1(%arg0: i32) -> (i32, i32) {
    %c0_i32 = arith.constant 0 : i32
    %c0_i32_0 = arith.constant 0 : i32
    return %arg0, %c0_i32 : i32, i32
  }
  func.func @transform_2(%arg0: i32) -> (i32, i32) {
    %c0_i32 = arith.constant 0 : i32
    %c0_i32_0 = arith.constant 0 : i32
    %c0_i32_1 = arith.constant 0 : i32
    return %c0_i32, %c0_i32_0 : i32, i32
  }
  func.func @transform_3(%arg0: i32) -> (i32, i32) {
    %c0_i32 = arith.constant 0 : i32
    %c0_i32_0 = arith.constant 0 : i32
    %c0_i32_1 = arith.constant 0 : i32
    return %c0_i32, %c0_i32_0 : i32, i32
  }
  func.func @transform_4(%arg0: i32) -> (i32, i32) {
    %c0_i32 = arith.constant 0 : i32
    %c0_i32_0 = arith.constant 0 : i32
    %c0_i32_1 = arith.constant 0 : i32
    return %c0_i32, %c0_i32_0 : i32, i32
  }
  func.func @transform_5(%arg0: i32) -> (i32, i32) {
    %c0_i32 = arith.constant 0 : i32
    %c0_i32_0 = arith.constant 0 : i32
    %c0_i32_1 = arith.constant 0 : i32
    return %c0_i32, %c0_i32_0 : i32, i32
  }
  func.func @transform_6(%arg0: i32) -> (i32, i32) {
    %c0_i32 = arith.constant 0 : i32
    %c0_i32_0 = arith.constant 0 : i32
    return %arg0, %c0_i32 : i32, i32
  }
}

</mosaic_0001>

<llo_original>
// kernel: basic_block_forward.5
$region0: #{basic_block_forward.5}
  #allocation0 [shape = 'u32[]', space=smem, size = 0x4, offset = 0x4, fixed_abs, tag = 'smem constant byte address 0x4 - core index']
  #allocation1 [shape = 'u32[144,128]{1,0:T(1,128)}', space=vmem, size = 0x12000, scoped, tag = 'internal scratch']
  %s0 = inlined_call_operand.vmem [shape: bf16[128,128], index: 0, kind: input, shape index: {}]
  %s1 = inlined_call_operand.vmem [shape: bf16[128,128], index: 1, kind: input, shape index: {}]
  %s2 = inlined_call_operand.vmem [shape: f32[1,128], index: 2, kind: input, shape index: {}]
  %s3 = inlined_call_operand.vmem [shape: f32[1,128], index: 3, kind: input, shape index: {}]
  %s4 = inlined_call_operand.vmem [shape: f32[1,128], index: 4, kind: input, shape index: {}]
  %s5 = inlined_call_operand.vmem [shape: f32[1,128], index: 5, kind: input, shape index: {}]
  %s6 = inlined_call_operand.vmem [shape: f32[128,128], index: 6, kind: output, shape index: {}]
  %s7 = sld [smem:[#allocation0]]
  $region34: #{basic_block_forward.5} parent=0
    _
  %s9 = ssub.s32 1, %s7
  %s10 = scalar_select 0, %s9, %s7
  // Predicated region
  $region2: #{basic_block_forward.5} parent=0 // pred_check
    _
  $region3: #{basic_block_forward.5} parent=0 // pred_check_branch
    %12 = sbr.rel (0) target = $region5
  $region4: #{basic_block_forward.5} parent=0 // pred_region
    _
  $region5: #{basic_block_forward.5} parent=0 // pred_fallthru
    _
  // Predicated region
  $region6: #{basic_block_forward.5} parent=0 // pred_check
    _
  $region7: #{basic_block_forward.5} parent=0 // pred_check_branch
    %14 = sbr.rel (0) target = $region9
  $region8: #{basic_block_forward.5} parent=0 // pred_region
    _
  $region9: #{basic_block_forward.5} parent=0 // pred_fallthru
    _
  // Predicated region
  $region10: #{basic_block_forward.5} parent=0 // pred_check
    _
  $region11: #{basic_block_forward.5} parent=0 // pred_check_branch
    %16 = sbr.rel (0) target = $region13
  $region12: #{basic_block_forward.5} parent=0 // pred_region
    _
  $region13: #{basic_block_forward.5} parent=0 // pred_fallthru
    _
  // Predicated region
  $region14: #{basic_block_forward.5} parent=0 // pred_check
    _
  $region15: #{basic_block_forward.5} parent=0 // pred_check_branch
    %18 = sbr.rel (0) target = $region17
  $region16: #{basic_block_forward.5} parent=0 // pred_region
    _
  $region17: #{basic_block_forward.5} parent=0 // pred_fallthru
    _
  // Predicated region
  $region18: #{basic_block_forward.5} parent=0 // pred_check
    _
  $region19: #{basic_block_forward.5} parent=0 // pred_check_branch
    %20 = sbr.rel (0) target = $region21
  $region20: #{basic_block_forward.5} parent=0 // pred_region
    _
  $region21: #{basic_block_forward.5} parent=0 // pred_fallthru
    _
  // Predicated region
  $region22: #{basic_block_forward.5} parent=0 // pred_check
    _
  $region23: #{basic_block_forward.5} parent=0 // pred_check_branch
    %22 = sbr.rel (0) target = $region25
  $region24: #{basic_block_forward.5} parent=0 // pred_region
    _
  $region25: #{basic_block_forward.5} parent=0 // pred_fallthru
    _
  %v23 = vld [vmem:[%s0] sm:$0xf]
  %v24 = vld [vmem:[%s0 + $0x4] sm:$0xf]
  %v25 = vld [vmem:[%s0 + $0x8] sm:$0xf]
  %v26 = vld [vmem:[%s0 + $0xc] sm:$0xf]
  %v27 = vld [vmem:[%s0 + $0x10] sm:$0xf]
  %v28 = vld [vmem:[%s0 + $0x14] sm:$0xf]
  %v29 = vld [vmem:[%s0 + $0x18] sm:$0xf]
  %v30 = vld [vmem:[%s0 + $0x1c] sm:$0xf]
  %v31 = vld [vmem:[%s0 + $0x20] sm:$0xf]
  %v32 = vld [vmem:[%s0 + $0x24] sm:$0xf]
  %v33 = vld [vmem:[%s0 + $0x28] sm:$0xf]
  %v34 = vld [vmem:[%s0 + $0x2c] sm:$0xf]
  %v35 = vld [vmem:[%s0 + $0x30] sm:$0xf]
  %v36 = vld [vmem:[%s0 + $0x34] sm:$0xf]
  %v37 = vld [vmem:[%s0 + $0x38] sm:$0xf]
  %v38 = vld [vmem:[%s0 + $0x3c] sm:$0xf]
  %v39 = vunpack.c.l.bf16 %v23
  %v40 = vunpack.c.l.bf16 %v24
  %v41 = vunpack.c.l.bf16 %v25
  %v42 = vunpack.c.l.bf16 %v26
  %v43 = vunpack.c.l.bf16 %v27
  %v44 = vunpack.c.l.bf16 %v28
  %v45 = vunpack.c.l.bf16 %v29
  %v46 = vunpack.c.l.bf16 %v30
  %v47 = vunpack.c.l.bf16 %v31
  %v48 = vunpack.c.l.bf16 %v32
  %v49 = vunpack.c.l.bf16 %v33
  %v50 = vunpack.c.l.bf16 %v34
  %v51 = vunpack.c.l.bf16 %v35
  %v52 = vunpack.c.l.bf16 %v36
  %v53 = vunpack.c.l.bf16 %v37
  %v54 = vunpack.c.l.bf16 %v38
  %v55 = vld [vmem:[%s2] sm:$0x1]
  %v57 = vlaneseq
  %v58 = vshrl.u32 %v57, 7
  %v59 = vsub.s32 0, %v58
  %v60 = vrot.slane %v55, %v59
  %v62 = vmul.f32 %v39, %v60
  %v63 = vmul.f32 %v40, %v60
  %v64 = vmul.f32 %v41, %v60
  %v65 = vmul.f32 %v42, %v60
  %v66 = vmul.f32 %v43, %v60
  %v67 = vmul.f32 %v44, %v60
  %v68 = vmul.f32 %v45, %v60
  %v69 = vmul.f32 %v46, %v60
  %v70 = vmul.f32 %v47, %v60
  %v71 = vmul.f32 %v48, %v60
  %v72 = vmul.f32 %v49, %v60
  %v73 = vmul.f32 %v50, %v60
  %v74 = vmul.f32 %v51, %v60
  %v75 = vmul.f32 %v52, %v60
  %v76 = vmul.f32 %v53, %v60
  %v77 = vmul.f32 %v54, %v60
  %v78 = vld [vmem:[%s3] sm:$0x1]
  %v80 = vlaneseq
  %v81 = vshrl.u32 %v80, 7
  %v82 = vsub.s32 0, %v81
  %v83 = vrot.slane %v78, %v82
  %v85 = vadd.f32 %v62, %v83
  %v86 = vadd.f32 %v63, %v83
  %v87 = vadd.f32 %v64, %v83
  %v88 = vadd.f32 %v65, %v83
  %v89 = vadd.f32 %v66, %v83
  %v90 = vadd.f32 %v67, %v83
  %v91 = vadd.f32 %v68, %v83
  %v92 = vadd.f32 %v69, %v83
  %v93 = vadd.f32 %v70, %v83
  %v94 = vadd.f32 %v71, %v83
  %v95 = vadd.f32 %v72, %v83
  %v96 = vadd.f32 %v73, %v83
  %v97 = vadd.f32 %v74, %v83
  %v98 = vadd.f32 %v75, %v83
  %v99 = vadd.f32 %v76, %v83
  %v100 = vadd.f32 %v77, %v83
  %v101 = vld [vmem:[%s1] sm:$0xf]
  %v102 = vld [vmem:[%s1 + $0x4] sm:$0xf]
  %v103 = vld [vmem:[%s1 + $0x8] sm:$0xf]
  %v104 = vld [vmem:[%s1 + $0xc] sm:$0xf]
  %v105 = vld [vmem:[%s1 + $0x10] sm:$0xf]
  %v106 = vld [vmem:[%s1 + $0x14] sm:$0xf]
  %v107 = vld [vmem:[%s1 + $0x18] sm:$0xf]
  %v108 = vld [vmem:[%s1 + $0x1c] sm:$0xf]
  %v109 = vld [vmem:[%s1 + $0x20] sm:$0xf]
  %v110 = vld [vmem:[%s1 + $0x24] sm:$0xf]
  %v111 = vld [vmem:[%s1 + $0x28] sm:$0xf]
  %v112 = vld [vmem:[%s1 + $0x2c] sm:$0xf]
  %v113 = vld [vmem:[%s1 + $0x30] sm:$0xf]
  %v114 = vld [vmem:[%s1 + $0x34] sm:$0xf]
  %v115 = vld [vmem:[%s1 + $0x38] sm:$0xf]
  %v116 = vld [vmem:[%s1 + $0x3c] sm:$0xf]
  %v117 = vunpack.c.l.bf16 %v101
  %v118 = vunpack.c.l.bf16 %v102
  %v119 = vunpack.c.l.bf16 %v103
  %v120 = vunpack.c.l.bf16 %v104
  %v121 = vunpack.c.l.bf16 %v105
  %v122 = vunpack.c.l.bf16 %v106
  %v123 = vunpack.c.l.bf16 %v107
  %v124 = vunpack.c.l.bf16 %v108
  %v125 = vunpack.c.l.bf16 %v109
  %v126 = vunpack.c.l.bf16 %v110
  %v127 = vunpack.c.l.bf16 %v111
  %v128 = vunpack.c.l.bf16 %v112
  %v129 = vunpack.c.l.bf16 %v113
  %v130 = vunpack.c.l.bf16 %v114
  %v131 = vunpack.c.l.bf16 %v115
  %v132 = vunpack.c.l.bf16 %v116
  %v133 = vld [vmem:[%s4] sm:$0x1]
  %v135 = vlaneseq
  %v136 = vshrl.u32 %v135, 7
  %v137 = vsub.s32 0, %v136
  %v138 = vrot.slane %v133, %v137
  %v140 = vmul.f32 %v117, %v138
  %v141 = vmul.f32 %v118, %v138
  %v142 = vmul.f32 %v119, %v138
  %v143 = vmul.f32 %v120, %v138
  %v144 = vmul.f32 %v121, %v138
  %v145 = vmul.f32 %v122, %v138
  %v146 = vmul.f32 %v123, %v138
  %v147 = vmul.f32 %v124, %v138
  %v148 = vmul.f32 %v125, %v138
  %v149 = vmul.f32 %v126, %v138
  %v150 = vmul.f32 %v127, %v138
  %v151 = vmul.f32 %v128, %v138
  %v152 = vmul.f32 %v129, %v138
  %v153 = vmul.f32 %v130, %v138
  %v154 = vmul.f32 %v131, %v138
  %v155 = vmul.f32 %v132, %v138
  %v156 = vld [vmem:[%s5] sm:$0x1]
  %v158 = vlaneseq
  %v159 = vshrl.u32 %v158, 7
  %v160 = vsub.s32 0, %v159
  %v161 = vrot.slane %v156, %v160
  %v163 = vadd.f32 %v140, %v161
  %v164 = vadd.f32 %v141, %v161
  %v165 = vadd.f32 %v142, %v161
  %v166 = vadd.f32 %v143, %v161
  %v167 = vadd.f32 %v144, %v161
  %v168 = vadd.f32 %v145, %v161
  %v169 = vadd.f32 %v146, %v161
  %v170 = vadd.f32 %v147, %v161
  %v171 = vadd.f32 %v148, %v161
  %v172 = vadd.f32 %v149, %v161
  %v173 = vadd.f32 %v150, %v161
  %v174 = vadd.f32 %v151, %v161
  %v175 = vadd.f32 %v152, %v161
  %v176 = vadd.f32 %v153, %v161
  %v177 = vadd.f32 %v154, %v161
  %v178 = vadd.f32 %v155, %v161
  %v179 = vadd.f32 %v85, %v163
  %v180 = vadd.f32 %v86, %v164
  %v181 = vadd.f32 %v87, %v165
  %v182 = vadd.f32 %v88, %v166
  %v183 = vadd.f32 %v89, %v167
  %v184 = vadd.f32 %v90, %v168
  %v185 = vadd.f32 %v91, %v169
  %v186 = vadd.f32 %v92, %v170
  %v187 = vadd.f32 %v93, %v171
  %v188 = vadd.f32 %v94, %v172
  %v189 = vadd.f32 %v95, %v173
  %v190 = vadd.f32 %v96, %v174
  %v191 = vadd.f32 %v97, %v175
  %v192 = vadd.f32 %v98, %v176
  %v193 = vadd.f32 %v99, %v177
  %v194 = vadd.f32 %v100, %v178
  %v195 = vmax.f32 %v179, 0.0
  %v196 = vmax.f32 %v180, 0.0
  %v197 = vmax.f32 %v181, 0.0
  %v198 = vmax.f32 %v182, 0.0
  %v199 = vmax.f32 %v183, 0.0
  %v200 = vmax.f32 %v184, 0.0
  %v201 = vmax.f32 %v185, 0.0
  %v202 = vmax.f32 %v186, 0.0
  %v203 = vmax.f32 %v187, 0.0
  %v204 = vmax.f32 %v188, 0.0
  %v205 = vmax.f32 %v189, 0.0
  %v206 = vmax.f32 %v190, 0.0
  %v207 = vmax.f32 %v191, 0.0
  %v208 = vmax.f32 %v192, 0.0
  %v209 = vmax.f32 %v193, 0.0
  %v210 = vmax.f32 %v194, 0.0
  %211 = vst [vmem:[%s6] sm:$0xff] %v195
  %212 = vst [vmem:[%s6 + $0x8] sm:$0xff] %v196
  %213 = vst [vmem:[%s6 + $0x10] sm:$0xff] %v197
  %214 = vst [vmem:[%s6 + $0x18] sm:$0xff] %v198
  %215 = vst [vmem:[%s6 + $0x20] sm:$0xff] %v199
  %216 = vst [vmem:[%s6 + $0x28] sm:$0xff] %v200
  %217 = vst [vmem:[%s6 + $0x30] sm:$0xff] %v201
  %218 = vst [vmem:[%s6 + $0x38] sm:$0xff] %v202
  %219 = vst [vmem:[%s6 + $0x40] sm:$0xff] %v203
  %220 = vst [vmem:[%s6 + $0x48] sm:$0xff] %v204
  %221 = vst [vmem:[%s6 + $0x50] sm:$0xff] %v205
  %222 = vst [vmem:[%s6 + $0x58] sm:$0xff] %v206
  %223 = vst [vmem:[%s6 + $0x60] sm:$0xff] %v207
  %224 = vst [vmem:[%s6 + $0x68] sm:$0xff] %v208
  %225 = vst [vmem:[%s6 + $0x70] sm:$0xff] %v209
  %226 = vst [vmem:[%s6 + $0x78] sm:$0xff] %v210
  // Predicated region
  $region26: #{basic_block_forward.5} parent=0 // pred_check
    _
  $region27: #{basic_block_forward.5} parent=0 // pred_check_branch
    %228 = sbr.rel (0) target = $region29
  $region28: #{basic_block_forward.5} parent=0 // pred_region
    _
  $region29: #{basic_block_forward.5} parent=0 // pred_fallthru
    _
  // Predicated region
  $region30: #{basic_block_forward.5} parent=0 // pred_check
    _
  $region31: #{basic_block_forward.5} parent=0 // pred_check_branch
    %230 = sbr.rel (0) target = $region33
  $region32: #{basic_block_forward.5} parent=0 // pred_region
    _
  $region33: #{basic_block_forward.5} parent=0 // pred_fallthru
    _

// kernel: basic_block_forward.3
$region0: #{basic_block_forward.3}
  #allocation0 [shape = 'u32[]', space=smem, size = 0x4, offset = 0x4, fixed_abs, tag = 'smem constant byte address 0x4 - core index']
  #allocation1 [shape = 'u32[144,128]{1,0:T(1,128)}', space=vmem, size = 0x12000, scoped, tag = 'internal scratch']
  %s0 = inlined_call_operand.vmem [shape: bf16[8,9,9,128], index: 0, kind: input, shape index: {}]
  %s1 = inlined_call_operand.vmem [shape: bf16[1152,128], index: 1, kind: input, shape index: {}]
  %s2 = inlined_call_operand.vmem [shape: bf16[128,128], index: 2, kind: input, shape index: {}]
  %s3 = inlined_call_operand.vmem [shape: bf16[2,64,128], index: 3, kind: output, shape index: {0}]
  %s4 = inlined_call_operand.vmem [shape: f32[2,1,128], index: 4, kind: output, shape index: {1}]
  %s5 = inlined_call_operand.vmem [shape: f32[2,1,128], index: 5, kind: output, shape index: {2}]
  %s6 = inlined_call_operand.vmem [shape: bf16[2,64,128], index: 6, kind: output, shape index: {3}]
  %s7 = inlined_call_operand.vmem [shape: f32[2,1,128], index: 7, kind: output, shape index: {4}]
  %s8 = inlined_call_operand.vmem [shape: f32[2,1,128], index: 8, kind: output, shape index: {5}]
  %9 = xla_tuple %s3, %s4, %s5, %s6, %s7, %s8
  %s10 = sld [smem:[#allocation0]]
  $region85: #{basic_block_forward.3} parent=0
    _
  %s12 = ssub.s32 1, %s10
  %s13 = scalar_select 0, %s12, %s10
  loop: start=0, step=1, limit=4
  $region2: #{basic_block_forward.3} parent=0 // loop_pre_header
    _
  $region3: #{basic_block_forward.3} parent=0 // loop_header
    %s15 = sphi 0, %s19
    %p16 = scmp.ge.s32.totalorder %s15, 4
    %s25 = sphi 0, %s27
    %s28 = sphi 0, %s25
    %s29 = sphi 0, %s28
    %s45 = sphi 0, %s29
    %s49 = sphi 0, %s49
    %s51 = sphi 0, %s49
    %s52 = sphi 0, %s51
    %s66 = sphi 0, %s52
    %s70 = sphi 0, %s70
    %s72 = sphi 0, %s70
    %s73 = sphi 0, %s72
    %s87 = sphi 0, %s73
    %s93 = sphi 0, %s95
    %s96 = sphi 0, %s93
    %s97 = sphi 0, %s96
    %s113 = sphi 0, %s97
    %s119 = sphi 0, %s121
    %s122 = sphi 0, %s119
    %s123 = sphi 0, %s122
    %s139 = sphi 0, %s123
    %s145 = sphi 0, %s147
    %s148 = sphi 0, %s145
    %s149 = sphi 0, %s148
    %s165 = sphi 0, %s149
    %s171 = sphi 0, %s173
    %s174 = sphi 0, %s171
    %s175 = sphi 0, %s174
    %s191 = sphi 0, %s175
    %s197 = sphi 0, %s199
    %s200 = sphi 0, %s197
    %s201 = sphi 0, %s200
    %s217 = sphi 0, %s201
    %s223 = sphi 0, %s225
    %s226 = sphi 0, %s223
    %s227 = sphi 0, %s226
    %s243 = sphi 0, %s227
  $region4: #{basic_block_forward.3} parent=0 // loop_header_branch
    %18 = sbr.rel (%p16) target = $region8
  $region5: #{basic_block_forward.3} parent=0 // loop_body
    %s20 = ssub.s32 %s15, 1
    %s21 = ssub.s32 %s15, 2
    %s22 = sadd.s32 %s15, 1
    %s23 = ssub.s32 %s15, %s22
    %p24 = scmp.eq.s32.totalorder %s23, 0
    %s26 = sadd.s32 %s25, 1
    %s27 = scalar_select %p24, %s25, %s26
    %p30 = pneg %p24
    %p31 = scmp.eq.s32.totalorder %s15, 1
    %p32 = por %p30, %p31
    %p33 = scmp.ne.s32.totalorder %s25, %s28
    %p34 = scmp.eq.s32.totalorder %s15, 0
    %p35 = por %p33, %p34
    %p36 = scmp.ne.s32.totalorder %s25, %s28
    %p37 = scmp.eq.s32.totalorder %s20, 1
    %p38 = por %p36, %p37
    %p39 = scmp.ne.s32.totalorder %s28, %s29
    %p40 = scmp.eq.s32.totalorder %s20, 0
    %p41 = por %p39, %p40
    %p42 = scmp.ne.s32.totalorder %s28, %s29
    %p43 = scmp.eq.s32.totalorder %s21, 1
    %p44 = por %p42, %p43
    %p46 = scmp.ne.s32.totalorder %s29, %s45
    %p47 = scmp.eq.s32.totalorder %s21, 0
    %p48 = por %p46, %p47
    %s50 = sadd.s32 %s49, 1
    %p53 = scmp.eq.s32.totalorder %s15, 1
    %p54 = scmp.ne.s32.totalorder %s49, %s51
    %p55 = scmp.eq.s32.totalorder %s15, 0
    %p56 = por %p54, %p55
    %p57 = scmp.ne.s32.totalorder %s49, %s51
    %p58 = scmp.eq.s32.totalorder %s20, 1
    %p59 = por %p57, %p58
    %p60 = scmp.ne.s32.totalorder %s51, %s52
    %p61 = scmp.eq.s32.totalorder %s20, 0
    %p62 = por %p60, %p61
    %p63 = scmp.ne.s32.totalorder %s51, %s52
    %p64 = scmp.eq.s32.totalorder %s21, 1
    %p65 = por %p63, %p64
    %p67 = scmp.ne.s32.totalorder %s52, %s66
    %p68 = scmp.eq.s32.totalorder %s21, 0
    %p69 = por %p67, %p68
    %s71 = sadd.s32 %s70, 1
    %p74 = scmp.eq.s32.totalorder %s15, 1
    %p75 = scmp.ne.s32.totalorder %s70, %s72
    %p76 = scmp.eq.s32.totalorder %s15, 0
    %p77 = por %p75, %p76
    %p78 = scmp.ne.s32.totalorder %s70, %s72
    %p79 = scmp.eq.s32.totalorder %s20, 1
    %p80 = por %p78, %p79
    %p81 = scmp.ne.s32.totalorder %s72, %s73
    %p82 = scmp.eq.s32.totalorder %s20, 0
    %p83 = por %p81, %p82
    %p84 = scmp.ne.s32.totalorder %s72, %s73
    %p85 = scmp.eq.s32.totalorder %s21, 1
    %p86 = por %p84, %p85
    %p88 = scmp.ne.s32.totalorder %s73, %s87
    %p89 = scmp.eq.s32.totalorder %s21, 0
    %p90 = por %p88, %p89
    %s91 = ssub.s32 %s15, %s22
    %p92 = scmp.eq.s32.totalorder %s91, 0
    %s94 = sadd.s32 %s93, 1
    %s95 = scalar_select %p92, %s93, %s94
    %p98 = pneg %p92
    %p99 = scmp.eq.s32.totalorder %s15, 1
    %p100 = por %p98, %p99
    %p101 = scmp.ne.s32.totalorder %s93, %s96
    %p102 = scmp.eq.s32.totalorder %s15, 0
    %p103 = por %p101, %p102
    %p104 = scmp.ne.s32.totalorder %s93, %s96
    %p105 = scmp.eq.s32.totalorder %s20, 1
    %p106 = por %p104, %p105
    %p107 = scmp.ne.s32.totalorder %s96, %s97
    %p108 = scmp.eq.s32.totalorder %s20, 0
    %p109 = por %p107, %p108
    %p110 = scmp.ne.s32.totalorder %s96, %s97
    %p111 = scmp.eq.s32.totalorder %s21, 1
    %p112 = por %p110, %p111
    %p114 = scmp.ne.s32.totalorder %s97, %s113
    %p115 = scmp.eq.s32.totalorder %s21, 0
    %p116 = por %p114, %p115
    %s117 = ssub.s32 %s15, %s22
    %p118 = scmp.eq.s32.totalorder %s117, 0
    %s120 = sadd.s32 %s119, 1
    %s121 = scalar_select %p118, %s119, %s120
    %p124 = pneg %p118
    %p125 = scmp.eq.s32.totalorder %s15, 1
    %p126 = por %p124, %p125
    %p127 = scmp.ne.s32.totalorder %s119, %s122
    %p128 = scmp.eq.s32.totalorder %s15, 0
    %p129 = por %p127, %p128
    %p130 = scmp.ne.s32.totalorder %s119, %s122
    %p131 = scmp.eq.s32.totalorder %s20, 1
    %p132 = por %p130, %p131
    %p133 = scmp.ne.s32.totalorder %s122, %s123
    %p134 = scmp.eq.s32.totalorder %s20, 0
    %p135 = por %p133, %p134
    %p136 = scmp.ne.s32.totalorder %s122, %s123
    %p137 = scmp.eq.s32.totalorder %s21, 1
    %p138 = por %p136, %p137
    %p140 = scmp.ne.s32.totalorder %s123, %s139
    %p141 = scmp.eq.s32.totalorder %s21, 0
    %p142 = por %p140, %p141
    %s143 = ssub.s32 %s15, %s22
    %p144 = scmp.eq.s32.totalorder %s143, 0
    %s146 = sadd.s32 %s145, 1
    %s147 = scalar_select %p144, %s145, %s146
    %p150 = pneg %p144
    %p151 = scmp.eq.s32.totalorder %s15, 1
    %p152 = por %p150, %p151
    %p153 = scmp.ne.s32.totalorder %s145, %s148
    %p154 = scmp.eq.s32.totalorder %s15, 0
    %p155 = por %p153, %p154
    %p156 = scmp.ne.s32.totalorder %s145, %s148
    %p157 = scmp.eq.s32.totalorder %s20, 1
    %p158 = por %p156, %p157
    %p159 = scmp.ne.s32.totalorder %s148, %s149
    %p160 = scmp.eq.s32.totalorder %s20, 0
    %p161 = por %p159, %p160
    %p162 = scmp.ne.s32.totalorder %s148, %s149
    %p163 = scmp.eq.s32.totalorder %s21, 1
    %p164 = por %p162, %p163
    %p166 = scmp.ne.s32.totalorder %s149, %s165
    %p167 = scmp.eq.s32.totalorder %s21, 0
    %p168 = por %p166, %p167
    %s169 = ssub.s32 %s15, %s22
    %p170 = scmp.eq.s32.totalorder %s169, 0
    %s172 = sadd.s32 %s171, 1
    %s173 = scalar_select %p170, %s171, %s172
    %p176 = pneg %p170
    %p177 = scmp.eq.s32.totalorder %s15, 1
    %p178 = por %p176, %p177
    %p179 = scmp.ne.s32.totalorder %s171, %s174
    %p180 = scmp.eq.s32.totalorder %s15, 0
    %p181 = por %p179, %p180
    %p182 = scmp.ne.s32.totalorder %s171, %s174
    %p183 = scmp.eq.s32.totalorder %s20, 1
    %p184 = por %p182, %p183
    %p185 = scmp.ne.s32.totalorder %s174, %s175
    %p186 = scmp.eq.s32.totalorder %s20, 0
    %p187 = por %p185, %p186
    %p188 = scmp.ne.s32.totalorder %s174, %s175
    %p189 = scmp.eq.s32.totalorder %s21, 1
    %p190 = por %p188, %p189
    %p192 = scmp.ne.s32.totalorder %s175, %s191
    %p193 = scmp.eq.s32.totalorder %s21, 0
    %p194 = por %p192, %p193
    %s195 = ssub.s32 %s15, %s22
    %p196 = scmp.eq.s32.totalorder %s195, 0
    %s198 = sadd.s32 %s197, 1
    %s199 = scalar_select %p196, %s197, %s198
    %p202 = pneg %p196
    %p203 = scmp.eq.s32.totalorder %s15, 1
    %p204 = por %p202, %p203
    %p205 = scmp.ne.s32.totalorder %s197, %s200
    %p206 = scmp.eq.s32.totalorder %s15, 0
    %p207 = por %p205, %p206
    %p208 = scmp.ne.s32.totalorder %s197, %s200
    %p209 = scmp.eq.s32.totalorder %s20, 1
    %p210 = por %p208, %p209
    %p211 = scmp.ne.s32.totalorder %s200, %s201
    %p212 = scmp.eq.s32.totalorder %s20, 0
    %p213 = por %p211, %p212
    %p214 = scmp.ne.s32.totalorder %s200, %s201
    %p215 = scmp.eq.s32.totalorder %s21, 1
    %p216 = por %p214, %p215
    %p218 = scmp.ne.s32.totalorder %s201, %s217
    %p219 = scmp.eq.s32.totalorder %s21, 0
    %p220 = por %p218, %p219
    %s221 = ssub.s32 %s15, %s22
    %p222 = scmp.eq.s32.totalorder %s221, 0
    %s224 = sadd.s32 %s223, 1
    %s225 = scalar_select %p222, %s223, %s224
    %p228 = pneg %p222
    %p229 = scmp.eq.s32.totalorder %s15, 1
    %p230 = por %p228, %p229
    %p231 = scmp.ne.s32.totalorder %s223, %s226
    %p232 = scmp.eq.s32.totalorder %s15, 0
    %p233 = por %p231, %p232
    %p234 = scmp.ne.s32.totalorder %s223, %s226
    %p235 = scmp.eq.s32.totalorder %s20, 1
    %p236 = por %p234, %p235
    %p237 = scmp.ne.s32.totalorder %s226, %s227
    %p238 = scmp.eq.s32.totalorder %s20, 0
    %p239 = por %p237, %p238
    %p240 = scmp.ne.s32.totalorder %s226, %s227
    %p241 = scmp.eq.s32.totalorder %s21, 1
    %p242 = por %p240, %p241
    %p244 = scmp.ne.s32.totalorder %s227, %s243
    %p245 = scmp.eq.s32.totalorder %s21, 0
    %p246 = por %p244, %p245
    %p247 = scmp.le.s32.totalorder 1, %s15
    %p248 = scmp.lt.s32.totalorder %s15, 3
    %p249 = pnand %p247, %p248
    %p250 = pneg %p249
    // Predicated region
    $region9: #{basic_block_forward.3} parent=5 // pred_check
      _
    $region10: #{basic_block_forward.3} parent=5 // pred_check_branch
      %252 = sbr.rel (%p249) target = $region12
    $region11: #{basic_block_forward.3} parent=5 // pred_region
      %s253 = ssub.s32 %s15, 1
      // Predicated region
      $region13: #{basic_block_forward.3} parent=11 // pred_check
        %p254 = pneg %p62
      $region14: #{basic_block_forward.3} parent=11 // pred_check_branch
        %256 = sbr.rel (%p254) target = $region16
      $region15: #{basic_block_forward.3} parent=11 // pred_region
        _
      $region16: #{basic_block_forward.3} parent=11 // pred_fallthru
        _
      // Predicated region
      $region17: #{basic_block_forward.3} parent=11 // pred_check
        %p257 = pneg %p83
      $region18: #{basic_block_forward.3} parent=11 // pred_check_branch
        %259 = sbr.rel (%p257) target = $region20
      $region19: #{basic_block_forward.3} parent=11 // pred_region
        _
      $region20: #{basic_block_forward.3} parent=11 // pred_fallthru
        _
    $region12: #{basic_block_forward.3} parent=5 // pred_fallthru
      _
    %p260 = scmp.lt.s32.totalorder %s15, 2
    // Predicated region
    $region21: #{basic_block_forward.3} parent=5 // pred_check
      %p261 = pneg %p260
    $region22: #{basic_block_forward.3} parent=5 // pred_check_branch
      %263 = sbr.rel (%p261) target = $region24
    $region23: #{basic_block_forward.3} parent=5 // pred_region
      // Predicated region
      $region25: #{basic_block_forward.3} parent=23 // pred_check
        %p264 = pneg %p35
      $region26: #{basic_block_forward.3} parent=23 // pred_check_branch
        %266 = sbr.rel (%p264) target = $region28
      $region27: #{basic_block_forward.3} parent=23 // pred_region
        %s267 = smul.u32 4, %s15
        %p268 = scmp.lt.s32.totalorder %s267, 7
        %s269 = scalar_select %p268, %s267, 7
        %s270 = smul.addr %s269, 18
        %s271 = smul.addr %s270, 4
        %s272 = scalar_lea.vmem %s0, %s271
        %s273 = smul.u32 4, %s15
      $region28: #{basic_block_forward.3} parent=23 // pred_fallthru
        _
    $region24: #{basic_block_forward.3} parent=5 // pred_fallthru
      _
    %p274 = scmp.le.s32.totalorder 1, %s15
    %p275 = scmp.lt.s32.totalorder %s15, 3
    %p276 = pnand %p274, %p275
    %p277 = pneg %p276
    // Predicated region
    $region29: #{basic_block_forward.3} parent=5 // pred_check
      _
    $region30: #{basic_block_forward.3} parent=5 // pred_check_branch
      %279 = sbr.rel (%p276) target = $region32
    $region31: #{basic_block_forward.3} parent=5 // pred_region
      %s280 = ssub.s32 %s15, 1
      %s281 = smul.u32 4, %s20
      %p282 = scmp.lt.s32.totalorder %s281, 7
      %s283 = scalar_select %p282, %s281, 7
      %s284 = smul.addr %s283, 18
      %s285 = smul.addr %s284, 4
      %s286 = scalar_lea.vmem %s0, %s285
      %p287 = pneg %p41
      %p288 = pneg %p38
      %p289 = pneg %p62
      %p290 = pneg %p59
      %p291 = pneg %p83
      %p292 = pneg %p80
      %p293 = pneg %p109
      %p294 = pneg %p106
      %p295 = scmp.lt.s32.totalorder %s20, 1
      %s296 = scalar_select %p295, %s20, 1
      %s297 = smul.addr %s296, 8
      %s298 = smul.addr %s297, 4
      %s299 = scalar_lea.vmem %s3, %s298
      %p300 = pneg %p135
      %p301 = pneg %p132
      %p302 = scmp.lt.s32.totalorder %s20, 1
      %s303 = scalar_select %p302, %s20, 1
      %s304 = scalar_lea.vmem %s4, %s303
      %p305 = pneg %p161
      %p306 = pneg %p158
      %p307 = scmp.lt.s32.totalorder %s20, 1
      %s308 = scalar_select %p307, %s20, 1
      %s309 = scalar_lea.vmem %s5, %s308
      %p310 = pneg %p187
      %p311 = pneg %p184
      %p312 = scmp.lt.s32.totalorder %s20, 1
      %s313 = scalar_select %p312, %s20, 1
      %s314 = smul.addr %s313, 8
      %s315 = smul.addr %s314, 4
      %s316 = scalar_lea.vmem %s6, %s315
      %p317 = pneg %p213
      %p318 = pneg %p210
      %p319 = scmp.lt.s32.totalorder %s20, 1
      %s320 = scalar_select %p319, %s20, 1
      %s321 = scalar_lea.vmem %s7, %s320
      %p322 = pneg %p239
      %p323 = pneg %p236
      %p324 = scmp.lt.s32.totalorder %s20, 1
      %s325 = scalar_select %p324, %s20, 1
      %s326 = scalar_lea.vmem %s8, %s325
      %s327 = smul.u32 4, %s20
      %p328 = scmp.lt.s32.totalorder %s327, 7
      %s329 = scalar_select %p328, %s327, 7
      %s330 = smul.addr %s329, 18
      %s331 = smul.addr %s330, 4
      %s332 = scalar_lea.vmem %s0, %s331
      %s333 = smul.u32 4, %s20
      %p334 = scmp.lt.s32.totalorder %s20, 1
      %s335 = scalar_select %p334, %s20, 1
      %s336 = smul.addr %s335, 8
      %s337 = smul.addr %s336, 4
      %s338 = scalar_lea.vmem %s3, %s337
      %p339 = scmp.lt.s32.totalorder %s20, 1
      %s340 = scalar_select %p339, %s20, 1
      %s341 = scalar_lea.vmem %s4, %s340
      %p342 = scmp.lt.s32.totalorder %s20, 1
      %s343 = scalar_select %p342, %s20, 1
      %s344 = scalar_lea.vmem %s5, %s343
      %p345 = scmp.lt.s32.totalorder %s20, 1
      %s346 = scalar_select %p345, %s20, 1
      %s347 = smul.addr %s346, 8
      %s348 = smul.addr %s347, 4
      %s349 = scalar_lea.vmem %s6, %s348
      %p350 = scmp.lt.s32.totalorder %s20, 1
      %s351 = scalar_select %p350, %s20, 1
      %s352 = scalar_lea.vmem %s7, %s351
      %p353 = scmp.lt.s32.totalorder %s20, 1
      %s354 = scalar_select %p353, %s20, 1
      %s355 = scalar_lea.vmem %s8, %s354
      %v357 = vld [vmem:[%s332] sm:$0xf]
      %v358 = vld [vmem:[%s332 + $0x8] sm:$0xf]
      %v359 = vld [vmem:[%s332 + $0x10] sm:$0xf]
      %v360 = vld [vmem:[%s332 + $0x18] sm:$0xf]
      %v361 = vld [vmem:[%s332 + $0x20] sm:$0xf]
      %v362 = vld [vmem:[%s332 + $0x28] sm:$0xf]
      %v363 = vld [vmem:[%s332 + $0x30] sm:$0xf]
      %v364 = vld [vmem:[%s332 + $0x38] sm:$0xf]
      %v365 = vld [vmem:[%s1] sm:$0xf]
      %v366 = vld [vmem:[%s1 + $0x4] sm:$0xf]
      %v367 = vld [vmem:[%s1 + $0x8] sm:$0xf]
      %v368 = vld [vmem:[%s1 + $0xc] sm:$0xf]
      %v369 = vld [vmem:[%s1 + $0x10] sm:$0xf]
      %v370 = vld [vmem:[%s1 + $0x14] sm:$0xf]
      %v371 = vld [vmem:[%s1 + $0x18] sm:$0xf]
      %v372 = vld [vmem:[%s1 + $0x1c] sm:$0xf]
      %v373 = vld [vmem:[%s1 + $0x20] sm:$0xf]
      %v374 = vld [vmem:[%s1 + $0x24] sm:$0xf]
      %v375 = vld [vmem:[%s1 + $0x28] sm:$0xf]
      %v376 = vld [vmem:[%s1 + $0x2c] sm:$0xf]
      %v377 = vld [vmem:[%s1 + $0x30] sm:$0xf]
      %v378 = vld [vmem:[%s1 + $0x34] sm:$0xf]
      %v379 = vld [vmem:[%s1 + $0x38] sm:$0xf]
      %v380 = vld [vmem:[%s1 + $0x3c] sm:$0xf]
      %s381 = scalar_lea.vmem %s332, 72
      %v382 = vld [vmem:[%s381] sm:$0xf]
      %v383 = vld [vmem:[%s381 + $0x8] sm:$0xf]
      %v384 = vld [vmem:[%s381 + $0x10] sm:$0xf]
      %v385 = vld [vmem:[%s381 + $0x18] sm:$0xf]
      %v386 = vld [vmem:[%s381 + $0x20] sm:$0xf]
      %v387 = vld [vmem:[%s381 + $0x28] sm:$0xf]
      %v388 = vld [vmem:[%s381 + $0x30] sm:$0xf]
      %v389 = vld [vmem:[%s381 + $0x38] sm:$0xf]
      %v390 = vld [vmem:[%s1 + $0x40] sm:$0xf]
      %v391 = vld [vmem:[%s1 + $0x44] sm:$0xf]
      %v392 = vld [vmem:[%s1 + $0x48] sm:$0xf]
      %v393 = vld [vmem:[%s1 + $0x4c] sm:$0xf]
      %v394 = vld [vmem:[%s1 + $0x50] sm:$0xf]
      %v395 = vld [vmem:[%s1 + $0x54] sm:$0xf]
      %v396 = vld [vmem:[%s1 + $0x58] sm:$0xf]
      %v397 = vld [vmem:[%s1 + $0x5c] sm:$0xf]
      %v398 = vld [vmem:[%s1 + $0x60] sm:$0xf]
      %v399 = vld [vmem:[%s1 + $0x64] sm:$0xf]
      %v400 = vld [vmem:[%s1 + $0x68] sm:$0xf]
      %v401 = vld [vmem:[%s1 + $0x6c] sm:$0xf]
      %v402 = vld [vmem:[%s1 + $0x70] sm:$0xf]
      %v403 = vld [vmem:[%s1 + $0x74] sm:$0xf]
      %v404 = vld [vmem:[%s1 + $0x78] sm:$0xf]
      %v405 = vld [vmem:[%s1 + $0x7c] sm:$0xf]
      %v414 = vunpack.c.l.b16 %v382
      %v415 = vunpack.c.l.b16 %v383
      %v416 = vunpack.c.l.b16 %v384
      %v417 = vunpack.c.l.b16 %v385
      %v418 = vunpack.c.l.b16 %v386
      %v419 = vunpack.c.l.b16 %v387
      %v420 = vunpack.c.l.b16 %v388
      %v421 = vunpack.c.l.b16 %v389
      %v422 = vpack.c.b16 %v415, %v414
      %v423 = vpack.c.b16 %v417, %v416
      %v424 = vpack.c.b16 %v419, %v418
      %v425 = vpack.c.b16 %v421, %v420
      %v446 = vunpack.c.l.b16 %v390
      %v447 = vunpack.c.l.b16 %v391
      %v448 = vunpack.c.l.b16 %v392
      %v449 = vunpack.c.l.b16 %v393
      %v450 = vunpack.c.l.b16 %v394
      %v451 = vunpack.c.l.b16 %v395
      %v452 = vunpack.c.l.b16 %v396
      %v453 = vunpack.c.l.b16 %v397
      %v454 = vunpack.c.l.b16 %v398
      %v455 = vunpack.c.l.b16 %v399
      %v456 = vunpack.c.l.b16 %v400
      %v457 = vunpack.c.l.b16 %v401
      %v458 = vunpack.c.l.b16 %v402
      %v459 = vunpack.c.l.b16 %v403
      %v460 = vunpack.c.l.b16 %v404
      %v461 = vunpack.c.l.b16 %v405
      %v462 = vpack.c.b16 %v447, %v446
      %v463 = vpack.c.b16 %v449, %v448
      %v464 = vpack.c.b16 %v451, %v450
      %v465 = vpack.c.b16 %v453, %v452
      %v466 = vpack.c.b16 %v455, %v454
      %v467 = vpack.c.b16 %v457, %v456
      %v468 = vpack.c.b16 %v459, %v458
      %v469 = vpack.c.b16 %v461, %v460
      %478 = vmatprep.subr.bf16.mxu0 0
      %479 = vmatpush1.bf16.msra.mxu0 %v469
      %480 = vmatprep.subr.bf16.mxu0 0
      %481 = vmatpush1.bf16.msra.mxu0 %v468
      %482 = vmatprep.subr.bf16.mxu0 0
      %483 = vmatpush1.bf16.msra.mxu0 %v467
      %484 = vmatprep.subr.bf16.mxu0 0
      %485 = vmatpush1.bf16.msra.mxu0 %v466
      %486 = vmatprep.subr.bf16.mxu0 0
      %487 = vmatpush1.bf16.msra.mxu0 %v465
      %488 = vmatprep.subr.bf16.mxu0 0
      %489 = vmatpush1.bf16.msra.mxu0 %v464
      %490 = vmatprep.subr.bf16.mxu0 0
      %491 = vmatpush1.bf16.msra.mxu0 %v463
      %492 = vmatprep.subr.bf16.mxu0 0
      %493 = vmatpush1.bf16.msra.mxu0 %v462
      %494 = vmatprep.subr.bf16.mxu0 0
      %495 = vmatpush2.bf16.msra.mxu0 0
      %496 = vmatprep.subr.bf16.mxu0 0
      %497 = vmatpush2.bf16.msra.mxu0 0
      %498 = vmatprep.subr.bf16.mxu0 0
      %499 = vmatpush2.bf16.msra.mxu0 0
      %500 = vmatprep.subr.bf16.mxu0 0
      %501 = vmatpush2.bf16.msra.mxu0 0
      %502 = vmatprep.subr.bf16.mxu0 0
      %503 = vmatpush2.bf16.msra.mxu0 0
      %504 = vmatprep.subr.bf16.mxu0 0
      %505 = vmatpush2.bf16.msra.mxu0 0
      %506 = vmatprep.subr.bf16.mxu0 0
      %507 = vmatpush2.bf16.msra.mxu0 0
      %508 = vmatprep.subr.bf16.mxu0 0
      %509 = vmatpush2.bf16.msra.mxu0 0
      %510 = vmatprep.mubr.bf16.mxu0 0
      %511 = vmatmul.mubr.bf16.gmra.mxu0 %v422
      %v512 = vpop.f32.mrf.mxu0
      %v513 = vadd.f32 0.0, %v512
      %v514 = vpop.f32.mrf.mxu0
      %v515 = vpop.f32.mrf.mxu0
      %v516 = vadd.f32 0.0, %v515
      %v517 = vpop.f32.mrf.mxu0
      %518 = vmatprep.mubr.bf16.mxu0 0
      %519 = vmatmul.mubr.bf16.gmra.mxu0 %v423
      %v520 = vpop.f32.mrf.mxu0
      %v521 = vadd.f32 0.0, %v520
      %v522 = vpop.f32.mrf.mxu0
      %v523 = vpop.f32.mrf.mxu0
      %v524 = vadd.f32 0.0, %v523
      %v525 = vpop.f32.mrf.mxu0
      %526 = vmatprep.mubr.bf16.mxu0 0
      %527 = vmatmul.mubr.bf16.gmra.mxu0 %v424
      %v528 = vpop.f32.mrf.mxu0
      %v529 = vadd.f32 0.0, %v528
      %v530 = vpop.f32.mrf.mxu0
      %v531 = vpop.f32.mrf.mxu0
      %v532 = vadd.f32 0.0, %v531
      %v533 = vpop.f32.mrf.mxu0
      %534 = vmatprep.mubr.bf16.mxu0 0
      %535 = vmatmul.mubr.bf16.gmra.mxu0 %v425
      %v536 = vpop.f32.mrf.mxu0
      %v537 = vadd.f32 0.0, %v536
      %v538 = vpop.f32.mrf.mxu0
      %v539 = vpop.f32.mrf.mxu0
      %v540 = vadd.f32 0.0, %v539
      %v541 = vpop.f32.mrf.mxu0
      %542 = vdwg.mxu0
      %v551 = vunpack.c.l.b16 %v357
      %v552 = vunpack.c.l.b16 %v358
      %v553 = vunpack.c.l.b16 %v359
      %v554 = vunpack.c.l.b16 %v360
      %v555 = vunpack.c.l.b16 %v361
      %v556 = vunpack.c.l.b16 %v362
      %v557 = vunpack.c.l.b16 %v363
      %v558 = vunpack.c.l.b16 %v364
      %v559 = vpack.c.b16 %v552, %v551
      %v560 = vpack.c.b16 %v554, %v553
      %v561 = vpack.c.b16 %v556, %v555
      %v562 = vpack.c.b16 %v558, %v557
      %v583 = vunpack.c.l.b16 %v365
      %v584 = vunpack.c.l.b16 %v366
      %v585 = vunpack.c.l.b16 %v367
      %v586 = vunpack.c.l.b16 %v368
      %v587 = vunpack.c.l.b16 %v369
      %v588 = vunpack.c.l.b16 %v370
      %v589 = vunpack.c.l.b16 %v371
      %v590 = vunpack.c.l.b16 %v372
      %v591 = vunpack.c.l.b16 %v373
      %v592 = vunpack.c.l.b16 %v374
      %v593 = vunpack.c.l.b16 %v375
      %v594 = vunpack.c.l.b16 %v376
      %v595 = vunpack.c.l.b16 %v377
      %v596 = vunpack.c.l.b16 %v378
      %v597 = vunpack.c.l.b16 %v379
      %v598 = vunpack.c.l.b16 %v380
      %v599 = vpack.c.b16 %v584, %v583
      %v600 = vpack.c.b16 %v586, %v585
      %v601 = vpack.c.b16 %v588, %v587
      %v602 = vpack.c.b16 %v590, %v589
      %v603 = vpack.c.b16 %v592, %v591
      %v604 = vpack.c.b16 %v594, %v593
      %v605 = vpack.c.b16 %v596, %v595
      %v606 = vpack.c.b16 %v598, %v597
      %615 = vmatprep.subr.bf16.mxu0 0
      %616 = vmatpush1.bf16.msra.mxu0 %v606
      %617 = vmatprep.subr.bf16.mxu0 0
      %618 = vmatpush1.bf16.msra.mxu0 %v605
      %619 = vmatprep.subr.bf16.mxu0 0
      %620 = vmatpush1.bf16.msra.mxu0 %v604
      %621 = vmatprep.subr.bf16.mxu0 0
      %622 = vmatpush1.bf16.msra.mxu0 %v603
      %623 = vmatprep.subr.bf16.mxu0 0
      %624 = vmatpush1.bf16.msra.mxu0 %v602
      %625 = vmatprep.subr.bf16.mxu0 0
      %626 = vmatpush1.bf16.msra.mxu0 %v601
      %627 = vmatprep.subr.bf16.mxu0 0
      %628 = vmatpush1.bf16.msra.mxu0 %v600
      %629 = vmatprep.subr.bf16.mxu0 0
      %630 = vmatpush1.bf16.msra.mxu0 %v599
      %631 = vmatprep.subr.bf16.mxu0 0
      %632 = vmatpush2.bf16.msra.mxu0 0
      %633 = vmatprep.subr.bf16.mxu0 0
      %634 = vmatpush2.bf16.msra.mxu0 0
      %635 = vmatprep.subr.bf16.mxu0 0
      %636 = vmatpush2.bf16.msra.mxu0 0
      %637 = vmatprep.subr.bf16.mxu0 0
      %638 = vmatpush2.bf16.msra.mxu0 0
      %639 = vmatprep.subr.bf16.mxu0 0
      %640 = vmatpush2.bf16.msra.mxu0 0
      %641 = vmatprep.subr.bf16.mxu0 0
      %642 = vmatpush2.bf16.msra.mxu0 0
      %643 = vmatprep.subr.bf16.mxu0 0
      %644 = vmatpush2.bf16.msra.mxu0 0
      %645 = vmatprep.subr.bf16.mxu0 0
      %646 = vmatpush2.bf16.msra.mxu0 0
      %647 = vmatprep.mubr.bf16.mxu0 0
      %648 = vmatmul.mubr.bf16.gmra.mxu0 %v559
      %v649 = vpop.f32.mrf.mxu0
      %v650 = vadd.f32 %v513, %v649
      %v651 = vpop.f32.mrf.mxu0
      %v652 = vpop.f32.mrf.mxu0
      %v653 = vadd.f32 %v516, %v652
      %v654 = vpop.f32.mrf.mxu0
      %655 = vmatprep.mubr.bf16.mxu0 0
      %656 = vmatmul.mubr.bf16.gmra.mxu0 %v560
      %v657 = vpop.f32.mrf.mxu0
      %v658 = vadd.f32 %v521, %v657
      %v659 = vpop.f32.mrf.mxu0
      %v660 = vpop.f32.mrf.mxu0
      %v661 = vadd.f32 %v524, %v660
      %v662 = vpop.f32.mrf.mxu0
      %663 = vmatprep.mubr.bf16.mxu0 0
      %664 = vmatmul.mubr.bf16.gmra.mxu0 %v561
      %v665 = vpop.f32.mrf.mxu0
      %v666 = vadd.f32 %v529, %v665
      %v667 = vpop.f32.mrf.mxu0
      %v668 = vpop.f32.mrf.mxu0
      %v669 = vadd.f32 %v532, %v668
      %v670 = vpop.f32.mrf.mxu0
      %671 = vmatprep.mubr.bf16.mxu0 0
      %672 = vmatmul.mubr.bf16.gmra.mxu0 %v562
      %v673 = vpop.f32.mrf.mxu0
      %v674 = vadd.f32 %v537, %v673
      %v675 = vpop.f32.mrf.mxu0
      %v676 = vpop.f32.mrf.mxu0
      %v677 = vadd.f32 %v540, %v676
      %v678 = vpop.f32.mrf.mxu0
      %679 = vdwg.mxu0
      %v680 = vld [vmem:[%s332] sm:$0xf]
      %v681 = vld [vmem:[%s332 + $0x4] sm:$0x1]
      %v682 = vld [vmem:[%s332 + $0x8] sm:$0xf]
      %v683 = vld [vmem:[%s332 + $0xc] sm:$0x1]
      %v684 = vld [vmem:[%s332 + $0x10] sm:$0xf]
      %v685 = vld [vmem:[%s332 + $0x14] sm:$0x1]
      %v686 = vld [vmem:[%s332 + $0x18] sm:$0xf]
      %v687 = vld [vmem:[%s332 + $0x1c] sm:$0x1]
      %v688 = vld [vmem:[%s332 + $0x20] sm:$0xf]
      %v689 = vld [vmem:[%s332 + $0x24] sm:$0x1]
      %v690 = vld [vmem:[%s332 + $0x28] sm:$0xf]
      %v691 = vld [vmem:[%s332 + $0x2c] sm:$0x1]
      %v692 = vld [vmem:[%s332 + $0x30] sm:$0xf]
      %v693 = vld [vmem:[%s332 + $0x34] sm:$0x1]
      %v694 = vld [vmem:[%s332 + $0x38] sm:$0xf]
      %v695 = vld [vmem:[%s332 + $0x3c] sm:$0x1]
      %vm696 = vsmask.f32 3328
      %vm697 = vsmask.f32 7440
      %vm698 = vmor %vm696, %vm697
      %v700 = vshrl.u32 %v680, 16
      %v702 = vrot.slane %v700, 4
      %v703 = vshll.u32 %v680, 16
      %v705 = vrot.slane %v703, 5
      %v706 = vor.u32 %v702, %v705
      %v707 = vrot.slane %v706, 4
      %v709 = vshll.u32 %v681, 16
      %v711 = vrot.slane %v709, 5
      %v712 = vsel %vm698, %v707, %v711
      %v714 = vshrl.u32 %v682, 16
      %v716 = vrot.slane %v714, 4
      %v717 = vshll.u32 %v682, 16
      %v719 = vrot.slane %v717, 5
      %v720 = vor.u32 %v716, %v719
      %v721 = vrot.slane %v720, 4
      %v723 = vshll.u32 %v683, 16
      %v725 = vrot.slane %v723, 5
      %v726 = vsel %vm698, %v721, %v725
      %v728 = vshrl.u32 %v684, 16
      %v730 = vrot.slane %v728, 4
      %v731 = vshll.u32 %v684, 16
      %v733 = vrot.slane %v731, 5
      %v734 = vor.u32 %v730, %v733
      %v735 = vrot.slane %v734, 4
      %v737 = vshll.u32 %v685, 16
      %v739 = vrot.slane %v737, 5
      %v740 = vsel %vm698, %v735, %v739
      %v742 = vshrl.u32 %v686, 16
      %v744 = vrot.slane %v742, 4
      %v745 = vshll.u32 %v686, 16
      %v747 = vrot.slane %v745, 5
      %v748 = vor.u32 %v744, %v747
      %v749 = vrot.slane %v748, 4
      %v751 = vshll.u32 %v687, 16
      %v753 = vrot.slane %v751, 5
      %v754 = vsel %vm698, %v749, %v753
      %v756 = vshrl.u32 %v688, 16
      %v758 = vrot.slane %v756, 4
      %v759 = vshll.u32 %v688, 16
      %v761 = vrot.slane %v759, 5
      %v762 = vor.u32 %v758, %v761
      %v763 = vrot.slane %v762, 4
      %v765 = vshll.u32 %v689, 16
      %v767 = vrot.slane %v765, 5
      %v768 = vsel %vm698, %v763, %v767
      %v770 = vshrl.u32 %v690, 16
      %v772 = vrot.slane %v770, 4
      %v773 = vshll.u32 %v690, 16
      %v775 = vrot.slane %v773, 5
      %v776 = vor.u32 %v772, %v775
      %v777 = vrot.slane %v776, 4
      %v779 = vshll.u32 %v691, 16
      %v781 = vrot.slane %v779, 5
      %v782 = vsel %vm698, %v777, %v781
      %v784 = vshrl.u32 %v692, 16
      %v786 = vrot.slane %v784, 4
      %v787 = vshll.u32 %v692, 16
      %v789 = vrot.slane %v787, 5
      %v790 = vor.u32 %v786, %v789
      %v791 = vrot.slane %v790, 4
      %v793 = vshll.u32 %v693, 16
      %v795 = vrot.slane %v793, 5
      %v796 = vsel %vm698, %v791, %v795
      %v798 = vshrl.u32 %v694, 16
      %v800 = vrot.slane %v798, 4
      %v801 = vshll.u32 %v694, 16
      %v803 = vrot.slane %v801, 5
      %v804 = vor.u32 %v800, %v803
      %v805 = vrot.slane %v804, 4
      %v807 = vshll.u32 %v695, 16
      %v809 = vrot.slane %v807, 5
      %v810 = vsel %vm698, %v805, %v809
      %v811 = vld [vmem:[%s1 + $0x80] sm:$0xf]
      %v812 = vld [vmem:[%s1 + $0x84] sm:$0xf]
      %v813 = vld [vmem:[%s1 + $0x88] sm:$0xf]
      %v814 = vld [vmem:[%s1 + $0x8c] sm:$0xf]
      %v815 = vld [vmem:[%s1 + $0x90] sm:$0xf]
      %v816 = vld [vmem:[%s1 + $0x94] sm:$0xf]
      %v817 = vld [vmem:[%s1 + $0x98] sm:$0xf]
      %v818 = vld [vmem:[%s1 + $0x9c] sm:$0xf]
      %v819 = vld [vmem:[%s1 + $0xa0] sm:$0xf]
      %v820 = vld [vmem:[%s1 + $0xa4] sm:$0xf]
      %v821 = vld [vmem:[%s1 + $0xa8] sm:$0xf]
      %v822 = vld [vmem:[%s1 + $0xac] sm:$0xf]
      %v823 = vld [vmem:[%s1 + $0xb0] sm:$0xf]
      %v824 = vld [vmem:[%s1 + $0xb4] sm:$0xf]
      %v825 = vld [vmem:[%s1 + $0xb8] sm:$0xf]
      %v826 = vld [vmem:[%s1 + $0xbc] sm:$0xf]
      %v827 = vunpack.c.l.b16 %v712
      %v828 = vunpack.c.l.b16 %v726
      %v829 = vunpack.c.l.b16 %v740
      %v830 = vunpack.c.l.b16 %v754
      %v831 = vunpack.c.l.b16 %v768
      %v832 = vunpack.c.l.b16 %v782
      %v833 = vunpack.c.l.b16 %v796
      %v834 = vunpack.c.l.b16 %v810
      %v835 = vpack.c.b16 %v828, %v827
      %v836 = vpack.c.b16 %v830, %v829
      %v837 = vpack.c.b16 %v832, %v831
      %v838 = vpack.c.b16 %v834, %v833
      %v859 = vunpack.c.l.b16 %v811
      %v860 = vunpack.c.l.b16 %v812
      %v861 = vunpack.c.l.b16 %v813
      %v862 = vunpack.c.l.b16 %v814
      %v863 = vunpack.c.l.b16 %v815
      %v864 = vunpack.c.l.b16 %v816
      %v865 = vunpack.c.l.b16 %v817
      %v866 = vunpack.c.l.b16 %v818
      %v867 = vunpack.c.l.b16 %v819
      %v868 = vunpack.c.l.b16 %v820
      %v869 = vunpack.c.l.b16 %v821
      %v870 = vunpack.c.l.b16 %v822
      %v871 = vunpack.c.l.b16 %v823
      %v872 = vunpack.c.l.b16 %v824
      %v873 = vunpack.c.l.b16 %v825
      %v874 = vunpack.c.l.b16 %v826
      %v875 = vpack.c.b16 %v860, %v859
      %v876 = vpack.c.b16 %v862, %v861
      %v877 = vpack.c.b16 %v864, %v863
      %v878 = vpack.c.b16 %v866, %v865
      %v879 = vpack.c.b16 %v868, %v867
      %v880 = vpack.c.b16 %v870, %v869
      %v881 = vpack.c.b16 %v872, %v871
      %v882 = vpack.c.b16 %v874, %v873
      %891 = vmatprep.subr.bf16.mxu0 0
      %892 = vmatpush1.bf16.msra.mxu0 %v882
      %893 = vmatprep.subr.bf16.mxu0 0
      %894 = vmatpush1.bf16.msra.mxu0 %v881
      %895 = vmatprep.subr.bf16.mxu0 0
      %896 = vmatpush1.bf16.msra.mxu0 %v880
      %897 = vmatprep.subr.bf16.mxu0 0
      %898 = vmatpush1.bf16.msra.mxu0 %v879
      %899 = vmatprep.subr.bf16.mxu0 0
      %900 = vmatpush1.bf16.msra.mxu0 %v878
      %901 = vmatprep.subr.bf16.mxu0 0
      %902 = vmatpush1.bf16.msra.mxu0 %v877
      %903 = vmatprep.subr.bf16.mxu0 0
      %904 = vmatpush1.bf16.msra.mxu0 %v876
      %905 = vmatprep.subr.bf16.mxu0 0
      %906 = vmatpush1.bf16.msra.mxu0 %v875
      %907 = vmatprep.subr.bf16.mxu0 0
      %908 = vmatpush2.bf16.msra.mxu0 0
      %909 = vmatprep.subr.bf16.mxu0 0
      %910 = vmatpush2.bf16.msra.mxu0 0
      %911 = vmatprep.subr.bf16.mxu0 0
      %912 = vmatpush2.bf16.msra.mxu0 0
      %913 = vmatprep.subr.bf16.mxu0 0
      %914 = vmatpush2.bf16.msra.mxu0 0
      %915 = vmatprep.subr.bf16.mxu0 0
      %916 = vmatpush2.bf16.msra.mxu0 0
      %917 = vmatprep.subr.bf16.mxu0 0
      %918 = vmatpush2.bf16.msra.mxu0 0
      %919 = vmatprep.subr.bf16.mxu0 0
      %920 = vmatpush2.bf16.msra.mxu0 0
      %921 = vmatprep.subr.bf16.mxu0 0
      %922 = vmatpush2.bf16.msra.mxu0 0
      %923 = vmatprep.mubr.bf16.mxu0 0
      %924 = vmatmul.mubr.bf16.gmra.mxu0 %v835
      %v925 = vpop.f32.mrf.mxu0
      %v926 = vadd.f32 0.0, %v925
      %v927 = vpop.f32.mrf.mxu0
      %v928 = vpop.f32.mrf.mxu0
      %v929 = vadd.f32 0.0, %v928
      %v930 = vpop.f32.mrf.mxu0
      %931 = vmatprep.mubr.bf16.mxu0 0
      %932 = vmatmul.mubr.bf16.gmra.mxu0 %v836
      %v933 = vpop.f32.mrf.mxu0
      %v934 = vadd.f32 0.0, %v933
      %v935 = vpop.f32.mrf.mxu0
      %v936 = vpop.f32.mrf.mxu0
      %v937 = vadd.f32 0.0, %v936
      %v938 = vpop.f32.mrf.mxu0
      %939 = vmatprep.mubr.bf16.mxu0 0
      %940 = vmatmul.mubr.bf16.gmra.mxu0 %v837
      %v941 = vpop.f32.mrf.mxu0
      %v942 = vadd.f32 0.0, %v941
      %v943 = vpop.f32.mrf.mxu0
      %v944 = vpop.f32.mrf.mxu0
      %v945 = vadd.f32 0.0, %v944
      %v946 = vpop.f32.mrf.mxu0
      %947 = vmatprep.mubr.bf16.mxu0 0
      %948 = vmatmul.mubr.bf16.gmra.mxu0 %v838
      %v949 = vpop.f32.mrf.mxu0
      %v950 = vadd.f32 0.0, %v949
      %v951 = vpop.f32.mrf.mxu0
      %v952 = vpop.f32.mrf.mxu0
      %v953 = vadd.f32 0.0, %v952
      %v954 = vpop.f32.mrf.mxu0
      %955 = vdwg.mxu0
      %v956 = vadd.f32 %v650, %v926
      %v957 = vadd.f32 %v653, %v929
      %v958 = vadd.f32 %v658, %v934
      %v959 = vadd.f32 %v661, %v937
      %v960 = vadd.f32 %v666, %v942
      %v961 = vadd.f32 %v669, %v945
      %v962 = vadd.f32 %v674, %v950
      %v963 = vadd.f32 %v677, %v953
      %s964 = scalar_lea.vmem %s332, 144
      %v965 = vld [vmem:[%s964] sm:$0xf]
      %v966 = vld [vmem:[%s964 + $0x8] sm:$0xf]
      %v967 = vld [vmem:[%s964 + $0x10] sm:$0xf]
      %v968 = vld [vmem:[%s964 + $0x18] sm:$0xf]
      %v969 = vld [vmem:[%s964 + $0x20] sm:$0xf]
      %v970 = vld [vmem:[%s964 + $0x28] sm:$0xf]
      %v971 = vld [vmem:[%s964 + $0x30] sm:$0xf]
      %v972 = vld [vmem:[%s964 + $0x38] sm:$0xf]
      %v973 = vld [vmem:[%s1 + $0xc0] sm:$0xf]
      %v974 = vld [vmem:[%s1 + $0xc4] sm:$0xf]
      %v975 = vld [vmem:[%s1 + $0xc8] sm:$0xf]
      %v976 = vld [vmem:[%s1 + $0xcc] sm:$0xf]
      %v977 = vld [vmem:[%s1 + $0xd0] sm:$0xf]
      %v978 = vld [vmem:[%s1 + $0xd4] sm:$0xf]
      %v979 = vld [vmem:[%s1 + $0xd8] sm:$0xf]
      %v980 = vld [vmem:[%s1 + $0xdc] sm:$0xf]
      %v981 = vld [vmem:[%s1 + $0xe0] sm:$0xf]
      %v982 = vld [vmem:[%s1 + $0xe4] sm:$0xf]
      %v983 = vld [vmem:[%s1 + $0xe8] sm:$0xf]
      %v984 = vld [vmem:[%s1 + $0xec] sm:$0xf]
      %v985 = vld [vmem:[%s1 + $0xf0] sm:$0xf]
      %v986 = vld [vmem:[%s1 + $0xf4] sm:$0xf]
      %v987 = vld [vmem:[%s1 + $0xf8] sm:$0xf]
      %v988 = vld [vmem:[%s1 + $0xfc] sm:$0xf]
      %v997 = vunpack.c.l.b16 %v965
      %v998 = vunpack.c.l.b16 %v966
      %v999 = vunpack.c.l.b16 %v967
      %v1000 = vunpack.c.l.b16 %v968
      %v1001 = vunpack.c.l.b16 %v969
      %v1002 = vunpack.c.l.b16 %v970
      %v1003 = vunpack.c.l.b16 %v971
      %v1004 = vunpack.c.l.b16 %v972
      %v1005 = vpack.c.b16 %v998, %v997
      %v1006 = vpack.c.b16 %v1000, %v999
      %v1007 = vpack.c.b16 %v1002, %v1001
      %v1008 = vpack.c.b16 %v1004, %v1003
      %v1029 = vunpack.c.l.b16 %v973
      %v1030 = vunpack.c.l.b16 %v974
      %v1031 = vunpack.c.l.b16 %v975
      %v1032 = vunpack.c.l.b16 %v976
      %v1033 = vunpack.c.l.b16 %v977
      %v1034 = vunpack.c.l.b16 %v978
      %v1035 = vunpack.c.l.b16 %v979
      %v1036 = vunpack.c.l.b16 %v980
      %v1037 = vunpack.c.l.b16 %v981
      %v1038 = vunpack.c.l.b16 %v982
      %v1039 = vunpack.c.l.b16 %v983
      %v1040 = vunpack.c.l.b16 %v984
      %v1041 = vunpack.c.l.b16 %v985
      %v1042 = vunpack.c.l.b16 %v986
      %v1043 = vunpack.c.l.b16 %v987
      %v1044 = vunpack.c.l.b16 %v988
      %v1045 = vpack.c.b16 %v1030, %v1029
      %v1046 = vpack.c.b16 %v1032, %v1031
      %v1047 = vpack.c.b16 %v1034, %v1033
      %v1048 = vpack.c.b16 %v1036, %v1035
      %v1049 = vpack.c.b16 %v1038, %v1037
      %v1050 = vpack.c.b16 %v1040, %v1039
      %v1051 = vpack.c.b16 %v1042, %v1041
      %v1052 = vpack.c.b16 %v1044, %v1043
      %1061 = vmatprep.subr.bf16.mxu0 0
      %1062 = vmatpush1.bf16.msra.mxu0 %v1052
      %1063 = vmatprep.subr.bf16.mxu0 0
      %1064 = vmatpush1.bf16.msra.mxu0 %v1051
      %1065 = vmatprep.subr.bf16.mxu0 0
      %1066 = vmatpush1.bf16.msra.mxu0 %v1050
      %1067 = vmatprep.subr.bf16.mxu0 0
      %1068 = vmatpush1.bf16.msra.mxu0 %v1049
      %1069 = vmatprep.subr.bf16.mxu0 0
      %1070 = vmatpush1.bf16.msra.mxu0 %v1048
      %1071 = vmatprep.subr.bf16.mxu0 0
      %1072 = vmatpush1.bf16.msra.mxu0 %v1047
      %1073 = vmatprep.subr.bf16.mxu0 0
      %1074 = vmatpush1.bf16.msra.mxu0 %v1046
      %1075 = vmatprep.subr.bf16.mxu0 0
      %1076 = vmatpush1.bf16.msra.mxu0 %v1045
      %1077 = vmatprep.subr.bf16.mxu0 0
      %1078 = vmatpush2.bf16.msra.mxu0 0
      %1079 = vmatprep.subr.bf16.mxu0 0
      %1080 = vmatpush2.bf16.msra.mxu0 0
      %1081 = vmatprep.subr.bf16.mxu0 0
      %1082 = vmatpush2.bf16.msra.mxu0 0
      %1083 = vmatprep.subr.bf16.mxu0 0
      %1084 = vmatpush2.bf16.msra.mxu0 0
      %1085 = vmatprep.subr.bf16.mxu0 0
      %1086 = vmatpush2.bf16.msra.mxu0 0
      %1087 = vmatprep.subr.bf16.mxu0 0
      %1088 = vmatpush2.bf16.msra.mxu0 0
      %1089 = vmatprep.subr.bf16.mxu0 0
      %1090 = vmatpush2.bf16.msra.mxu0 0
      %1091 = vmatprep.subr.bf16.mxu0 0
      %1092 = vmatpush2.bf16.msra.mxu0 0
      %1093 = vmatprep.mubr.bf16.mxu0 0
      %1094 = vmatmul.mubr.bf16.gmra.mxu0 %v1005
      %v1095 = vpop.f32.mrf.mxu0
      %v1096 = vadd.f32 0.0, %v1095
      %v1097 = vpop.f32.mrf.mxu0
      %v1098 = vpop.f32.mrf.mxu0
      %v1099 = vadd.f32 0.0, %v1098
      %v1100 = vpop.f32.mrf.mxu0
      %1101 = vmatprep.mubr.bf16.mxu0 0
      %1102 = vmatmul.mubr.bf16.gmra.mxu0 %v1006
      %v1103 = vpop.f32.mrf.mxu0
      %v1104 = vadd.f32 0.0, %v1103
      %v1105 = vpop.f32.mrf.mxu0
      %v1106 = vpop.f32.mrf.mxu0
      %v1107 = vadd.f32 0.0, %v1106
      %v1108 = vpop.f32.mrf.mxu0
      %1109 = vmatprep.mubr.bf16.mxu0 0
      %1110 = vmatmul.mubr.bf16.gmra.mxu0 %v1007
      %v1111 = vpop.f32.mrf.mxu0
      %v1112 = vadd.f32 0.0, %v1111
      %v1113 = vpop.f32.mrf.mxu0
      %v1114 = vpop.f32.mrf.mxu0
      %v1115 = vadd.f32 0.0, %v1114
      %v1116 = vpop.f32.mrf.mxu0
      %1117 = vmatprep.mubr.bf16.mxu0 0
      %1118 = vmatmul.mubr.bf16.gmra.mxu0 %v1008
      %v1119 = vpop.f32.mrf.mxu0
      %v1120 = vadd.f32 0.0, %v1119
      %v1121 = vpop.f32.mrf.mxu0
      %v1122 = vpop.f32.mrf.mxu0
      %v1123 = vadd.f32 0.0, %v1122
      %v1124 = vpop.f32.mrf.mxu0
      %1125 = vdwg.mxu0
      %v1126 = vadd.f32 %v956, %v1096
      %v1127 = vadd.f32 %v957, %v1099
      %v1128 = vadd.f32 %v958, %v1104
      %v1129 = vadd.f32 %v959, %v1107
      %v1130 = vadd.f32 %v960, %v1112
      %v1131 = vadd.f32 %v961, %v1115
      %v1132 = vadd.f32 %v962, %v1120
      %v1133 = vadd.f32 %v963, %v1123
      %s1134 = scalar_lea.vmem %s332, 216
      %v1135 = vld [vmem:[%s1134] sm:$0xf]
      %v1136 = vld [vmem:[%s1134 + $0x8] sm:$0xf]
      %v1137 = vld [vmem:[%s1134 + $0x10] sm:$0xf]
      %v1138 = vld [vmem:[%s1134 + $0x18] sm:$0xf]
      %v1139 = vld [vmem:[%s1134 + $0x20] sm:$0xf]
      %v1140 = vld [vmem:[%s1134 + $0x28] sm:$0xf]
      %v1141 = vld [vmem:[%s1134 + $0x30] sm:$0xf]
      %v1142 = vld [vmem:[%s1134 + $0x38] sm:$0xf]
      %v1143 = vld [vmem:[%s1 + $0x100] sm:$0xf]
      %v1144 = vld [vmem:[%s1 + $0x104] sm:$0xf]
      %v1145 = vld [vmem:[%s1 + $0x108] sm:$0xf]
      %v1146 = vld [vmem:[%s1 + $0x10c] sm:$0xf]
      %v1147 = vld [vmem:[%s1 + $0x110] sm:$0xf]
      %v1148 = vld [vmem:[%s1 + $0x114] sm:$0xf]
      %v1149 = vld [vmem:[%s1 + $0x118] sm:$0xf]
      %v1150 = vld [vmem:[%s1 + $0x11c] sm:$0xf]
      %v1151 = vld [vmem:[%s1 + $0x120] sm:$0xf]
      %v1152 = vld [vmem:[%s1 + $0x124] sm:$0xf]
      %v1153 = vld [vmem:[%s1 + $0x128] sm:$0xf]
      %v1154 = vld [vmem:[%s1 + $0x12c] sm:$0xf]
      %v1155 = vld [vmem:[%s1 + $0x130] sm:$0xf]
      %v1156 = vld [vmem:[%s1 + $0x134] sm:$0xf]
      %v1157 = vld [vmem:[%s1 + $0x138] sm:$0xf]
      %v1158 = vld [vmem:[%s1 + $0x13c] sm:$0xf]
      %v1167 = vunpack.c.l.b16 %v1135
      %v1168 = vunpack.c.l.b16 %v1136
      %v1169 = vunpack.c.l.b16 %v1137
      %v1170 = vunpack.c.l.b16 %v1138
      %v1171 = vunpack.c.l.b16 %v1139
      %v1172 = vunpack.c.l.b16 %v1140
      %v1173 = vunpack.c.l.b16 %v1141
      %v1174 = vunpack.c.l.b16 %v1142
      %v1175 = vpack.c.b16 %v1168, %v1167
      %v1176 = vpack.c.b16 %v1170, %v1169
      %v1177 = vpack.c.b16 %v1172, %v1171
      %v1178 = vpack.c.b16 %v1174, %v1173
      %v1199 = vunpack.c.l.b16 %v1143
      %v1200 = vunpack.c.l.b16 %v1144
      %v1201 = vunpack.c.l.b16 %v1145
      %v1202 = vunpack.c.l.b16 %v1146
      %v1203 = vunpack.c.l.b16 %v1147
      %v1204 = vunpack.c.l.b16 %v1148
      %v1205 = vunpack.c.l.b16 %v1149
      %v1206 = vunpack.c.l.b16 %v1150
      %v1207 = vunpack.c.l.b16 %v1151
      %v1208 = vunpack.c.l.b16 %v1152
      %v1209 = vunpack.c.l.b16 %v1153
      %v1210 = vunpack.c.l.b16 %v1154
      %v1211 = vunpack.c.l.b16 %v1155
      %v1212 = vunpack.c.l.b16 %v1156
      %v1213 = vunpack.c.l.b16 %v1157
      %v1214 = vunpack.c.l.b16 %v1158
      %v1215 = vpack.c.b16 %v1200, %v1199
      %v1216 = vpack.c.b16 %v1202, %v1201
      %v1217 = vpack.c.b16 %v1204, %v1203
      %v1218 = vpack.c.b16 %v1206, %v1205
      %v1219 = vpack.c.b16 %v1208, %v1207
      %v1220 = vpack.c.b16 %v1210, %v1209
      %v1221 = vpack.c.b16 %v1212, %v1211
      %v1222 = vpack.c.b16 %v1214, %v1213
      %1231 = vmatprep.subr.bf16.mxu0 0
      %1232 = vmatpush1.bf16.msra.mxu0 %v1222
      %1233 = vmatprep.subr.bf16.mxu0 0
      %1234 = vmatpush1.bf16.msra.mxu0 %v1221
      %1235 = vmatprep.subr.bf16.mxu0 0
      %1236 = vmatpush1.bf16.msra.mxu0 %v1220
      %1237 = vmatprep.subr.bf16.mxu0 0
      %1238 = vmatpush1.bf16.msra.mxu0 %v1219
      %1239 = vmatprep.subr.bf16.mxu0 0
      %1240 = vmatpush1.bf16.msra.mxu0 %v1218
      %1241 = vmatprep.subr.bf16.mxu0 0
      %1242 = vmatpush1.bf16.msra.mxu0 %v1217
      %1243 = vmatprep.subr.bf16.mxu0 0
      %1244 = vmatpush1.bf16.msra.mxu0 %v1216
      %1245 = vmatprep.subr.bf16.mxu0 0
      %1246 = vmatpush1.bf16.msra.mxu0 %v1215
      %1247 = vmatprep.subr.bf16.mxu0 0
      %1248 = vmatpush2.bf16.msra.mxu0 0
      %1249 = vmatprep.subr.bf16.mxu0 0
      %1250 = vmatpush2.bf16.msra.mxu0 0
      %1251 = vmatprep.subr.bf16.mxu0 0
      %1252 = vmatpush2.bf16.msra.mxu0 0
      %1253 = vmatprep.subr.bf16.mxu0 0
      %1254 = vmatpush2.bf16.msra.mxu0 0
      %1255 = vmatprep.subr.bf16.mxu0 0
      %1256 = vmatpush2.bf16.msra.mxu0 0
      %1257 = vmatprep.subr.bf16.mxu0 0
      %1258 = vmatpush2.bf16.msra.mxu0 0
      %1259 = vmatprep.subr.bf16.mxu0 0
      %1260 = vmatpush2.bf16.msra.mxu0 0
      %1261 = vmatprep.subr.bf16.mxu0 0
      %1262 = vmatpush2.bf16.msra.mxu0 0
      %1263 = vmatprep.mubr.bf16.mxu0 0
      %1264 = vmatmul.mubr.bf16.gmra.mxu0 %v1175
      %v1265 = vpop.f32.mrf.mxu0
      %v1266 = vadd.f32 0.0, %v1265
      %v1267 = vpop.f32.mrf.mxu0
      %v1268 = vpop.f32.mrf.mxu0
      %v1269 = vadd.f32 0.0, %v1268
      %v1270 = vpop.f32.mrf.mxu0
      %1271 = vmatprep.mubr.bf16.mxu0 0
      %1272 = vmatmul.mubr.bf16.gmra.mxu0 %v1176
      %v1273 = vpop.f32.mrf.mxu0
      %v1274 = vadd.f32 0.0, %v1273
      %v1275 = vpop.f32.mrf.mxu0
      %v1276 = vpop.f32.mrf.mxu0
      %v1277 = vadd.f32 0.0, %v1276
      %v1278 = vpop.f32.mrf.mxu0
      %1279 = vmatprep.mubr.bf16.mxu0 0
      %1280 = vmatmul.mubr.bf16.gmra.mxu0 %v1177
      %v1281 = vpop.f32.mrf.mxu0
      %v1282 = vadd.f32 0.0, %v1281
      %v1283 = vpop.f32.mrf.mxu0
      %v1284 = vpop.f32.mrf.mxu0
      %v1285 = vadd.f32 0.0, %v1284
      %v1286 = vpop.f32.mrf.mxu0
      %1287 = vmatprep.mubr.bf16.mxu0 0
      %1288 = vmatmul.mubr.bf16.gmra.mxu0 %v1178
      %v1289 = vpop.f32.mrf.mxu0
      %v1290 = vadd.f32 0.0, %v1289
      %v1291 = vpop.f32.mrf.mxu0
      %v1292 = vpop.f32.mrf.mxu0
      %v1293 = vadd.f32 0.0, %v1292
      %v1294 = vpop.f32.mrf.mxu0
      %1295 = vdwg.mxu0
      %v1296 = vadd.f32 %v1126, %v1266
      %v1297 = vadd.f32 %v1127, %v1269
      %v1298 = vadd.f32 %v1128, %v1274
      %v1299 = vadd.f32 %v1129, %v1277
      %v1300 = vadd.f32 %v1130, %v1282
      %v1301 = vadd.f32 %v1131, %v1285
      %v1302 = vadd.f32 %v1132, %v1290
      %v1303 = vadd.f32 %v1133, %v1293
      %v1304 = vld [vmem:[%s2] sm:$0xf]
      %v1305 = vld [vmem:[%s2 + $0x4] sm:$0xf]
      %v1306 = vld [vmem:[%s2 + $0x8] sm:$0xf]
      %v1307 = vld [vmem:[%s2 + $0xc] sm:$0xf]
      %v1308 = vld [vmem:[%s2 + $0x10] sm:$0xf]
      %v1309 = vld [vmem:[%s2 + $0x14] sm:$0xf]
      %v1310 = vld [vmem:[%s2 + $0x18] sm:$0xf]
      %v1311 = vld [vmem:[%s2 + $0x1c] sm:$0xf]
      %v1312 = vld [vmem:[%s2 + $0x20] sm:$0xf]
      %v1313 = vld [vmem:[%s2 + $0x24] sm:$0xf]
      %v1314 = vld [vmem:[%s2 + $0x28] sm:$0xf]
      %v1315 = vld [vmem:[%s2 + $0x2c] sm:$0xf]
      %v1316 = vld [vmem:[%s2 + $0x30] sm:$0xf]
      %v1317 = vld [vmem:[%s2 + $0x34] sm:$0xf]
      %v1318 = vld [vmem:[%s2 + $0x38] sm:$0xf]
      %v1319 = vld [vmem:[%s2 + $0x3c] sm:$0xf]
      %v1336 = vunpack.c.l.b16 %v1304
      %v1337 = vunpack.c.l.b16 %v1305
      %v1338 = vunpack.c.l.b16 %v1306
      %v1339 = vunpack.c.l.b16 %v1307
      %v1340 = vunpack.c.l.b16 %v1308
      %v1341 = vunpack.c.l.b16 %v1309
      %v1342 = vunpack.c.l.b16 %v1310
      %v1343 = vunpack.c.l.b16 %v1311
      %v1344 = vunpack.c.l.b16 %v1312
      %v1345 = vunpack.c.l.b16 %v1313
      %v1346 = vunpack.c.l.b16 %v1314
      %v1347 = vunpack.c.l.b16 %v1315
      %v1348 = vunpack.c.l.b16 %v1316
      %v1349 = vunpack.c.l.b16 %v1317
      %v1350 = vunpack.c.l.b16 %v1318
      %v1351 = vunpack.c.l.b16 %v1319
      %v1352 = vpack.c.b16 %v1337, %v1336
      %v1353 = vpack.c.b16 %v1339, %v1338
      %v1354 = vpack.c.b16 %v1341, %v1340
      %v1355 = vpack.c.b16 %v1343, %v1342
      %v1356 = vpack.c.b16 %v1345, %v1344
      %v1357 = vpack.c.b16 %v1347, %v1346
      %v1358 = vpack.c.b16 %v1349, %v1348
      %v1359 = vpack.c.b16 %v1351, %v1350
      %1368 = vmatprep.subr.bf16.mxu0 0
      %1369 = vmatpush1.bf16.msra.mxu0 %v1359
      %1370 = vmatprep.subr.bf16.mxu0 0
      %1371 = vmatpush1.bf16.msra.mxu0 %v1358
      %1372 = vmatprep.subr.bf16.mxu0 0
      %1373 = vmatpush1.bf16.msra.mxu0 %v1357
      %1374 = vmatprep.subr.bf16.mxu0 0
      %1375 = vmatpush1.bf16.msra.mxu0 %v1356
      %1376 = vmatprep.subr.bf16.mxu0 0
      %1377 = vmatpush1.bf16.msra.mxu0 %v1355
      %1378 = vmatprep.subr.bf16.mxu0 0
      %1379 = vmatpush1.bf16.msra.mxu0 %v1354
      %1380 = vmatprep.subr.bf16.mxu0 0
      %1381 = vmatpush1.bf16.msra.mxu0 %v1353
      %1382 = vmatprep.subr.bf16.mxu0 0
      %1383 = vmatpush1.bf16.msra.mxu0 %v1352
      %1384 = vmatprep.subr.bf16.mxu0 0
      %1385 = vmatpush2.bf16.msra.mxu0 0
      %1386 = vmatprep.subr.bf16.mxu0 0
      %1387 = vmatpush2.bf16.msra.mxu0 0
      %1388 = vmatprep.subr.bf16.mxu0 0
      %1389 = vmatpush2.bf16.msra.mxu0 0
      %1390 = vmatprep.subr.bf16.mxu0 0
      %1391 = vmatpush2.bf16.msra.mxu0 0
      %1392 = vmatprep.subr.bf16.mxu0 0
      %1393 = vmatpush2.bf16.msra.mxu0 0
      %1394 = vmatprep.subr.bf16.mxu0 0
      %1395 = vmatpush2.bf16.msra.mxu0 0
      %1396 = vmatprep.subr.bf16.mxu0 0
      %1397 = vmatpush2.bf16.msra.mxu0 0
      %1398 = vmatprep.subr.bf16.mxu0 0
      %1399 = vmatpush2.bf16.msra.mxu0 0
      %1400 = vmatprep.mubr.bf16.mxu0 0
      %1401 = vmatmul.mubr.bf16.gmra.mxu0 %v1175
      %v1402 = vpop.f32.mrf.mxu0
      %v1403 = vadd.f32 0.0, %v1402
      %v1404 = vpop.f32.mrf.mxu0
      %v1405 = vpop.f32.mrf.mxu0
      %v1406 = vadd.f32 0.0, %v1405
      %v1407 = vpop.f32.mrf.mxu0
      %1408 = vmatprep.mubr.bf16.mxu0 0
      %1409 = vmatmul.mubr.bf16.gmra.mxu0 %v1176
      %v1410 = vpop.f32.mrf.mxu0
      %v1411 = vadd.f32 0.0, %v1410
      %v1412 = vpop.f32.mrf.mxu0
      %v1413 = vpop.f32.mrf.mxu0
      %v1414 = vadd.f32 0.0, %v1413
      %v1415 = vpop.f32.mrf.mxu0
      %1416 = vmatprep.mubr.bf16.mxu0 0
      %1417 = vmatmul.mubr.bf16.gmra.mxu0 %v1177
      %v1418 = vpop.f32.mrf.mxu0
      %v1419 = vadd.f32 0.0, %v1418
      %v1420 = vpop.f32.mrf.mxu0
      %v1421 = vpop.f32.mrf.mxu0
      %v1422 = vadd.f32 0.0, %v1421
      %v1423 = vpop.f32.mrf.mxu0
      %1424 = vmatprep.mubr.bf16.mxu0 0
      %1425 = vmatmul.mubr.bf16.gmra.mxu0 %v1178
      %v1426 = vpop.f32.mrf.mxu0
      %v1427 = vadd.f32 0.0, %v1426
      %v1428 = vpop.f32.mrf.mxu0
      %v1429 = vpop.f32.mrf.mxu0
      %v1430 = vadd.f32 0.0, %v1429
      %v1431 = vpop.f32.mrf.mxu0
      %1432 = vdwg.mxu0
      %v1433 = vld [vmem:[%s964] sm:$0xf]
      %v1434 = vld [vmem:[%s964 + $0x4] sm:$0x1]
      %v1435 = vld [vmem:[%s964 + $0x8] sm:$0xf]
      %v1436 = vld [vmem:[%s964 + $0xc] sm:$0x1]
      %v1437 = vld [vmem:[%s964 + $0x10] sm:$0xf]
      %v1438 = vld [vmem:[%s964 + $0x14] sm:$0x1]
      %v1439 = vld [vmem:[%s964 + $0x18] sm:$0xf]
      %v1440 = vld [vmem:[%s964 + $0x1c] sm:$0x1]
      %v1441 = vld [vmem:[%s964 + $0x20] sm:$0xf]
      %v1442 = vld [vmem:[%s964 + $0x24] sm:$0x1]
      %v1443 = vld [vmem:[%s964 + $0x28] sm:$0xf]
      %v1444 = vld [vmem:[%s964 + $0x2c] sm:$0x1]
      %v1445 = vld [vmem:[%s964 + $0x30] sm:$0xf]
      %v1446 = vld [vmem:[%s964 + $0x34] sm:$0x1]
      %v1447 = vld [vmem:[%s964 + $0x38] sm:$0xf]
      %v1448 = vld [vmem:[%s964 + $0x3c] sm:$0x1]
      %v1450 = vshrl.u32 %v1433, 16
      %v1452 = vrot.slane %v1450, 4
      %v1453 = vshll.u32 %v1433, 16
      %v1455 = vrot.slane %v1453, 5
      %v1456 = vor.u32 %v1452, %v1455
      %v1457 = vrot.slane %v1456, 4
      %v1459 = vshll.u32 %v1434, 16
      %v1461 = vrot.slane %v1459, 5
      %v1462 = vsel %vm698, %v1457, %v1461
      %v1464 = vshrl.u32 %v1435, 16
      %v1466 = vrot.slane %v1464, 4
      %v1467 = vshll.u32 %v1435, 16
      %v1469 = vrot.slane %v1467, 5
      %v1470 = vor.u32 %v1466, %v1469
      %v1471 = vrot.slane %v1470, 4
      %v1473 = vshll.u32 %v1436, 16
      %v1475 = vrot.slane %v1473, 5
      %v1476 = vsel %vm698, %v1471, %v1475
      %v1478 = vshrl.u32 %v1437, 16
      %v1480 = vrot.slane %v1478, 4
      %v1481 = vshll.u32 %v1437, 16
      %v1483 = vrot.slane %v1481, 5
      %v1484 = vor.u32 %v1480, %v1483
      %v1485 = vrot.slane %v1484, 4
      %v1487 = vshll.u32 %v1438, 16
      %v1489 = vrot.slane %v1487, 5
      %v1490 = vsel %vm698, %v1485, %v1489
      %v1492 = vshrl.u32 %v1439, 16
      %v1494 = vrot.slane %v1492, 4
      %v1495 = vshll.u32 %v1439, 16
      %v1497 = vrot.slane %v1495, 5
      %v1498 = vor.u32 %v1494, %v1497
      %v1499 = vrot.slane %v1498, 4
      %v1501 = vshll.u32 %v1440, 16
      %v1503 = vrot.slane %v1501, 5
      %v1504 = vsel %vm698, %v1499, %v1503
      %v1506 = vshrl.u32 %v1441, 16
      %v1508 = vrot.slane %v1506, 4
      %v1509 = vshll.u32 %v1441, 16
      %v1511 = vrot.slane %v1509, 5
      %v1512 = vor.u32 %v1508, %v1511
      %v1513 = vrot.slane %v1512, 4
      %v1515 = vshll.u32 %v1442, 16
      %v1517 = vrot.slane %v1515, 5
      %v1518 = vsel %vm698, %v1513, %v1517
      %v1520 = vshrl.u32 %v1443, 16
      %v1522 = vrot.slane %v1520, 4
      %v1523 = vshll.u32 %v1443, 16
      %v1525 = vrot.slane %v1523, 5
      %v1526 = vor.u32 %v1522, %v1525
      %v1527 = vrot.slane %v1526, 4
      %v1529 = vshll.u32 %v1444, 16
      %v1531 = vrot.slane %v1529, 5
      %v1532 = vsel %vm698, %v1527, %v1531
      %v1534 = vshrl.u32 %v1445, 16
      %v1536 = vrot.slane %v1534, 4
      %v1537 = vshll.u32 %v1445, 16
      %v1539 = vrot.slane %v1537, 5
      %v1540 = vor.u32 %v1536, %v1539
      %v1541 = vrot.slane %v1540, 4
      %v1543 = vshll.u32 %v1446, 16
      %v1545 = vrot.slane %v1543, 5
      %v1546 = vsel %vm698, %v1541, %v1545
      %v1548 = vshrl.u32 %v1447, 16
      %v1550 = vrot.slane %v1548, 4
      %v1551 = vshll.u32 %v1447, 16
      %v1553 = vrot.slane %v1551, 5
      %v1554 = vor.u32 %v1550, %v1553
      %v1555 = vrot.slane %v1554, 4
      %v1557 = vshll.u32 %v1448, 16
      %v1559 = vrot.slane %v1557, 5
      %v1560 = vsel %vm698, %v1555, %v1559
      %v1561 = vld [vmem:[%s1 + $0x140] sm:$0xf]
      %v1562 = vld [vmem:[%s1 + $0x144] sm:$0xf]
      %v1563 = vld [vmem:[%s1 + $0x148] sm:$0xf]
      %v1564 = vld [vmem:[%s1 + $0x14c] sm:$0xf]
      %v1565 = vld [vmem:[%s1 + $0x150] sm:$0xf]
      %v1566 = vld [vmem:[%s1 + $0x154] sm:$0xf]
      %v1567 = vld [vmem:[%s1 + $0x158] sm:$0xf]
      %v1568 = vld [vmem:[%s1 + $0x15c] sm:$0xf]
      %v1569 = vld [vmem:[%s1 + $0x160] sm:$0xf]
      %v1570 = vld [vmem:[%s1 + $0x164] sm:$0xf]
      %v1571 = vld [vmem:[%s1 + $0x168] sm:$0xf]
      %v1572 = vld [vmem:[%s1 + $0x16c] sm:$0xf]
      %v1573 = vld [vmem:[%s1 + $0x170] sm:$0xf]
      %v1574 = vld [vmem:[%s1 + $0x174] sm:$0xf]
      %v1575 = vld [vmem:[%s1 + $0x178] sm:$0xf]
      %v1576 = vld [vmem:[%s1 + $0x17c] sm:$0xf]
      %v1577 = vunpack.c.l.b16 %v1462
      %v1578 = vunpack.c.l.b16 %v1476
      %v1579 = vunpack.c.l.b16 %v1490
      %v1580 = vunpack.c.l.b16 %v1504
      %v1581 = vunpack.c.l.b16 %v1518
      %v1582 = vunpack.c.l.b16 %v1532
      %v1583 = vunpack.c.l.b16 %v1546
      %v1584 = vunpack.c.l.b16 %v1560
      %v1585 = vpack.c.b16 %v1578, %v1577
      %v1586 = vpack.c.b16 %v1580, %v1579
      %v1587 = vpack.c.b16 %v1582, %v1581
      %v1588 = vpack.c.b16 %v1584, %v1583
      %v1609 = vunpack.c.l.b16 %v1561
      %v1610 = vunpack.c.l.b16 %v1562
      %v1611 = vunpack.c.l.b16 %v1563
      %v1612 = vunpack.c.l.b16 %v1564
      %v1613 = vunpack.c.l.b16 %v1565
      %v1614 = vunpack.c.l.b16 %v1566
      %v1615 = vunpack.c.l.b16 %v1567
      %v1616 = vunpack.c.l.b16 %v1568
      %v1617 = vunpack.c.l.b16 %v1569
      %v1618 = vunpack.c.l.b16 %v1570
      %v1619 = vunpack.c.l.b16 %v1571
      %v1620 = vunpack.c.l.b16 %v1572
      %v1621 = vunpack.c.l.b16 %v1573
      %v1622 = vunpack.c.l.b16 %v1574
      %v1623 = vunpack.c.l.b16 %v1575
      %v1624 = vunpack.c.l.b16 %v1576
      %v1625 = vpack.c.b16 %v1610, %v1609
      %v1626 = vpack.c.b16 %v1612, %v1611
      %v1627 = vpack.c.b16 %v1614, %v1613
      %v1628 = vpack.c.b16 %v1616, %v1615
      %v1629 = vpack.c.b16 %v1618, %v1617
      %v1630 = vpack.c.b16 %v1620, %v1619
      %v1631 = vpack.c.b16 %v1622, %v1621
      %v1632 = vpack.c.b16 %v1624, %v1623
      %1641 = vmatprep.subr.bf16.mxu0 0
      %1642 = vmatpush1.bf16.msra.mxu0 %v1632
      %1643 = vmatprep.subr.bf16.mxu0 0
      %1644 = vmatpush1.bf16.msra.mxu0 %v1631
      %1645 = vmatprep.subr.bf16.mxu0 0
      %1646 = vmatpush1.bf16.msra.mxu0 %v1630
      %1647 = vmatprep.subr.bf16.mxu0 0
      %1648 = vmatpush1.bf16.msra.mxu0 %v1629
      %1649 = vmatprep.subr.bf16.mxu0 0
      %1650 = vmatpush1.bf16.msra.mxu0 %v1628
      %1651 = vmatprep.subr.bf16.mxu0 0
      %1652 = vmatpush1.bf16.msra.mxu0 %v1627
      %1653 = vmatprep.subr.bf16.mxu0 0
      %1654 = vmatpush1.bf16.msra.mxu0 %v1626
      %1655 = vmatprep.subr.bf16.mxu0 0
      %1656 = vmatpush1.bf16.msra.mxu0 %v1625
      %1657 = vmatprep.subr.bf16.mxu0 0
      %1658 = vmatpush2.bf16.msra.mxu0 0
      %1659 = vmatprep.subr.bf16.mxu0 0
      %1660 = vmatpush2.bf16.msra.mxu0 0
      %1661 = vmatprep.subr.bf16.mxu0 0
      %1662 = vmatpush2.bf16.msra.mxu0 0
      %1663 = vmatprep.subr.bf16.mxu0 0
      %1664 = vmatpush2.bf16.msra.mxu0 0
      %1665 = vmatprep.subr.bf16.mxu0 0
      %1666 = vmatpush2.bf16.msra.mxu0 0
      %1667 = vmatprep.subr.bf16.mxu0 0
      %1668 = vmatpush2.bf16.msra.mxu0 0
      %1669 = vmatprep.subr.bf16.mxu0 0
      %1670 = vmatpush2.bf16.msra.mxu0 0
      %1671 = vmatprep.subr.bf16.mxu0 0
      %1672 = vmatpush2.bf16.msra.mxu0 0
      %1673 = vmatprep.mubr.bf16.mxu0 0
      %1674 = vmatmul.mubr.bf16.gmra.mxu0 %v1585
      %v1675 = vpop.f32.mrf.mxu0
      %v1676 = vadd.f32 0.0, %v1675
      %v1677 = vpop.f32.mrf.mxu0
      %v1678 = vpop.f32.mrf.mxu0
      %v1679 = vadd.f32 0.0, %v1678
      %v1680 = vpop.f32.mrf.mxu0
      %1681 = vmatprep.mubr.bf16.mxu0 0
      %1682 = vmatmul.mubr.bf16.gmra.mxu0 %v1586
      %v1683 = vpop.f32.mrf.mxu0
      %v1684 = vadd.f32 0.0, %v1683
      %v1685 = vpop.f32.mrf.mxu0
      %v1686 = vpop.f32.mrf.mxu0
      %v1687 = vadd.f32 0.0, %v1686
      %v1688 = vpop.f32.mrf.mxu0
      %1689 = vmatprep.mubr.bf16.mxu0 0
      %1690 = vmatmul.mubr.bf16.gmra.mxu0 %v1587
      %v1691 = vpop.f32.mrf.mxu0
      %v1692 = vadd.f32 0.0, %v1691
      %v1693 = vpop.f32.mrf.mxu0
      %v1694 = vpop.f32.mrf.mxu0
      %v1695 = vadd.f32 0.0, %v1694
      %v1696 = vpop.f32.mrf.mxu0
      %1697 = vmatprep.mubr.bf16.mxu0 0
      %1698 = vmatmul.mubr.bf16.gmra.mxu0 %v1588
      %v1699 = vpop.f32.mrf.mxu0
      %v1700 = vadd.f32 0.0, %v1699
      %v1701 = vpop.f32.mrf.mxu0
      %v1702 = vpop.f32.mrf.mxu0
      %v1703 = vadd.f32 0.0, %v1702
      %v1704 = vpop.f32.mrf.mxu0
      %1705 = vdwg.mxu0
      %v1706 = vadd.f32 %v1296, %v1676
      %v1707 = vadd.f32 %v1297, %v1679
      %v1708 = vadd.f32 %v1298, %v1684
      %v1709 = vadd.f32 %v1299, %v1687
      %v1710 = vadd.f32 %v1300, %v1692
      %v1711 = vadd.f32 %v1301, %v1695
      %v1712 = vadd.f32 %v1302, %v1700
      %v1713 = vadd.f32 %v1303, %v1703
      %s1714 = scalar_lea.vmem %s332, 8
      %v1715 = vld [vmem:[%s1714] sm:$0xf]
      %v1716 = vld [vmem:[%s1714 + $0x8] sm:$0xf]
      %v1717 = vld [vmem:[%s1714 + $0x10] sm:$0xf]
      %v1718 = vld [vmem:[%s1714 + $0x18] sm:$0xf]
      %v1719 = vld [vmem:[%s1714 + $0x20] sm:$0xf]
      %v1720 = vld [vmem:[%s1714 + $0x28] sm:$0xf]
      %v1721 = vld [vmem:[%s1714 + $0x30] sm:$0xf]
      %v1722 = vld [vmem:[%s1714 + $0x38] sm:$0xf]
      %v1723 = vld [vmem:[%s1 + $0x180] sm:$0xf]
      %v1724 = vld [vmem:[%s1 + $0x184] sm:$0xf]
      %v1725 = vld [vmem:[%s1 + $0x188] sm:$0xf]
      %v1726 = vld [vmem:[%s1 + $0x18c] sm:$0xf]
      %v1727 = vld [vmem:[%s1 + $0x190] sm:$0xf]
      %v1728 = vld [vmem:[%s1 + $0x194] sm:$0xf]
      %v1729 = vld [vmem:[%s1 + $0x198] sm:$0xf]
      %v1730 = vld [vmem:[%s1 + $0x19c] sm:$0xf]
      %v1731 = vld [vmem:[%s1 + $0x1a0] sm:$0xf]
      %v1732 = vld [vmem:[%s1 + $0x1a4] sm:$0xf]
      %v1733 = vld [vmem:[%s1 + $0x1a8] sm:$0xf]
      %v1734 = vld [vmem:[%s1 + $0x1ac] sm:$0xf]
      %v1735 = vld [vmem:[%s1 + $0x1b0] sm:$0xf]
      %v1736 = vld [vmem:[%s1 + $0x1b4] sm:$0xf]
      %v1737 = vld [vmem:[%s1 + $0x1b8] sm:$0xf]
      %v1738 = vld [vmem:[%s1 + $0x1bc] sm:$0xf]
      %v1747 = vunpack.c.l.b16 %v1715
      %v1748 = vunpack.c.l.b16 %v1716
      %v1749 = vunpack.c.l.b16 %v1717
      %v1750 = vunpack.c.l.b16 %v1718
      %v1751 = vunpack.c.l.b16 %v1719
      %v1752 = vunpack.c.l.b16 %v1720
      %v1753 = vunpack.c.l.b16 %v1721
      %v1754 = vunpack.c.l.b16 %v1722
      %v1755 = vpack.c.b16 %v1748, %v1747
      %v1756 = vpack.c.b16 %v1750, %v1749
      %v1757 = vpack.c.b16 %v1752, %v1751
      %v1758 = vpack.c.b16 %v1754, %v1753
      %v1779 = vunpack.c.l.b16 %v1723
      %v1780 = vunpack.c.l.b16 %v1724
      %v1781 = vunpack.c.l.b16 %v1725
      %v1782 = vunpack.c.l.b16 %v1726
      %v1783 = vunpack.c.l.b16 %v1727
      %v1784 = vunpack.c.l.b16 %v1728
      %v1785 = vunpack.c.l.b16 %v1729
      %v1786 = vunpack.c.l.b16 %v1730
      %v1787 = vunpack.c.l.b16 %v1731
      %v1788 = vunpack.c.l.b16 %v1732
      %v1789 = vunpack.c.l.b16 %v1733
      %v1790 = vunpack.c.l.b16 %v1734
      %v1791 = vunpack.c.l.b16 %v1735
      %v1792 = vunpack.c.l.b16 %v1736
      %v1793 = vunpack.c.l.b16 %v1737
      %v1794 = vunpack.c.l.b16 %v1738
      %v1795 = vpack.c.b16 %v1780, %v1779
      %v1796 = vpack.c.b16 %v1782, %v1781
      %v1797 = vpack.c.b16 %v1784, %v1783
      %v1798 = vpack.c.b16 %v1786, %v1785
      %v1799 = vpack.c.b16 %v1788, %v1787
      %v1800 = vpack.c.b16 %v1790, %v1789
      %v1801 = vpack.c.b16 %v1792, %v1791
      %v1802 = vpack.c.b16 %v1794, %v1793
      %1811 = vmatprep.subr.bf16.mxu0 0
      %1812 = vmatpush1.bf16.msra.mxu0 %v1802
      %1813 = vmatprep.subr.bf16.mxu0 0
      %1814 = vmatpush1.bf16.msra.mxu0 %v1801
      %1815 = vmatprep.subr.bf16.mxu0 0
      %1816 = vmatpush1.bf16.msra.mxu0 %v1800
      %1817 = vmatprep.subr.bf16.mxu0 0
      %1818 = vmatpush1.bf16.msra.mxu0 %v1799
      %1819 = vmatprep.subr.bf16.mxu0 0
      %1820 = vmatpush1.bf16.msra.mxu0 %v1798
      %1821 = vmatprep.subr.bf16.mxu0 0
      %1822 = vmatpush1.bf16.msra.mxu0 %v1797
      %1823 = vmatprep.subr.bf16.mxu0 0
      %1824 = vmatpush1.bf16.msra.mxu0 %v1796
      %1825 = vmatprep.subr.bf16.mxu0 0
      %1826 = vmatpush1.bf16.msra.mxu0 %v1795
      %1827 = vmatprep.subr.bf16.mxu0 0
      %1828 = vmatpush2.bf16.msra.mxu0 0
      %1829 = vmatprep.subr.bf16.mxu0 0
      %1830 = vmatpush2.bf16.msra.mxu0 0
      %1831 = vmatprep.subr.bf16.mxu0 0
      %1832 = vmatpush2.bf16.msra.mxu0 0
      %1833 = vmatprep.subr.bf16.mxu0 0
      %1834 = vmatpush2.bf16.msra.mxu0 0
      %1835 = vmatprep.subr.bf16.mxu0 0
      %1836 = vmatpush2.bf16.msra.mxu0 0
      %1837 = vmatprep.subr.bf16.mxu0 0
      %1838 = vmatpush2.bf16.msra.mxu0 0
      %1839 = vmatprep.subr.bf16.mxu0 0
      %1840 = vmatpush2.bf16.msra.mxu0 0
      %1841 = vmatprep.subr.bf16.mxu0 0
      %1842 = vmatpush2.bf16.msra.mxu0 0
      %1843 = vmatprep.mubr.bf16.mxu0 0
      %1844 = vmatmul.mubr.bf16.gmra.mxu0 %v1755
      %v1845 = vpop.f32.mrf.mxu0
      %v1846 = vadd.f32 0.0, %v1845
      %v1847 = vpop.f32.mrf.mxu0
      %v1848 = vpop.f32.mrf.mxu0
      %v1849 = vadd.f32 0.0, %v1848
      %v1850 = vpop.f32.mrf.mxu0
      %1851 = vmatprep.mubr.bf16.mxu0 0
      %1852 = vmatmul.mubr.bf16.gmra.mxu0 %v1756
      %v1853 = vpop.f32.mrf.mxu0
      %v1854 = vadd.f32 0.0, %v1853
      %v1855 = vpop.f32.mrf.mxu0
      %v1856 = vpop.f32.mrf.mxu0
      %v1857 = vadd.f32 0.0, %v1856
      %v1858 = vpop.f32.mrf.mxu0
      %1859 = vmatprep.mubr.bf16.mxu0 0
      %1860 = vmatmul.mubr.bf16.gmra.mxu0 %v1757
      %v1861 = vpop.f32.mrf.mxu0
      %v1862 = vadd.f32 0.0, %v1861
      %v1863 = vpop.f32.mrf.mxu0
      %v1864 = vpop.f32.mrf.mxu0
      %v1865 = vadd.f32 0.0, %v1864
      %v1866 = vpop.f32.mrf.mxu0
      %1867 = vmatprep.mubr.bf16.mxu0 0
      %1868 = vmatmul.mubr.bf16.gmra.mxu0 %v1758
      %v1869 = vpop.f32.mrf.mxu0
      %v1870 = vadd.f32 0.0, %v1869
      %v1871 = vpop.f32.mrf.mxu0
      %v1872 = vpop.f32.mrf.mxu0
      %v1873 = vadd.f32 0.0, %v1872
      %v1874 = vpop.f32.mrf.mxu0
      %1875 = vdwg.mxu0
      %v1876 = vadd.f32 %v1706, %v1846
      %v1877 = vadd.f32 %v1707, %v1849
      %v1878 = vadd.f32 %v1708, %v1854
      %v1879 = vadd.f32 %v1709, %v1857
      %v1880 = vadd.f32 %v1710, %v1862
      %v1881 = vadd.f32 %v1711, %v1865
      %v1882 = vadd.f32 %v1712, %v1870
      %v1883 = vadd.f32 %v1713, %v1873
      %s1884 = scalar_lea.vmem %s332, 80
      %v1885 = vld [vmem:[%s1884] sm:$0xf]
      %v1886 = vld [vmem:[%s1884 + $0x8] sm:$0xf]
      %v1887 = vld [vmem:[%s1884 + $0x10] sm:$0xf]
      %v1888 = vld [vmem:[%s1884 + $0x18] sm:$0xf]
      %v1889 = vld [vmem:[%s1884 + $0x20] sm:$0xf]
      %v1890 = vld [vmem:[%s1884 + $0x28] sm:$0xf]
      %v1891 = vld [vmem:[%s1884 + $0x30] sm:$0xf]
      %v1892 = vld [vmem:[%s1884 + $0x38] sm:$0xf]
      %v1893 = vld [vmem:[%s1 + $0x1c0] sm:$0xf]
      %v1894 = vld [vmem:[%s1 + $0x1c4] sm:$0xf]
      %v1895 = vld [vmem:[%s1 + $0x1c8] sm:$0xf]
      %v1896 = vld [vmem:[%s1 + $0x1cc] sm:$0xf]
      %v1897 = vld [vmem:[%s1 + $0x1d0] sm:$0xf]
      %v1898 = vld [vmem:[%s1 + $0x1d4] sm:$0xf]
      %v1899 = vld [vmem:[%s1 + $0x1d8] sm:$0xf]
      %v1900 = vld [vmem:[%s1 + $0x1dc] sm:$0xf]
      %v1901 = vld [vmem:[%s1 + $0x1e0] sm:$0xf]
      %v1902 = vld [vmem:[%s1 + $0x1e4] sm:$0xf]
      %v1903 = vld [vmem:[%s1 + $0x1e8] sm:$0xf]
      %v1904 = vld [vmem:[%s1 + $0x1ec] sm:$0xf]
      %v1905 = vld [vmem:[%s1 + $0x1f0] sm:$0xf]
      %v1906 = vld [vmem:[%s1 + $0x1f4] sm:$0xf]
      %v1907 = vld [vmem:[%s1 + $0x1f8] sm:$0xf]
      %v1908 = vld [vmem:[%s1 + $0x1fc] sm:$0xf]
      %v1917 = vunpack.c.l.b16 %v1885
      %v1918 = vunpack.c.l.b16 %v1886
      %v1919 = vunpack.c.l.b16 %v1887
      %v1920 = vunpack.c.l.b16 %v1888
      %v1921 = vunpack.c.l.b16 %v1889
      %v1922 = vunpack.c.l.b16 %v1890
      %v1923 = vunpack.c.l.b16 %v1891
      %v1924 = vunpack.c.l.b16 %v1892
      %v1925 = vpack.c.b16 %v1918, %v1917
      %v1926 = vpack.c.b16 %v1920, %v1919
      %v1927 = vpack.c.b16 %v1922, %v1921
      %v1928 = vpack.c.b16 %v1924, %v1923
      %v1949 = vunpack.c.l.b16 %v1893
      %v1950 = vunpack.c.l.b16 %v1894
      %v1951 = vunpack.c.l.b16 %v1895
      %v1952 = vunpack.c.l.b16 %v1896
      %v1953 = vunpack.c.l.b16 %v1897
      %v1954 = vunpack.c.l.b16 %v1898
      %v1955 = vunpack.c.l.b16 %v1899
      %v1956 = vunpack.c.l.b16 %v1900
      %v1957 = vunpack.c.l.b16 %v1901
      %v1958 = vunpack.c.l.b16 %v1902
      %v1959 = vunpack.c.l.b16 %v1903
      %v1960 = vunpack.c.l.b16 %v1904
      %v1961 = vunpack.c.l.b16 %v1905
      %v1962 = vunpack.c.l.b16 %v1906
      %v1963 = vunpack.c.l.b16 %v1907
      %v1964 = vunpack.c.l.b16 %v1908
      %v1965 = vpack.c.b16 %v1950, %v1949
      %v1966 = vpack.c.b16 %v1952, %v1951
      %v1967 = vpack.c.b16 %v1954, %v1953
      %v1968 = vpack.c.b16 %v1956, %v1955
      %v1969 = vpack.c.b16 %v1958, %v1957
      %v1970 = vpack.c.b16 %v1960, %v1959
      %v1971 = vpack.c.b16 %v1962, %v1961
      %v1972 = vpack.c.b16 %v1964, %v1963
      %1981 = vmatprep.subr.bf16.mxu0 0
      %1982 = vmatpush1.bf16.msra.mxu0 %v1972
      %1983 = vmatprep.subr.bf16.mxu0 0
      %1984 = vmatpush1.bf16.msra.mxu0 %v1971
      %1985 = vmatprep.subr.bf16.mxu0 0
      %1986 = vmatpush1.bf16.msra.mxu0 %v1970
      %1987 = vmatprep.subr.bf16.mxu0 0
      %1988 = vmatpush1.bf16.msra.mxu0 %v1969
      %1989 = vmatprep.subr.bf16.mxu0 0
      %1990 = vmatpush1.bf16.msra.mxu0 %v1968
      %1991 = vmatprep.subr.bf16.mxu0 0
      %1992 = vmatpush1.bf16.msra.mxu0 %v1967
      %1993 = vmatprep.subr.bf16.mxu0 0
      %1994 = vmatpush1.bf16.msra.mxu0 %v1966
      %1995 = vmatprep.subr.bf16.mxu0 0
      %1996 = vmatpush1.bf16.msra.mxu0 %v1965
      %1997 = vmatprep.subr.bf16.mxu0 0
      %1998 = vmatpush2.bf16.msra.mxu0 0
      %1999 = vmatprep.subr.bf16.mxu0 0
      %2000 = vmatpush2.bf16.msra.mxu0 0
      %2001 = vmatprep.subr.bf16.mxu0 0
      %2002 = vmatpush2.bf16.msra.mxu0 0
      %2003 = vmatprep.subr.bf16.mxu0 0
      %2004 = vmatpush2.bf16.msra.mxu0 0
      %2005 = vmatprep.subr.bf16.mxu0 0
      %2006 = vmatpush2.bf16.msra.mxu0 0
      %2007 = vmatprep.subr.bf16.mxu0 0
      %2008 = vmatpush2.bf16.msra.mxu0 0
      %2009 = vmatprep.subr.bf16.mxu0 0
      %2010 = vmatpush2.bf16.msra.mxu0 0
      %2011 = vmatprep.subr.bf16.mxu0 0
      %2012 = vmatpush2.bf16.msra.mxu0 0
      %2013 = vmatprep.mubr.bf16.mxu0 0
      %2014 = vmatmul.mubr.bf16.gmra.mxu0 %v1925
      %v2015 = vpop.f32.mrf.mxu0
      %v2016 = vadd.f32 0.0, %v2015
      %v2017 = vpop.f32.mrf.mxu0
      %v2018 = vpop.f32.mrf.mxu0
      %v2019 = vadd.f32 0.0, %v2018
      %v2020 = vpop.f32.mrf.mxu0
      %2021 = vmatprep.mubr.bf16.mxu0 0
      %2022 = vmatmul.mubr.bf16.gmra.mxu0 %v1926
      %v2023 = vpop.f32.mrf.mxu0
      %v2024 = vadd.f32 0.0, %v2023
      %v2025 = vpop.f32.mrf.mxu0
      %v2026 = vpop.f32.mrf.mxu0
      %v2027 = vadd.f32 0.0, %v2026
      %v2028 = vpop.f32.mrf.mxu0
      %2029 = vmatprep.mubr.bf16.mxu0 0
      %2030 = vmatmul.mubr.bf16.gmra.mxu0 %v1927
      %v2031 = vpop.f32.mrf.mxu0
      %v2032 = vadd.f32 0.0, %v2031
      %v2033 = vpop.f32.mrf.mxu0
      %v2034 = vpop.f32.mrf.mxu0
      %v2035 = vadd.f32 0.0, %v2034
      %v2036 = vpop.f32.mrf.mxu0
      %2037 = vmatprep.mubr.bf16.mxu0 0
      %2038 = vmatmul.mubr.bf16.gmra.mxu0 %v1928
      %v2039 = vpop.f32.mrf.mxu0
      %v2040 = vadd.f32 0.0, %v2039
      %v2041 = vpop.f32.mrf.mxu0
      %v2042 = vpop.f32.mrf.mxu0
      %v2043 = vadd.f32 0.0, %v2042
      %v2044 = vpop.f32.mrf.mxu0
      %2045 = vdwg.mxu0
      %v2046 = vadd.f32 %v1876, %v2016
      %v2047 = vadd.f32 %v1877, %v2019
      %v2048 = vadd.f32 %v1878, %v2024
      %v2049 = vadd.f32 %v1879, %v2027
      %v2050 = vadd.f32 %v1880, %v2032
      %v2051 = vadd.f32 %v1881, %v2035
      %v2052 = vadd.f32 %v1882, %v2040
      %v2053 = vadd.f32 %v1883, %v2043
      %v2054 = vld [vmem:[%s1714] sm:$0xf]
      %v2055 = vld [vmem:[%s1714 + $0x4] sm:$0x1]
      %v2056 = vld [vmem:[%s1714 + $0x8] sm:$0xf]
      %v2057 = vld [vmem:[%s1714 + $0xc] sm:$0x1]
      %v2058 = vld [vmem:[%s1714 + $0x10] sm:$0xf]
      %v2059 = vld [vmem:[%s1714 + $0x14] sm:$0x1]
      %v2060 = vld [vmem:[%s1714 + $0x18] sm:$0xf]
      %v2061 = vld [vmem:[%s1714 + $0x1c] sm:$0x1]
      %v2062 = vld [vmem:[%s1714 + $0x20] sm:$0xf]
      %v2063 = vld [vmem:[%s1714 + $0x24] sm:$0x1]
      %v2064 = vld [vmem:[%s1714 + $0x28] sm:$0xf]
      %v2065 = vld [vmem:[%s1714 + $0x2c] sm:$0x1]
      %v2066 = vld [vmem:[%s1714 + $0x30] sm:$0xf]
      %v2067 = vld [vmem:[%s1714 + $0x34] sm:$0x1]
      %v2068 = vld [vmem:[%s1714 + $0x38] sm:$0xf]
      %v2069 = vld [vmem:[%s1714 + $0x3c] sm:$0x1]
      %v2071 = vshrl.u32 %v2054, 16
      %v2073 = vrot.slane %v2071, 4
      %v2074 = vshll.u32 %v2054, 16
      %v2076 = vrot.slane %v2074, 5
      %v2077 = vor.u32 %v2073, %v2076
      %v2078 = vrot.slane %v2077, 4
      %v2080 = vshll.u32 %v2055, 16
      %v2082 = vrot.slane %v2080, 5
      %v2083 = vsel %vm698, %v2078, %v2082
      %v2085 = vshrl.u32 %v2056, 16
      %v2087 = vrot.slane %v2085, 4
      %v2088 = vshll.u32 %v2056, 16
      %v2090 = vrot.slane %v2088, 5
      %v2091 = vor.u32 %v2087, %v2090
      %v2092 = vrot.slane %v2091, 4
      %v2094 = vshll.u32 %v2057, 16
      %v2096 = vrot.slane %v2094, 5
      %v2097 = vsel %vm698, %v2092, %v2096
      %v2099 = vshrl.u32 %v2058, 16
      %v2101 = vrot.slane %v2099, 4
      %v2102 = vshll.u32 %v2058, 16
      %v2104 = vrot.slane %v2102, 5
      %v2105 = vor.u32 %v2101, %v2104
      %v2106 = vrot.slane %v2105, 4
      %v2108 = vshll.u32 %v2059, 16
      %v2110 = vrot.slane %v2108, 5
      %v2111 = vsel %vm698, %v2106, %v2110
      %v2113 = vshrl.u32 %v2060, 16
      %v2115 = vrot.slane %v2113, 4
      %v2116 = vshll.u32 %v2060, 16
      %v2118 = vrot.slane %v2116, 5
      %v2119 = vor.u32 %v2115, %v2118
      %v2120 = vrot.slane %v2119, 4
      %v2122 = vshll.u32 %v2061, 16
      %v2124 = vrot.slane %v2122, 5
      %v2125 = vsel %vm698, %v2120, %v2124
      %v2127 = vshrl.u32 %v2062, 16
      %v2129 = vrot.slane %v2127, 4
      %v2130 = vshll.u32 %v2062, 16
      %v2132 = vrot.slane %v2130, 5
      %v2133 = vor.u32 %v2129, %v2132
      %v2134 = vrot.slane %v2133, 4
      %v2136 = vshll.u32 %v2063, 16
      %v2138 = vrot.slane %v2136, 5
      %v2139 = vsel %vm698, %v2134, %v2138
      %v2141 = vshrl.u32 %v2064, 16
      %v2143 = vrot.slane %v2141, 4
      %v2144 = vshll.u32 %v2064, 16
      %v2146 = vrot.slane %v2144, 5
      %v2147 = vor.u32 %v2143, %v2146
      %v2148 = vrot.slane %v2147, 4
      %v2150 = vshll.u32 %v2065, 16
      %v2152 = vrot.slane %v2150, 5
      %v2153 = vsel %vm698, %v2148, %v2152
      %v2155 = vshrl.u32 %v2066, 16
      %v2157 = vrot.slane %v2155, 4
      %v2158 = vshll.u32 %v2066, 16
      %v2160 = vrot.slane %v2158, 5
      %v2161 = vor.u32 %v2157, %v2160
      %v2162 = vrot.slane %v2161, 4
      %v2164 = vshll.u32 %v2067, 16
      %v2166 = vrot.slane %v2164, 5
      %v2167 = vsel %vm698, %v2162, %v2166
      %v2169 = vshrl.u32 %v2068, 16
      %v2171 = vrot.slane %v2169, 4
      %v2172 = vshll.u32 %v2068, 16
      %v2174 = vrot.slane %v2172, 5
      %v2175 = vor.u32 %v2171, %v2174
      %v2176 = vrot.slane %v2175, 4
      %v2178 = vshll.u32 %v2069, 16
      %v2180 = vrot.slane %v2178, 5
      %v2181 = vsel %vm698, %v2176, %v2180
      %v2182 = vld [vmem:[%s1 + $0x200] sm:$0xf]
      %v2183 = vld [vmem:[%s1 + $0x204] sm:$0xf]
      %v2184 = vld [vmem:[%s1 + $0x208] sm:$0xf]
      %v2185 = vld [vmem:[%s1 + $0x20c] sm:$0xf]
      %v2186 = vld [vmem:[%s1 + $0x210] sm:$0xf]
      %v2187 = vld [vmem:[%s1 + $0x214] sm:$0xf]
      %v2188 = vld [vmem:[%s1 + $0x218] sm:$0xf]
      %v2189 = vld [vmem:[%s1 + $0x21c] sm:$0xf]
      %v2190 = vld [vmem:[%s1 + $0x220] sm:$0xf]
      %v2191 = vld [vmem:[%s1 + $0x224] sm:$0xf]
      %v2192 = vld [vmem:[%s1 + $0x228] sm:$0xf]
      %v2193 = vld [vmem:[%s1 + $0x22c] sm:$0xf]
      %v2194 = vld [vmem:[%s1 + $0x230] sm:$0xf]
      %v2195 = vld [vmem:[%s1 + $0x234] sm:$0xf]
      %v2196 = vld [vmem:[%s1 + $0x238] sm:$0xf]
      %v2197 = vld [vmem:[%s1 + $0x23c] sm:$0xf]
      %v2198 = vunpack.c.l.b16 %v2083
      %v2199 = vunpack.c.l.b16 %v2097
      %v2200 = vunpack.c.l.b16 %v2111
      %v2201 = vunpack.c.l.b16 %v2125
      %v2202 = vunpack.c.l.b16 %v2139
      %v2203 = vunpack.c.l.b16 %v2153
      %v2204 = vunpack.c.l.b16 %v2167
      %v2205 = vunpack.c.l.b16 %v2181
      %v2206 = vpack.c.b16 %v2199, %v2198
      %v2207 = vpack.c.b16 %v2201, %v2200
      %v2208 = vpack.c.b16 %v2203, %v2202
      %v2209 = vpack.c.b16 %v2205, %v2204
      %v2230 = vunpack.c.l.b16 %v2182
      %v2231 = vunpack.c.l.b16 %v2183
      %v2232 = vunpack.c.l.b16 %v2184
      %v2233 = vunpack.c.l.b16 %v2185
      %v2234 = vunpack.c.l.b16 %v2186
      %v2235 = vunpack.c.l.b16 %v2187
      %v2236 = vunpack.c.l.b16 %v2188
      %v2237 = vunpack.c.l.b16 %v2189
      %v2238 = vunpack.c.l.b16 %v2190
      %v2239 = vunpack.c.l.b16 %v2191
      %v2240 = vunpack.c.l.b16 %v2192
      %v2241 = vunpack.c.l.b16 %v2193
      %v2242 = vunpack.c.l.b16 %v2194
      %v2243 = vunpack.c.l.b16 %v2195
      %v2244 = vunpack.c.l.b16 %v2196
      %v2245 = vunpack.c.l.b16 %v2197
      %v2246 = vpack.c.b16 %v2231, %v2230
      %v2247 = vpack.c.b16 %v2233, %v2232
      %v2248 = vpack.c.b16 %v2235, %v2234
      %v2249 = vpack.c.b16 %v2237, %v2236
      %v2250 = vpack.c.b16 %v2239, %v2238
      %v2251 = vpack.c.b16 %v2241, %v2240
      %v2252 = vpack.c.b16 %v2243, %v2242
      %v2253 = vpack.c.b16 %v2245, %v2244
      %2262 = vmatprep.subr.bf16.mxu0 0
      %2263 = vmatpush1.bf16.msra.mxu0 %v2253
      %2264 = vmatprep.subr.bf16.mxu0 0
      %2265 = vmatpush1.bf16.msra.mxu0 %v2252
      %2266 = vmatprep.subr.bf16.mxu0 0
      %2267 = vmatpush1.bf16.msra.mxu0 %v2251
      %2268 = vmatprep.subr.bf16.mxu0 0
      %2269 = vmatpush1.bf16.msra.mxu0 %v2250
      %2270 = vmatprep.subr.bf16.mxu0 0
      %2271 = vmatpush1.bf16.msra.mxu0 %v2249
      %2272 = vmatprep.subr.bf16.mxu0 0
      %2273 = vmatpush1.bf16.msra.mxu0 %v2248
      %2274 = vmatprep.subr.bf16.mxu0 0
      %2275 = vmatpush1.bf16.msra.mxu0 %v2247
      %2276 = vmatprep.subr.bf16.mxu0 0
      %2277 = vmatpush1.bf16.msra.mxu0 %v2246
      %2278 = vmatprep.subr.bf16.mxu0 0
      %2279 = vmatpush2.bf16.msra.mxu0 0
      %2280 = vmatprep.subr.bf16.mxu0 0
      %2281 = vmatpush2.bf16.msra.mxu0 0
      %2282 = vmatprep.subr.bf16.mxu0 0
      %2283 = vmatpush2.bf16.msra.mxu0 0
      %2284 = vmatprep.subr.bf16.mxu0 0
      %2285 = vmatpush2.bf16.msra.mxu0 0
      %2286 = vmatprep.subr.bf16.mxu0 0
      %2287 = vmatpush2.bf16.msra.mxu0 0
      %2288 = vmatprep.subr.bf16.mxu0 0
      %2289 = vmatpush2.bf16.msra.mxu0 0
      %2290 = vmatprep.subr.bf16.mxu0 0
      %2291 = vmatpush2.bf16.msra.mxu0 0
      %2292 = vmatprep.subr.bf16.mxu0 0
      %2293 = vmatpush2.bf16.msra.mxu0 0
      %2294 = vmatprep.mubr.bf16.mxu0 0
      %2295 = vmatmul.mubr.bf16.gmra.mxu0 %v2206
      %v2296 = vpop.f32.mrf.mxu0
      %v2297 = vadd.f32 0.0, %v2296
      %v2298 = vpop.f32.mrf.mxu0
      %v2299 = vpop.f32.mrf.mxu0
      %v2300 = vadd.f32 0.0, %v2299
      %v2301 = vpop.f32.mrf.mxu0
      %2302 = vmatprep.mubr.bf16.mxu0 0
      %2303 = vmatmul.mubr.bf16.gmra.mxu0 %v2207
      %v2304 = vpop.f32.mrf.mxu0
      %v2305 = vadd.f32 0.0, %v2304
      %v2306 = vpop.f32.mrf.mxu0
      %v2307 = vpop.f32.mrf.mxu0
      %v2308 = vadd.f32 0.0, %v2307
      %v2309 = vpop.f32.mrf.mxu0
      %2310 = vmatprep.mubr.bf16.mxu0 0
      %2311 = vmatmul.mubr.bf16.gmra.mxu0 %v2208
      %v2312 = vpop.f32.mrf.mxu0
      %v2313 = vadd.f32 0.0, %v2312
      %v2314 = vpop.f32.mrf.mxu0
      %v2315 = vpop.f32.mrf.mxu0
      %v2316 = vadd.f32 0.0, %v2315
      %v2317 = vpop.f32.mrf.mxu0
      %2318 = vmatprep.mubr.bf16.mxu0 0
      %2319 = vmatmul.mubr.bf16.gmra.mxu0 %v2209
      %v2320 = vpop.f32.mrf.mxu0
      %v2321 = vadd.f32 0.0, %v2320
      %v2322 = vpop.f32.mrf.mxu0
      %v2323 = vpop.f32.mrf.mxu0
      %v2324 = vadd.f32 0.0, %v2323
      %v2325 = vpop.f32.mrf.mxu0
      %2326 = vdwg.mxu0
      %v2327 = vadd.f32 %v2046, %v2297
      %v2328 = vadd.f32 %v2047, %v2300
      %v2329 = vadd.f32 %v2048, %v2305
      %v2330 = vadd.f32 %v2049, %v2308
      %v2331 = vadd.f32 %v2050, %v2313
      %v2332 = vadd.f32 %v2051, %v2316
      %v2333 = vadd.f32 %v2052, %v2321
      %v2334 = vadd.f32 %v2053, %v2324
      %v2335 = vpack.c.bf16 %v2328, %v2327
      %v2336 = vpack.c.bf16 %v2330, %v2329
      %v2337 = vpack.c.bf16 %v2332, %v2331
      %v2338 = vpack.c.bf16 %v2334, %v2333
      %v2343 = vunpack.c.l.b16 %v2335
      %v2344 = vunpack.c.h.b16 %v2335
      %v2345 = vunpack.c.l.b16 %v2336
      %v2346 = vunpack.c.h.b16 %v2336
      %v2347 = vunpack.c.l.b16 %v2337
      %v2348 = vunpack.c.h.b16 %v2337
      %v2349 = vunpack.c.l.b16 %v2338
      %v2350 = vunpack.c.h.b16 %v2338
      %v2351 = vpack.c.b16 %v2343, %v2343
      %v2352 = vpack.c.b16 %v2344, %v2344
      %v2353 = vpack.c.b16 %v2345, %v2345
      %v2354 = vpack.c.b16 %v2346, %v2346
      %v2355 = vpack.c.b16 %v2347, %v2347
      %v2356 = vpack.c.b16 %v2348, %v2348
      %v2357 = vpack.c.b16 %v2349, %v2349
      %v2358 = vpack.c.b16 %v2350, %v2350
      %2367 = vst [vmem:[%s338] sm:$0xf] %v2351
      %2368 = vst [vmem:[%s338 + $0x4] sm:$0xf] %v2352
      %2369 = vst [vmem:[%s338 + $0x8] sm:$0xf] %v2353
      %2370 = vst [vmem:[%s338 + $0xc] sm:$0xf] %v2354
      %2371 = vst [vmem:[%s338 + $0x10] sm:$0xf] %v2355
      %2372 = vst [vmem:[%s338 + $0x14] sm:$0xf] %v2356
      %2373 = vst [vmem:[%s338 + $0x18] sm:$0xf] %v2357
      %2374 = vst [vmem:[%s338 + $0x1c] sm:$0xf] %v2358
      %v2375 = vadd.f32 %v2327, %v2328
      %v2376 = vadd.f32 %v2375, %v2329
      %v2377 = vadd.f32 %v2376, %v2330
      %v2378 = vadd.f32 %v2377, %v2331
      %v2379 = vadd.f32 %v2378, %v2332
      %v2380 = vadd.f32 %v2379, %v2333
      %v2381 = vadd.f32 %v2380, %v2334
      %v2382 = vrot.slane %v2381, 4
      %v2383 = vadd.f32 %v2381, %v2382
      %v2384 = vrot.slane %v2383, 2
      %v2385 = vadd.f32 %v2383, %v2384
      %v2386 = vrot.slane %v2385, 1
      %v2387 = vadd.f32 %v2385, %v2386
      %2388 = vst [vmem:[%s341] sm:$0x1] %v2387
      %v2389 = vmul.f32 %v2327, %v2327
      %v2390 = vmul.f32 %v2328, %v2328
      %v2391 = vmul.f32 %v2329, %v2329
      %v2392 = vmul.f32 %v2330, %v2330
      %v2393 = vmul.f32 %v2331, %v2331
      %v2394 = vmul.f32 %v2332, %v2332
      %v2395 = vmul.f32 %v2333, %v2333
      %v2396 = vmul.f32 %v2334, %v2334
      %v2397 = vadd.f32 %v2389, %v2390
      %v2398 = vadd.f32 %v2397, %v2391
      %v2399 = vadd.f32 %v2398, %v2392
      %v2400 = vadd.f32 %v2399, %v2393
      %v2401 = vadd.f32 %v2400, %v2394
      %v2402 = vadd.f32 %v2401, %v2395
      %v2403 = vadd.f32 %v2402, %v2396
      %v2404 = vrot.slane %v2403, 4
      %v2405 = vadd.f32 %v2403, %v2404
      %v2406 = vrot.slane %v2405, 2
      %v2407 = vadd.f32 %v2405, %v2406
      %v2408 = vrot.slane %v2407, 1
      %v2409 = vadd.f32 %v2407, %v2408
      %2410 = vst [vmem:[%s344] sm:$0x1] %v2409
      %v2411 = vpack.c.bf16 %v1406, %v1403
      %v2412 = vpack.c.bf16 %v1414, %v1411
      %v2413 = vpack.c.bf16 %v1422, %v1419
      %v2414 = vpack.c.bf16 %v1430, %v1427
      %v2419 = vunpack.c.l.b16 %v2411
      %v2420 = vunpack.c.h.b16 %v2411
      %v2421 = vunpack.c.l.b16 %v2412
      %v2422 = vunpack.c.h.b16 %v2412
      %v2423 = vunpack.c.l.b16 %v2413
      %v2424 = vunpack.c.h.b16 %v2413
      %v2425 = vunpack.c.l.b16 %v2414
      %v2426 = vunpack.c.h.b16 %v2414
      %v2427 = vpack.c.b16 %v2419, %v2419
      %v2428 = vpack.c.b16 %v2420, %v2420
      %v2429 = vpack.c.b16 %v2421, %v2421
      %v2430 = vpack.c.b16 %v2422, %v2422
      %v2431 = vpack.c.b16 %v2423, %v2423
      %v2432 = vpack.c.b16 %v2424, %v2424
      %v2433 = vpack.c.b16 %v2425, %v2425
      %v2434 = vpack.c.b16 %v2426, %v2426
      %2443 = vst [vmem:[%s349] sm:$0xf] %v2427
      %2444 = vst [vmem:[%s349 + $0x4] sm:$0xf] %v2428
      %2445 = vst [vmem:[%s349 + $0x8] sm:$0xf] %v2429
      %2446 = vst [vmem:[%s349 + $0xc] sm:$0xf] %v2430
      %2447 = vst [vmem:[%s349 + $0x10] sm:$0xf] %v2431
      %2448 = vst [vmem:[%s349 + $0x14] sm:$0xf] %v2432
      %2449 = vst [vmem:[%s349 + $0x18] sm:$0xf] %v2433
      %2450 = vst [vmem:[%s349 + $0x1c] sm:$0xf] %v2434
      %v2451 = vadd.f32 %v1403, %v1406
      %v2452 = vadd.f32 %v2451, %v1411
      %v2453 = vadd.f32 %v2452, %v1414
      %v2454 = vadd.f32 %v2453, %v1419
      %v2455 = vadd.f32 %v2454, %v1422
      %v2456 = vadd.f32 %v2455, %v1427
      %v2457 = vadd.f32 %v2456, %v1430
      %v2458 = vrot.slane %v2457, 4
      %v2459 = vadd.f32 %v2457, %v2458
      %v2460 = vrot.slane %v2459, 2
      %v2461 = vadd.f32 %v2459, %v2460
      %v2462 = vrot.slane %v2461, 1
      %v2463 = vadd.f32 %v2461, %v2462
      %2464 = vst [vmem:[%s352] sm:$0x1] %v2463
      %v2465 = vmul.f32 %v1403, %v1403
      %v2466 = vmul.f32 %v1406, %v1406
      %v2467 = vmul.f32 %v1411, %v1411
      %v2468 = vmul.f32 %v1414, %v1414
      %v2469 = vmul.f32 %v1419, %v1419
      %v2470 = vmul.f32 %v1422, %v1422
      %v2471 = vmul.f32 %v1427, %v1427
      %v2472 = vmul.f32 %v1430, %v1430
      %v2473 = vadd.f32 %v2465, %v2466
      %v2474 = vadd.f32 %v2473, %v2467
      %v2475 = vadd.f32 %v2474, %v2468
      %v2476 = vadd.f32 %v2475, %v2469
      %v2477 = vadd.f32 %v2476, %v2470
      %v2478 = vadd.f32 %v2477, %v2471
      %v2479 = vadd.f32 %v2478, %v2472
      %v2480 = vrot.slane %v2479, 4
      %v2481 = vadd.f32 %v2479, %v2480
      %v2482 = vrot.slane %v2481, 2
      %v2483 = vadd.f32 %v2481, %v2482
      %v2484 = vrot.slane %v2483, 1
      %v2485 = vadd.f32 %v2483, %v2484
      %2486 = vst [vmem:[%s355] sm:$0x1] %v2485
      %p2487 = scmp.lt.s32.totalorder %s20, 1
      %s2488 = scalar_select %p2487, %s20, 1
      %s2489 = smul.addr %s2488, 8
      %s2490 = smul.addr %s2489, 4
      %s2491 = scalar_lea.vmem %s3, %s2490
      %p2492 = scmp.lt.s32.totalorder %s20, 1
      %s2493 = scalar_select %p2492, %s20, 1
      %s2494 = scalar_lea.vmem %s4, %s2493
      %p2495 = scmp.lt.s32.totalorder %s20, 1
      %s2496 = scalar_select %p2495, %s20, 1
      %s2497 = scalar_lea.vmem %s5, %s2496
      %p2498 = scmp.lt.s32.totalorder %s20, 1
      %s2499 = scalar_select %p2498, %s20, 1
      %s2500 = smul.addr %s2499, 8
      %s2501 = smul.addr %s2500, 4
      %s2502 = scalar_lea.vmem %s6, %s2501
      %p2503 = scmp.lt.s32.totalorder %s20, 1
      %s2504 = scalar_select %p2503, %s20, 1
      %s2505 = scalar_lea.vmem %s7, %s2504
      %p2506 = scmp.lt.s32.totalorder %s20, 1
      %s2507 = scalar_select %p2506, %s20, 1
      %s2508 = scalar_lea.vmem %s8, %s2507
      // Predicated region
      $region33: #{basic_block_forward.3} parent=31 // pred_check
        %p2509 = pneg %p106
      $region34: #{basic_block_forward.3} parent=31 // pred_check_branch
        %2511 = sbr.rel (%p2509) target = $region36
      $region35: #{basic_block_forward.3} parent=31 // pred_region
        _
      $region36: #{basic_block_forward.3} parent=31 // pred_fallthru
        _
      // Predicated region
      $region37: #{basic_block_forward.3} parent=31 // pred_check
        %p2512 = pneg %p132
      $region38: #{basic_block_forward.3} parent=31 // pred_check_branch
        %2514 = sbr.rel (%p2512) target = $region40
      $region39: #{basic_block_forward.3} parent=31 // pred_region
        _
      $region40: #{basic_block_forward.3} parent=31 // pred_fallthru
        _
      // Predicated region
      $region41: #{basic_block_forward.3} parent=31 // pred_check
        %p2515 = pneg %p158
      $region42: #{basic_block_forward.3} parent=31 // pred_check_branch
        %2517 = sbr.rel (%p2515) target = $region44
      $region43: #{basic_block_forward.3} parent=31 // pred_region
        _
      $region44: #{basic_block_forward.3} parent=31 // pred_fallthru
        _
      // Predicated region
      $region45: #{basic_block_forward.3} parent=31 // pred_check
        %p2518 = pneg %p184
      $region46: #{basic_block_forward.3} parent=31 // pred_check_branch
        %2520 = sbr.rel (%p2518) target = $region48
      $region47: #{basic_block_forward.3} parent=31 // pred_region
        _
      $region48: #{basic_block_forward.3} parent=31 // pred_fallthru
        _
      // Predicated region
      $region49: #{basic_block_forward.3} parent=31 // pred_check
        %p2521 = pneg %p210
      $region50: #{basic_block_forward.3} parent=31 // pred_check_branch
        %2523 = sbr.rel (%p2521) target = $region52
      $region51: #{basic_block_forward.3} parent=31 // pred_region
        _
      $region52: #{basic_block_forward.3} parent=31 // pred_fallthru
        _
      // Predicated region
      $region53: #{basic_block_forward.3} parent=31 // pred_check
        %p2524 = pneg %p236
      $region54: #{basic_block_forward.3} parent=31 // pred_check_branch
        %2526 = sbr.rel (%p2524) target = $region56
      $region55: #{basic_block_forward.3} parent=31 // pred_region
        _
      $region56: #{basic_block_forward.3} parent=31 // pred_fallthru
        _
    $region32: #{basic_block_forward.3} parent=5 // pred_fallthru
      _
    %p2527 = scmp.le.s32.totalorder 2, %s15
    // Predicated region
    $region57: #{basic_block_forward.3} parent=5 // pred_check
      %p2528 = pneg %p2527
    $region58: #{basic_block_forward.3} parent=5 // pred_check_branch
      %2530 = sbr.rel (%p2528) target = $region60
    $region59: #{basic_block_forward.3} parent=5 // pred_region
      %s2531 = ssub.s32 %s15, 2
      // Predicated region
      $region61: #{basic_block_forward.3} parent=59 // pred_check
        %p2532 = pneg %p112
      $region62: #{basic_block_forward.3} parent=59 // pred_check_branch
        %2534 = sbr.rel (%p2532) target = $region64
      $region63: #{basic_block_forward.3} parent=59 // pred_region
        %p2535 = scmp.lt.s32.totalorder %s21, 1
        %s2536 = scalar_select %p2535, %s21, 1
        %s2537 = smul.addr %s2536, 8
        %s2538 = smul.addr %s2537, 4
        %s2539 = scalar_lea.vmem %s3, %s2538
      $region64: #{basic_block_forward.3} parent=59 // pred_fallthru
        _
      // Predicated region
      $region65: #{basic_block_forward.3} parent=59 // pred_check
        %p2540 = pneg %p138
      $region66: #{basic_block_forward.3} parent=59 // pred_check_branch
        %2542 = sbr.rel (%p2540) target = $region68
      $region67: #{basic_block_forward.3} parent=59 // pred_region
        %p2543 = scmp.lt.s32.totalorder %s21, 1
        %s2544 = scalar_select %p2543, %s21, 1
        %s2545 = scalar_lea.vmem %s4, %s2544
      $region68: #{basic_block_forward.3} parent=59 // pred_fallthru
        _
      // Predicated region
      $region69: #{basic_block_forward.3} parent=59 // pred_check
        %p2546 = pneg %p164
      $region70: #{basic_block_forward.3} parent=59 // pred_check_branch
        %2548 = sbr.rel (%p2546) target = $region72
      $region71: #{basic_block_forward.3} parent=59 // pred_region
        %p2549 = scmp.lt.s32.totalorder %s21, 1
        %s2550 = scalar_select %p2549, %s21, 1
        %s2551 = scalar_lea.vmem %s5, %s2550
      $region72: #{basic_block_forward.3} parent=59 // pred_fallthru
        _
      // Predicated region
      $region73: #{basic_block_forward.3} parent=59 // pred_check
        %p2552 = pneg %p190
      $region74: #{basic_block_forward.3} parent=59 // pred_check_branch
        %2554 = sbr.rel (%p2552) target = $region76
      $region75: #{basic_block_forward.3} parent=59 // pred_region
        %p2555 = scmp.lt.s32.totalorder %s21, 1
        %s2556 = scalar_select %p2555, %s21, 1
        %s2557 = smul.addr %s2556, 8
        %s2558 = smul.addr %s2557, 4
        %s2559 = scalar_lea.vmem %s6, %s2558
      $region76: #{basic_block_forward.3} parent=59 // pred_fallthru
        _
      // Predicated region
      $region77: #{basic_block_forward.3} parent=59 // pred_check
        %p2560 = pneg %p216
      $region78: #{basic_block_forward.3} parent=59 // pred_check_branch
        %2562 = sbr.rel (%p2560) target = $region80
      $region79: #{basic_block_forward.3} parent=59 // pred_region
        %p2563 = scmp.lt.s32.totalorder %s21, 1
        %s2564 = scalar_select %p2563, %s21, 1
        %s2565 = scalar_lea.vmem %s7, %s2564
      $region80: #{basic_block_forward.3} parent=59 // pred_fallthru
        _
      // Predicated region
      $region81: #{basic_block_forward.3} parent=59 // pred_check
        %p2566 = pneg %p242
      $region82: #{basic_block_forward.3} parent=59 // pred_check_branch
        %2568 = sbr.rel (%p2566) target = $region84
      $region83: #{basic_block_forward.3} parent=59 // pred_region
        %p2569 = scmp.lt.s32.totalorder %s21, 1
        %s2570 = scalar_select %p2569, %s21, 1
        %s2571 = scalar_lea.vmem %s8, %s2570
      $region84: #{basic_block_forward.3} parent=59 // pred_fallthru
        _
    $region60: #{basic_block_forward.3} parent=5 // pred_fallthru
      _
  $region6: #{basic_block_forward.3} parent=0 // loop_footer
    %s19 = sadd.s32 1, %s15
  $region7: #{basic_block_forward.3} parent=0 // loop_footer_branch
    %14 = sbr.rel target = $region3
  $region8: #{basic_block_forward.3} parent=0 // loop_exit
    _

// kernel: basic_block_forward.4
$region0: #{basic_block_forward.4}
  #allocation0 [shape = 'u32[]', space=smem, size = 0x4, offset = 0x4, fixed_abs, tag = 'smem constant byte address 0x4 - core index']
  #allocation1 [shape = 'u32[144,128]{1,0:T(1,128)}', space=vmem, size = 0x12000, scoped, tag = 'internal scratch']
  #allocation2 [shape = 'bf16[10,10,128]{2,1,0:T(8,128)(2,1)}', space=vmem, size = 0xa000, scoped, tag = 'scratch operand']
  %s0 = inlined_call_operand.vmem [shape: bf16[2,8,8,128], index: 0, kind: input, shape index: {}]
  %s1 = inlined_call_operand.vmem [shape: bf16[1152,128], index: 1, kind: input, shape index: {}]
  %s2 = inlined_call_operand.vmem [shape: f32[1,1,128], index: 2, kind: input, shape index: {}]
  %s3 = inlined_call_operand.vmem [shape: f32[1,1,128], index: 3, kind: input, shape index: {}]
  %s4 = inlined_call_operand.vmem [shape: bf16[2,64,128], index: 4, kind: output, shape index: {0}]
  %s5 = inlined_call_operand.vmem [shape: f32[2,1,128], index: 5, kind: output, shape index: {1}]
  %s6 = inlined_call_operand.vmem [shape: f32[2,1,128], index: 6, kind: output, shape index: {2}]
  %7 = xla_tuple %s4, %s5, %s6
  %s8 = sld [smem:[#allocation0]]
  $region65: #{basic_block_forward.4} parent=0
    _
  %s10 = ssub.s32 1, %s8
  %s11 = scalar_select 0, %s10, %s8
  loop: start=0, step=1, limit=4
  $region2: #{basic_block_forward.4} parent=0 // loop_pre_header
    _
  $region3: #{basic_block_forward.4} parent=0 // loop_header
    %s13 = sphi 0, %s17
    %p14 = scmp.ge.s32.totalorder %s13, 4
    %s23 = sphi 0, %s25
    %s26 = sphi 0, %s23
    %s27 = sphi 0, %s26
    %s43 = sphi 0, %s27
    %s47 = sphi 0, %s47
    %s49 = sphi 0, %s47
    %s50 = sphi 0, %s49
    %s64 = sphi 0, %s50
    %s68 = sphi 0, %s68
    %s70 = sphi 0, %s68
    %s71 = sphi 0, %s70
    %s85 = sphi 0, %s71
    %s89 = sphi 0, %s89
    %s91 = sphi 0, %s89
    %s92 = sphi 0, %s91
    %s106 = sphi 0, %s92
    %s112 = sphi 0, %s114
    %s115 = sphi 0, %s112
    %s116 = sphi 0, %s115
    %s132 = sphi 0, %s116
    %s138 = sphi 0, %s140
    %s141 = sphi 0, %s138
    %s142 = sphi 0, %s141
    %s158 = sphi 0, %s142
    %s164 = sphi 0, %s166
    %s167 = sphi 0, %s164
    %s168 = sphi 0, %s167
    %s184 = sphi 0, %s168
  $region4: #{basic_block_forward.4} parent=0 // loop_header_branch
    %16 = sbr.rel (%p14) target = $region8
  $region5: #{basic_block_forward.4} parent=0 // loop_body
    %s18 = ssub.s32 %s13, 1
    %s19 = ssub.s32 %s13, 2
    %s20 = sadd.s32 %s13, 1
    %s21 = ssub.s32 %s13, %s20
    %p22 = scmp.eq.s32.totalorder %s21, 0
    %s24 = sadd.s32 %s23, 1
    %s25 = scalar_select %p22, %s23, %s24
    %p28 = pneg %p22
    %p29 = scmp.eq.s32.totalorder %s13, 1
    %p30 = por %p28, %p29
    %p31 = scmp.ne.s32.totalorder %s23, %s26
    %p32 = scmp.eq.s32.totalorder %s13, 0
    %p33 = por %p31, %p32
    %p34 = scmp.ne.s32.totalorder %s23, %s26
    %p35 = scmp.eq.s32.totalorder %s18, 1
    %p36 = por %p34, %p35
    %p37 = scmp.ne.s32.totalorder %s26, %s27
    %p38 = scmp.eq.s32.totalorder %s18, 0
    %p39 = por %p37, %p38
    %p40 = scmp.ne.s32.totalorder %s26, %s27
    %p41 = scmp.eq.s32.totalorder %s19, 1
    %p42 = por %p40, %p41
    %p44 = scmp.ne.s32.totalorder %s27, %s43
    %p45 = scmp.eq.s32.totalorder %s19, 0
    %p46 = por %p44, %p45
    %s48 = sadd.s32 %s47, 1
    %p51 = scmp.eq.s32.totalorder %s13, 1
    %p52 = scmp.ne.s32.totalorder %s47, %s49
    %p53 = scmp.eq.s32.totalorder %s13, 0
    %p54 = por %p52, %p53
    %p55 = scmp.ne.s32.totalorder %s47, %s49
    %p56 = scmp.eq.s32.totalorder %s18, 1
    %p57 = por %p55, %p56
    %p58 = scmp.ne.s32.totalorder %s49, %s50
    %p59 = scmp.eq.s32.totalorder %s18, 0
    %p60 = por %p58, %p59
    %p61 = scmp.ne.s32.totalorder %s49, %s50
    %p62 = scmp.eq.s32.totalorder %s19, 1
    %p63 = por %p61, %p62
    %p65 = scmp.ne.s32.totalorder %s50, %s64
    %p66 = scmp.eq.s32.totalorder %s19, 0
    %p67 = por %p65, %p66
    %s69 = sadd.s32 %s68, 1
    %p72 = scmp.eq.s32.totalorder %s13, 1
    %p73 = scmp.ne.s32.totalorder %s68, %s70
    %p74 = scmp.eq.s32.totalorder %s13, 0
    %p75 = por %p73, %p74
    %p76 = scmp.ne.s32.totalorder %s68, %s70
    %p77 = scmp.eq.s32.totalorder %s18, 1
    %p78 = por %p76, %p77
    %p79 = scmp.ne.s32.totalorder %s70, %s71
    %p80 = scmp.eq.s32.totalorder %s18, 0
    %p81 = por %p79, %p80
    %p82 = scmp.ne.s32.totalorder %s70, %s71
    %p83 = scmp.eq.s32.totalorder %s19, 1
    %p84 = por %p82, %p83
    %p86 = scmp.ne.s32.totalorder %s71, %s85
    %p87 = scmp.eq.s32.totalorder %s19, 0
    %p88 = por %p86, %p87
    %s90 = sadd.s32 %s89, 1
    %p93 = scmp.eq.s32.totalorder %s13, 1
    %p94 = scmp.ne.s32.totalorder %s89, %s91
    %p95 = scmp.eq.s32.totalorder %s13, 0
    %p96 = por %p94, %p95
    %p97 = scmp.ne.s32.totalorder %s89, %s91
    %p98 = scmp.eq.s32.totalorder %s18, 1
    %p99 = por %p97, %p98
    %p100 = scmp.ne.s32.totalorder %s91, %s92
    %p101 = scmp.eq.s32.totalorder %s18, 0
    %p102 = por %p100, %p101
    %p103 = scmp.ne.s32.totalorder %s91, %s92
    %p104 = scmp.eq.s32.totalorder %s19, 1
    %p105 = por %p103, %p104
    %p107 = scmp.ne.s32.totalorder %s92, %s106
    %p108 = scmp.eq.s32.totalorder %s19, 0
    %p109 = por %p107, %p108
    %s110 = ssub.s32 %s13, %s20
    %p111 = scmp.eq.s32.totalorder %s110, 0
    %s113 = sadd.s32 %s112, 1
    %s114 = scalar_select %p111, %s112, %s113
    %p117 = pneg %p111
    %p118 = scmp.eq.s32.totalorder %s13, 1
    %p119 = por %p117, %p118
    %p120 = scmp.ne.s32.totalorder %s112, %s115
    %p121 = scmp.eq.s32.totalorder %s13, 0
    %p122 = por %p120, %p121
    %p123 = scmp.ne.s32.totalorder %s112, %s115
    %p124 = scmp.eq.s32.totalorder %s18, 1
    %p125 = por %p123, %p124
    %p126 = scmp.ne.s32.totalorder %s115, %s116
    %p127 = scmp.eq.s32.totalorder %s18, 0
    %p128 = por %p126, %p127
    %p129 = scmp.ne.s32.totalorder %s115, %s116
    %p130 = scmp.eq.s32.totalorder %s19, 1
    %p131 = por %p129, %p130
    %p133 = scmp.ne.s32.totalorder %s116, %s132
    %p134 = scmp.eq.s32.totalorder %s19, 0
    %p135 = por %p133, %p134
    %s136 = ssub.s32 %s13, %s20
    %p137 = scmp.eq.s32.totalorder %s136, 0
    %s139 = sadd.s32 %s138, 1
    %s140 = scalar_select %p137, %s138, %s139
    %p143 = pneg %p137
    %p144 = scmp.eq.s32.totalorder %s13, 1
    %p145 = por %p143, %p144
    %p146 = scmp.ne.s32.totalorder %s138, %s141
    %p147 = scmp.eq.s32.totalorder %s13, 0
    %p148 = por %p146, %p147
    %p149 = scmp.ne.s32.totalorder %s138, %s141
    %p150 = scmp.eq.s32.totalorder %s18, 1
    %p151 = por %p149, %p150
    %p152 = scmp.ne.s32.totalorder %s141, %s142
    %p153 = scmp.eq.s32.totalorder %s18, 0
    %p154 = por %p152, %p153
    %p155 = scmp.ne.s32.totalorder %s141, %s142
    %p156 = scmp.eq.s32.totalorder %s19, 1
    %p157 = por %p155, %p156
    %p159 = scmp.ne.s32.totalorder %s142, %s158
    %p160 = scmp.eq.s32.totalorder %s19, 0
    %p161 = por %p159, %p160
    %s162 = ssub.s32 %s13, %s20
    %p163 = scmp.eq.s32.totalorder %s162, 0
    %s165 = sadd.s32 %s164, 1
    %s166 = scalar_select %p163, %s164, %s165
    %p169 = pneg %p163
    %p170 = scmp.eq.s32.totalorder %s13, 1
    %p171 = por %p169, %p170
    %p172 = scmp.ne.s32.totalorder %s164, %s167
    %p173 = scmp.eq.s32.totalorder %s13, 0
    %p174 = por %p172, %p173
    %p175 = scmp.ne.s32.totalorder %s164, %s167
    %p176 = scmp.eq.s32.totalorder %s18, 1
    %p177 = por %p175, %p176
    %p178 = scmp.ne.s32.totalorder %s167, %s168
    %p179 = scmp.eq.s32.totalorder %s18, 0
    %p180 = por %p178, %p179
    %p181 = scmp.ne.s32.totalorder %s167, %s168
    %p182 = scmp.eq.s32.totalorder %s19, 1
    %p183 = por %p181, %p182
    %p185 = scmp.ne.s32.totalorder %s168, %s184
    %p186 = scmp.eq.s32.totalorder %s19, 0
    %p187 = por %p185, %p186
    %p188 = scmp.le.s32.totalorder 1, %s13
    %p189 = scmp.lt.s32.totalorder %s13, 3
    %p190 = pnand %p188, %p189
    %p191 = pneg %p190
    // Predicated region
    $region9: #{basic_block_forward.4} parent=5 // pred_check
      _
    $region10: #{basic_block_forward.4} parent=5 // pred_check_branch
      %193 = sbr.rel (%p190) target = $region12
    $region11: #{basic_block_forward.4} parent=5 // pred_region
      %s194 = ssub.s32 %s13, 1
      // Predicated region
      $region13: #{basic_block_forward.4} parent=11 // pred_check
        %p195 = pneg %p60
      $region14: #{basic_block_forward.4} parent=11 // pred_check_branch
        %197 = sbr.rel (%p195) target = $region16
      $region15: #{basic_block_forward.4} parent=11 // pred_region
        _
      $region16: #{basic_block_forward.4} parent=11 // pred_fallthru
        _
      // Predicated region
      $region17: #{basic_block_forward.4} parent=11 // pred_check
        %p198 = pneg %p81
      $region18: #{basic_block_forward.4} parent=11 // pred_check_branch
        %200 = sbr.rel (%p198) target = $region20
      $region19: #{basic_block_forward.4} parent=11 // pred_region
        _
      $region20: #{basic_block_forward.4} parent=11 // pred_fallthru
        _
      // Predicated region
      $region21: #{basic_block_forward.4} parent=11 // pred_check
        %p201 = pneg %p102
      $region22: #{basic_block_forward.4} parent=11 // pred_check_branch
        %203 = sbr.rel (%p201) target = $region24
      $region23: #{basic_block_forward.4} parent=11 // pred_region
        _
      $region24: #{basic_block_forward.4} parent=11 // pred_fallthru
        _
    $region12: #{basic_block_forward.4} parent=5 // pred_fallthru
      _
    %p204 = scmp.lt.s32.totalorder %s13, 2
    // Predicated region
    $region25: #{basic_block_forward.4} parent=5 // pred_check
      %p205 = pneg %p204
    $region26: #{basic_block_forward.4} parent=5 // pred_check_branch
      %207 = sbr.rel (%p205) target = $region28
    $region27: #{basic_block_forward.4} parent=5 // pred_region
      // Predicated region
      $region29: #{basic_block_forward.4} parent=27 // pred_check
        %p208 = pneg %p33
      $region30: #{basic_block_forward.4} parent=27 // pred_check_branch
        %210 = sbr.rel (%p208) target = $region32
      $region31: #{basic_block_forward.4} parent=27 // pred_region
        %p211 = scmp.lt.s32.totalorder %s13, 1
        %s212 = scalar_select %p211, %s13, 1
        %s213 = smul.addr %s212, 8
        %s214 = smul.addr %s213, 4
        %s215 = scalar_lea.vmem %s0, %s214
      $region32: #{basic_block_forward.4} parent=27 // pred_fallthru
        _
    $region28: #{basic_block_forward.4} parent=5 // pred_fallthru
      _
    %p216 = scmp.le.s32.totalorder 1, %s13
    %p217 = scmp.lt.s32.totalorder %s13, 3
    %p218 = pnand %p216, %p217
    %p219 = pneg %p218
    // Predicated region
    $region33: #{basic_block_forward.4} parent=5 // pred_check
      _
    $region34: #{basic_block_forward.4} parent=5 // pred_check_branch
      %221 = sbr.rel (%p218) target = $region36
    $region35: #{basic_block_forward.4} parent=5 // pred_region
      %s222 = ssub.s32 %s13, 1
      %p223 = scmp.lt.s32.totalorder %s18, 1
      %s224 = scalar_select %p223, %s18, 1
      %s225 = smul.addr %s224, 8
      %s226 = smul.addr %s225, 4
      %s227 = scalar_lea.vmem %s0, %s226
      %p228 = pneg %p39
      %p229 = pneg %p36
      %p230 = pneg %p60
      %p231 = pneg %p57
      %p232 = pneg %p81
      %p233 = pneg %p78
      %p234 = pneg %p102
      %p235 = pneg %p99
      %p236 = pneg %p128
      %p237 = pneg %p125
      %p238 = scmp.lt.s32.totalorder %s18, 1
      %s239 = scalar_select %p238, %s18, 1
      %s240 = smul.addr %s239, 8
      %s241 = smul.addr %s240, 4
      %s242 = scalar_lea.vmem %s4, %s241
      %p243 = pneg %p154
      %p244 = pneg %p151
      %p245 = scmp.lt.s32.totalorder %s18, 1
      %s246 = scalar_select %p245, %s18, 1
      %s247 = scalar_lea.vmem %s5, %s246
      %p248 = pneg %p180
      %p249 = pneg %p177
      %p250 = scmp.lt.s32.totalorder %s18, 1
      %s251 = scalar_select %p250, %s18, 1
      %s252 = scalar_lea.vmem %s6, %s251
      %p253 = scmp.lt.s32.totalorder %s18, 1
      %s254 = scalar_select %p253, %s18, 1
      %s255 = smul.addr %s254, 8
      %s256 = smul.addr %s255, 4
      %s257 = scalar_lea.vmem %s0, %s256
      %p258 = scmp.lt.s32.totalorder %s18, 1
      %s259 = scalar_select %p258, %s18, 1
      %s260 = smul.addr %s259, 8
      %s261 = smul.addr %s260, 4
      %s262 = scalar_lea.vmem %s4, %s261
      %p263 = scmp.lt.s32.totalorder %s18, 1
      %s264 = scalar_select %p263, %s18, 1
      %s265 = scalar_lea.vmem %s5, %s264
      %p266 = scmp.lt.s32.totalorder %s18, 1
      %s267 = scalar_select %p266, %s18, 1
      %s268 = scalar_lea.vmem %s6, %s267
      %270 = vst [vmem:[#allocation2] sm:$0xf] 0
      %271 = vst [vmem:[#allocation2 + $0x4] sm:$0x1] 0
      %s272 = scalar_lea.vmem [#allocation2], 72
      %273 = vst [vmem:[%s272] sm:$0xf] 0
      %274 = vst [vmem:[%s272 + $0x4] sm:$0x1] 0
      %vm275 = vcmask 1040384
      %vm276 = vsmask.f32 256
      %vm277 = vmand %vm275, %vm276
      %v278 = vld [vmem:[#allocation2] sm:$0x1]
      %v279 = vsel %vm277, 0, %v278
      %280 = vst [vmem:[#allocation2] sm:$0x1] %v279
      %v281 = vld [vmem:[#allocation2 + $0x8] sm:$0x1]
      %v282 = vsel %vm277, 0, %v281
      %283 = vst [vmem:[#allocation2 + $0x8] sm:$0x1] %v282
      %v284 = vld [vmem:[#allocation2 + $0x10] sm:$0x1]
      %v285 = vsel %vm277, 0, %v284
      %286 = vst [vmem:[#allocation2 + $0x10] sm:$0x1] %v285
      %v287 = vld [vmem:[#allocation2 + $0x18] sm:$0x1]
      %v288 = vsel %vm277, 0, %v287
      %289 = vst [vmem:[#allocation2 + $0x18] sm:$0x1] %v288
      %v290 = vld [vmem:[#allocation2 + $0x20] sm:$0x1]
      %v291 = vsel %vm277, 0, %v290
      %292 = vst [vmem:[#allocation2 + $0x20] sm:$0x1] %v291
      %v293 = vld [vmem:[#allocation2 + $0x28] sm:$0x1]
      %v294 = vsel %vm277, 0, %v293
      %295 = vst [vmem:[#allocation2 + $0x28] sm:$0x1] %v294
      %v296 = vld [vmem:[#allocation2 + $0x30] sm:$0x1]
      %v297 = vsel %vm277, 0, %v296
      %298 = vst [vmem:[#allocation2 + $0x30] sm:$0x1] %v297
      %v299 = vld [vmem:[#allocation2 + $0x38] sm:$0x1]
      %v300 = vsel %vm277, 0, %v299
      %301 = vst [vmem:[#allocation2 + $0x38] sm:$0x1] %v300
      %v302 = vld [vmem:[#allocation2 + $0x40] sm:$0x1]
      %v303 = vsel %vm277, 0, %v302
      %304 = vst [vmem:[#allocation2 + $0x40] sm:$0x1] %v303
      %v305 = vld [vmem:[#allocation2 + $0x48] sm:$0x1]
      %v306 = vsel %vm277, 0, %v305
      %307 = vst [vmem:[#allocation2 + $0x48] sm:$0x1] %v306
      %vm308 = vsmask.f32 7938
      %vm309 = vmand %vm275, %vm308
      %v310 = vld [vmem:[#allocation2 + $0x4] sm:$0x1]
      %v311 = vsel %vm309, 0, %v310
      %312 = vst [vmem:[#allocation2 + $0x4] sm:$0x1] %v311
      %v313 = vld [vmem:[#allocation2 + $0xc] sm:$0x1]
      %v314 = vsel %vm309, 0, %v313
      %315 = vst [vmem:[#allocation2 + $0xc] sm:$0x1] %v314
      %v316 = vld [vmem:[#allocation2 + $0x14] sm:$0x1]
      %v317 = vsel %vm309, 0, %v316
      %318 = vst [vmem:[#allocation2 + $0x14] sm:$0x1] %v317
      %v319 = vld [vmem:[#allocation2 + $0x1c] sm:$0x1]
      %v320 = vsel %vm309, 0, %v319
      %321 = vst [vmem:[#allocation2 + $0x1c] sm:$0x1] %v320
      %v322 = vld [vmem:[#allocation2 + $0x24] sm:$0x1]
      %v323 = vsel %vm309, 0, %v322
      %324 = vst [vmem:[#allocation2 + $0x24] sm:$0x1] %v323
      %v325 = vld [vmem:[#allocation2 + $0x2c] sm:$0x1]
      %v326 = vsel %vm309, 0, %v325
      %327 = vst [vmem:[#allocation2 + $0x2c] sm:$0x1] %v326
      %v328 = vld [vmem:[#allocation2 + $0x34] sm:$0x1]
      %v329 = vsel %vm309, 0, %v328
      %330 = vst [vmem:[#allocation2 + $0x34] sm:$0x1] %v329
      %v331 = vld [vmem:[#allocation2 + $0x3c] sm:$0x1]
      %v332 = vsel %vm309, 0, %v331
      %333 = vst [vmem:[#allocation2 + $0x3c] sm:$0x1] %v332
      %v334 = vld [vmem:[#allocation2 + $0x44] sm:$0x1]
      %v335 = vsel %vm309, 0, %v334
      %336 = vst [vmem:[#allocation2 + $0x44] sm:$0x1] %v335
      %v337 = vld [vmem:[#allocation2 + $0x4c] sm:$0x1]
      %v338 = vsel %vm309, 0, %v337
      %339 = vst [vmem:[#allocation2 + $0x4c] sm:$0x1] %v338
      %v340 = vld [vmem:[%s257] sm:$0xf]
      %v341 = vld [vmem:[%s257 + $0x4] sm:$0xf]
      %v342 = vld [vmem:[%s257 + $0x8] sm:$0xf]
      %v343 = vld [vmem:[%s257 + $0xc] sm:$0xf]
      %v344 = vld [vmem:[%s257 + $0x10] sm:$0xf]
      %v345 = vld [vmem:[%s257 + $0x14] sm:$0xf]
      %v346 = vld [vmem:[%s257 + $0x18] sm:$0xf]
      %v347 = vld [vmem:[%s257 + $0x1c] sm:$0xf]
      %v348 = vunpack.c.l.bf16 %v340
      %v349 = vunpack.c.l.bf16 %v341
      %v350 = vunpack.c.l.bf16 %v342
      %v351 = vunpack.c.l.bf16 %v343
      %v352 = vunpack.c.l.bf16 %v344
      %v353 = vunpack.c.l.bf16 %v345
      %v354 = vunpack.c.l.bf16 %v346
      %v355 = vunpack.c.l.bf16 %v347
      %v356 = vld [vmem:[%s2] sm:$0x1]
      %v358 = vlaneseq
      %v359 = vshrl.u32 %v358, 7
      %v360 = vsub.s32 0, %v359
      %v361 = vrot.slane %v356, %v360
      %v363 = vmul.f32 %v348, %v361
      %v364 = vmul.f32 %v349, %v361
      %v365 = vmul.f32 %v350, %v361
      %v366 = vmul.f32 %v351, %v361
      %v367 = vmul.f32 %v352, %v361
      %v368 = vmul.f32 %v353, %v361
      %v369 = vmul.f32 %v354, %v361
      %v370 = vmul.f32 %v355, %v361
      %v371 = vld [vmem:[%s3] sm:$0x1]
      %v373 = vlaneseq
      %v374 = vshrl.u32 %v373, 7
      %v375 = vsub.s32 0, %v374
      %v376 = vrot.slane %v371, %v375
      %v378 = vadd.f32 %v363, %v376
      %v379 = vadd.f32 %v364, %v376
      %v380 = vadd.f32 %v365, %v376
      %v381 = vadd.f32 %v366, %v376
      %v382 = vadd.f32 %v367, %v376
      %v383 = vadd.f32 %v368, %v376
      %v384 = vadd.f32 %v369, %v376
      %v385 = vadd.f32 %v370, %v376
      %v386 = vmax.f32 %v378, 0.0
      %v387 = vmax.f32 %v379, 0.0
      %v388 = vmax.f32 %v380, 0.0
      %v389 = vmax.f32 %v381, 0.0
      %v390 = vmax.f32 %v382, 0.0
      %v391 = vmax.f32 %v383, 0.0
      %v392 = vmax.f32 %v384, 0.0
      %v393 = vmax.f32 %v385, 0.0
      %v394 = vpack.c.bf16 %v386, %v386
      %v395 = vpack.c.bf16 %v387, %v387
      %v396 = vpack.c.bf16 %v388, %v388
      %v397 = vpack.c.bf16 %v389, %v389
      %v398 = vpack.c.bf16 %v390, %v390
      %v399 = vpack.c.bf16 %v391, %v391
      %v400 = vpack.c.bf16 %v392, %v392
      %v401 = vpack.c.bf16 %v393, %v393
      %v410 = vunpack.c.l.b16 %v394
      %v411 = vunpack.c.l.b16 %v395
      %v412 = vunpack.c.l.b16 %v396
      %v413 = vunpack.c.l.b16 %v397
      %v414 = vunpack.c.l.b16 %v398
      %v415 = vunpack.c.l.b16 %v399
      %v416 = vunpack.c.l.b16 %v400
      %v417 = vunpack.c.l.b16 %v401
      %v418 = vpack.c.b16 %v410, %v410
      %v419 = vpack.c.b16 %v411, %v411
      %v420 = vpack.c.b16 %v412, %v412
      %v421 = vpack.c.b16 %v413, %v413
      %v422 = vpack.c.b16 %v414, %v414
      %v423 = vpack.c.b16 %v415, %v415
      %v424 = vpack.c.b16 %v416, %v416
      %v425 = vpack.c.b16 %v417, %v417
      %v427 = vshrl.u32 %v418, 16
      %v429 = vrot.slane %v427, 7
      %v430 = vshll.u32 %v418, 16
      %v432 = vor.u32 %v429, %v430
      %v433 = vrot.slane %v429, 4
      %v435 = vshrl.u32 %v419, 16
      %v437 = vrot.slane %v435, 7
      %v438 = vshll.u32 %v419, 16
      %v440 = vor.u32 %v437, %v438
      %v441 = vrot.slane %v437, 4
      %v443 = vshrl.u32 %v420, 16
      %v445 = vrot.slane %v443, 7
      %v446 = vshll.u32 %v420, 16
      %v448 = vor.u32 %v445, %v446
      %v449 = vrot.slane %v445, 4
      %v451 = vshrl.u32 %v421, 16
      %v453 = vrot.slane %v451, 7
      %v454 = vshll.u32 %v421, 16
      %v456 = vor.u32 %v453, %v454
      %v457 = vrot.slane %v453, 4
      %v459 = vshrl.u32 %v422, 16
      %v461 = vrot.slane %v459, 7
      %v462 = vshll.u32 %v422, 16
      %v464 = vor.u32 %v461, %v462
      %v465 = vrot.slane %v461, 4
      %v467 = vshrl.u32 %v423, 16
      %v469 = vrot.slane %v467, 7
      %v470 = vshll.u32 %v423, 16
      %v472 = vor.u32 %v469, %v470
      %v473 = vrot.slane %v469, 4
      %v475 = vshrl.u32 %v424, 16
      %v477 = vrot.slane %v475, 7
      %v478 = vshll.u32 %v424, 16
      %v480 = vor.u32 %v477, %v478
      %v481 = vrot.slane %v477, 4
      %v483 = vshrl.u32 %v425, 16
      %v485 = vrot.slane %v483, 7
      %v486 = vshll.u32 %v425, 16
      %v488 = vor.u32 %v485, %v486
      %v489 = vrot.slane %v485, 4
      %s506 = scalar_lea.vmem [#allocation2], 8
      %vm507 = vcmask 1043456
      %vm508 = vmand %vm507, %vm308
      %v509 = vld [vmem:[%s506] sm:$0xf]
      %v510 = vsel %vm508, %v432, %v509
      %511 = vst [vmem:[%s506] sm:$0xf] %v510
      %v512 = vld [vmem:[%s506 + $0x4] sm:$0x1]
      %v513 = vsel %vm277, %v433, %v512
      %514 = vst [vmem:[%s506 + $0x4] sm:$0x1] %v513
      %v515 = vld [vmem:[%s506 + $0x8] sm:$0xf]
      %v516 = vsel %vm508, %v440, %v515
      %517 = vst [vmem:[%s506 + $0x8] sm:$0xf] %v516
      %v518 = vld [vmem:[%s506 + $0xc] sm:$0x1]
      %v519 = vsel %vm277, %v441, %v518
      %520 = vst [vmem:[%s506 + $0xc] sm:$0x1] %v519
      %v521 = vld [vmem:[%s506 + $0x10] sm:$0xf]
      %v522 = vsel %vm508, %v448, %v521
      %523 = vst [vmem:[%s506 + $0x10] sm:$0xf] %v522
      %v524 = vld [vmem:[%s506 + $0x14] sm:$0x1]
      %v525 = vsel %vm277, %v449, %v524
      %526 = vst [vmem:[%s506 + $0x14] sm:$0x1] %v525
      %v527 = vld [vmem:[%s506 + $0x18] sm:$0xf]
      %v528 = vsel %vm508, %v456, %v527
      %529 = vst [vmem:[%s506 + $0x18] sm:$0xf] %v528
      %v530 = vld [vmem:[%s506 + $0x1c] sm:$0x1]
      %v531 = vsel %vm277, %v457, %v530
      %532 = vst [vmem:[%s506 + $0x1c] sm:$0x1] %v531
      %v533 = vld [vmem:[%s506 + $0x20] sm:$0xf]
      %v534 = vsel %vm508, %v464, %v533
      %535 = vst [vmem:[%s506 + $0x20] sm:$0xf] %v534
      %v536 = vld [vmem:[%s506 + $0x24] sm:$0x1]
      %v537 = vsel %vm277, %v465, %v536
      %538 = vst [vmem:[%s506 + $0x24] sm:$0x1] %v537
      %v539 = vld [vmem:[%s506 + $0x28] sm:$0xf]
      %v540 = vsel %vm508, %v472, %v539
      %541 = vst [vmem:[%s506 + $0x28] sm:$0xf] %v540
      %v542 = vld [vmem:[%s506 + $0x2c] sm:$0x1]
      %v543 = vsel %vm277, %v473, %v542
      %544 = vst [vmem:[%s506 + $0x2c] sm:$0x1] %v543
      %v545 = vld [vmem:[%s506 + $0x30] sm:$0xf]
      %v546 = vsel %vm508, %v480, %v545
      %547 = vst [vmem:[%s506 + $0x30] sm:$0xf] %v546
      %v548 = vld [vmem:[%s506 + $0x34] sm:$0x1]
      %v549 = vsel %vm277, %v481, %v548
      %550 = vst [vmem:[%s506 + $0x34] sm:$0x1] %v549
      %v551 = vld [vmem:[%s506 + $0x38] sm:$0xf]
      %v552 = vsel %vm508, %v488, %v551
      %553 = vst [vmem:[%s506 + $0x38] sm:$0xf] %v552
      %v554 = vld [vmem:[%s506 + $0x3c] sm:$0x1]
      %v555 = vsel %vm277, %v489, %v554
      %556 = vst [vmem:[%s506 + $0x3c] sm:$0x1] %v555
      %v557 = vld [vmem:[#allocation2] sm:$0xf]
      %v558 = vld [vmem:[#allocation2 + $0x8] sm:$0xf]
      %v559 = vld [vmem:[#allocation2 + $0x10] sm:$0xf]
      %v560 = vld [vmem:[#allocation2 + $0x18] sm:$0xf]
      %v561 = vld [vmem:[#allocation2 + $0x20] sm:$0xf]
      %v562 = vld [vmem:[#allocation2 + $0x28] sm:$0xf]
      %v563 = vld [vmem:[#allocation2 + $0x30] sm:$0xf]
      %v564 = vld [vmem:[#allocation2 + $0x38] sm:$0xf]
      %v565 = vld [vmem:[%s1] sm:$0xf]
      %v566 = vld [vmem:[%s1 + $0x4] sm:$0xf]
      %v567 = vld [vmem:[%s1 + $0x8] sm:$0xf]
      %v568 = vld [vmem:[%s1 + $0xc] sm:$0xf]
      %v569 = vld [vmem:[%s1 + $0x10] sm:$0xf]
      %v570 = vld [vmem:[%s1 + $0x14] sm:$0xf]
      %v571 = vld [vmem:[%s1 + $0x18] sm:$0xf]
      %v572 = vld [vmem:[%s1 + $0x1c] sm:$0xf]
      %v573 = vld [vmem:[%s1 + $0x20] sm:$0xf]
      %v574 = vld [vmem:[%s1 + $0x24] sm:$0xf]
      %v575 = vld [vmem:[%s1 + $0x28] sm:$0xf]
      %v576 = vld [vmem:[%s1 + $0x2c] sm:$0xf]
      %v577 = vld [vmem:[%s1 + $0x30] sm:$0xf]
      %v578 = vld [vmem:[%s1 + $0x34] sm:$0xf]
      %v579 = vld [vmem:[%s1 + $0x38] sm:$0xf]
      %v580 = vld [vmem:[%s1 + $0x3c] sm:$0xf]
      %v581 = vld [vmem:[#allocation2 + $0x4] sm:$0x1]
      %v582 = vld [vmem:[#allocation2 + $0xc] sm:$0x1]
      %v583 = vld [vmem:[#allocation2 + $0x14] sm:$0x1]
      %v584 = vld [vmem:[#allocation2 + $0x1c] sm:$0x1]
      %v585 = vld [vmem:[#allocation2 + $0x24] sm:$0x1]
      %v586 = vld [vmem:[#allocation2 + $0x2c] sm:$0x1]
      %v587 = vld [vmem:[#allocation2 + $0x34] sm:$0x1]
      %v588 = vld [vmem:[#allocation2 + $0x3c] sm:$0x1]
      %vm589 = vsmask.f32 3328
      %vm590 = vsmask.f32 7440
      %vm591 = vmor %vm589, %vm590
      %v593 = vshrl.u32 %v557, 16
      %v595 = vrot.slane %v593, 4
      %v596 = vshll.u32 %v557, 16
      %v598 = vrot.slane %v596, 5
      %v599 = vor.u32 %v595, %v598
      %v600 = vrot.slane %v599, 4
      %v602 = vshll.u32 %v581, 16
      %v604 = vrot.slane %v602, 5
      %v605 = vsel %vm591, %v600, %v604
      %v607 = vshrl.u32 %v558, 16
      %v609 = vrot.slane %v607, 4
      %v610 = vshll.u32 %v558, 16
      %v612 = vrot.slane %v610, 5
      %v613 = vor.u32 %v609, %v612
      %v614 = vrot.slane %v613, 4
      %v616 = vshll.u32 %v582, 16
      %v618 = vrot.slane %v616, 5
      %v619 = vsel %vm591, %v614, %v618
      %v621 = vshrl.u32 %v559, 16
      %v623 = vrot.slane %v621, 4
      %v624 = vshll.u32 %v559, 16
      %v626 = vrot.slane %v624, 5
      %v627 = vor.u32 %v623, %v626
      %v628 = vrot.slane %v627, 4
      %v630 = vshll.u32 %v583, 16
      %v632 = vrot.slane %v630, 5
      %v633 = vsel %vm591, %v628, %v632
      %v635 = vshrl.u32 %v560, 16
      %v637 = vrot.slane %v635, 4
      %v638 = vshll.u32 %v560, 16
      %v640 = vrot.slane %v638, 5
      %v641 = vor.u32 %v637, %v640
      %v642 = vrot.slane %v641, 4
      %v644 = vshll.u32 %v584, 16
      %v646 = vrot.slane %v644, 5
      %v647 = vsel %vm591, %v642, %v646
      %v649 = vshrl.u32 %v561, 16
      %v651 = vrot.slane %v649, 4
      %v652 = vshll.u32 %v561, 16
      %v654 = vrot.slane %v652, 5
      %v655 = vor.u32 %v651, %v654
      %v656 = vrot.slane %v655, 4
      %v658 = vshll.u32 %v585, 16
      %v660 = vrot.slane %v658, 5
      %v661 = vsel %vm591, %v656, %v660
      %v663 = vshrl.u32 %v562, 16
      %v665 = vrot.slane %v663, 4
      %v666 = vshll.u32 %v562, 16
      %v668 = vrot.slane %v666, 5
      %v669 = vor.u32 %v665, %v668
      %v670 = vrot.slane %v669, 4
      %v672 = vshll.u32 %v586, 16
      %v674 = vrot.slane %v672, 5
      %v675 = vsel %vm591, %v670, %v674
      %v677 = vshrl.u32 %v563, 16
      %v679 = vrot.slane %v677, 4
      %v680 = vshll.u32 %v563, 16
      %v682 = vrot.slane %v680, 5
      %v683 = vor.u32 %v679, %v682
      %v684 = vrot.slane %v683, 4
      %v686 = vshll.u32 %v587, 16
      %v688 = vrot.slane %v686, 5
      %v689 = vsel %vm591, %v684, %v688
      %v691 = vshrl.u32 %v564, 16
      %v693 = vrot.slane %v691, 4
      %v694 = vshll.u32 %v564, 16
      %v696 = vrot.slane %v694, 5
      %v697 = vor.u32 %v693, %v696
      %v698 = vrot.slane %v697, 4
      %v700 = vshll.u32 %v588, 16
      %v702 = vrot.slane %v700, 5
      %v703 = vsel %vm591, %v698, %v702
      %v704 = vld [vmem:[%s1 + $0x40] sm:$0xf]
      %v705 = vld [vmem:[%s1 + $0x44] sm:$0xf]
      %v706 = vld [vmem:[%s1 + $0x48] sm:$0xf]
      %v707 = vld [vmem:[%s1 + $0x4c] sm:$0xf]
      %v708 = vld [vmem:[%s1 + $0x50] sm:$0xf]
      %v709 = vld [vmem:[%s1 + $0x54] sm:$0xf]
      %v710 = vld [vmem:[%s1 + $0x58] sm:$0xf]
      %v711 = vld [vmem:[%s1 + $0x5c] sm:$0xf]
      %v712 = vld [vmem:[%s1 + $0x60] sm:$0xf]
      %v713 = vld [vmem:[%s1 + $0x64] sm:$0xf]
      %v714 = vld [vmem:[%s1 + $0x68] sm:$0xf]
      %v715 = vld [vmem:[%s1 + $0x6c] sm:$0xf]
      %v716 = vld [vmem:[%s1 + $0x70] sm:$0xf]
      %v717 = vld [vmem:[%s1 + $0x74] sm:$0xf]
      %v718 = vld [vmem:[%s1 + $0x78] sm:$0xf]
      %v719 = vld [vmem:[%s1 + $0x7c] sm:$0xf]
      %v720 = vunpack.c.l.b16 %v605
      %v721 = vunpack.c.l.b16 %v619
      %v722 = vunpack.c.l.b16 %v633
      %v723 = vunpack.c.l.b16 %v647
      %v724 = vunpack.c.l.b16 %v661
      %v725 = vunpack.c.l.b16 %v675
      %v726 = vunpack.c.l.b16 %v689
      %v727 = vunpack.c.l.b16 %v703
      %v728 = vpack.c.b16 %v721, %v720
      %v729 = vpack.c.b16 %v723, %v722
      %v730 = vpack.c.b16 %v725, %v724
      %v731 = vpack.c.b16 %v727, %v726
      %v752 = vunpack.c.l.b16 %v704
      %v753 = vunpack.c.l.b16 %v705
      %v754 = vunpack.c.l.b16 %v706
      %v755 = vunpack.c.l.b16 %v707
      %v756 = vunpack.c.l.b16 %v708
      %v757 = vunpack.c.l.b16 %v709
      %v758 = vunpack.c.l.b16 %v710
      %v759 = vunpack.c.l.b16 %v711
      %v760 = vunpack.c.l.b16 %v712
      %v761 = vunpack.c.l.b16 %v713
      %v762 = vunpack.c.l.b16 %v714
      %v763 = vunpack.c.l.b16 %v715
      %v764 = vunpack.c.l.b16 %v716
      %v765 = vunpack.c.l.b16 %v717
      %v766 = vunpack.c.l.b16 %v718
      %v767 = vunpack.c.l.b16 %v719
      %v768 = vpack.c.b16 %v753, %v752
      %v769 = vpack.c.b16 %v755, %v754
      %v770 = vpack.c.b16 %v757, %v756
      %v771 = vpack.c.b16 %v759, %v758
      %v772 = vpack.c.b16 %v761, %v760
      %v773 = vpack.c.b16 %v763, %v762
      %v774 = vpack.c.b16 %v765, %v764
      %v775 = vpack.c.b16 %v767, %v766
      %784 = vmatprep.subr.bf16.mxu0 0
      %785 = vmatpush1.bf16.msra.mxu0 %v775
      %786 = vmatprep.subr.bf16.mxu0 0
      %787 = vmatpush1.bf16.msra.mxu0 %v774
      %788 = vmatprep.subr.bf16.mxu0 0
      %789 = vmatpush1.bf16.msra.mxu0 %v773
      %790 = vmatprep.subr.bf16.mxu0 0
      %791 = vmatpush1.bf16.msra.mxu0 %v772
      %792 = vmatprep.subr.bf16.mxu0 0
      %793 = vmatpush1.bf16.msra.mxu0 %v771
      %794 = vmatprep.subr.bf16.mxu0 0
      %795 = vmatpush1.bf16.msra.mxu0 %v770
      %796 = vmatprep.subr.bf16.mxu0 0
      %797 = vmatpush1.bf16.msra.mxu0 %v769
      %798 = vmatprep.subr.bf16.mxu0 0
      %799 = vmatpush1.bf16.msra.mxu0 %v768
      %800 = vmatprep.subr.bf16.mxu0 0
      %801 = vmatpush2.bf16.msra.mxu0 0
      %802 = vmatprep.subr.bf16.mxu0 0
      %803 = vmatpush2.bf16.msra.mxu0 0
      %804 = vmatprep.subr.bf16.mxu0 0
      %805 = vmatpush2.bf16.msra.mxu0 0
      %806 = vmatprep.subr.bf16.mxu0 0
      %807 = vmatpush2.bf16.msra.mxu0 0
      %808 = vmatprep.subr.bf16.mxu0 0
      %809 = vmatpush2.bf16.msra.mxu0 0
      %810 = vmatprep.subr.bf16.mxu0 0
      %811 = vmatpush2.bf16.msra.mxu0 0
      %812 = vmatprep.subr.bf16.mxu0 0
      %813 = vmatpush2.bf16.msra.mxu0 0
      %814 = vmatprep.subr.bf16.mxu0 0
      %815 = vmatpush2.bf16.msra.mxu0 0
      %816 = vmatprep.mubr.bf16.mxu0 0
      %817 = vmatmul.mubr.bf16.gmra.mxu0 %v728
      %v818 = vpop.f32.mrf.mxu0
      %v819 = vadd.f32 0.0, %v818
      %v820 = vpop.f32.mrf.mxu0
      %v821 = vpop.f32.mrf.mxu0
      %v822 = vadd.f32 0.0, %v821
      %v823 = vpop.f32.mrf.mxu0
      %824 = vmatprep.mubr.bf16.mxu0 0
      %825 = vmatmul.mubr.bf16.gmra.mxu0 %v729
      %v826 = vpop.f32.mrf.mxu0
      %v827 = vadd.f32 0.0, %v826
      %v828 = vpop.f32.mrf.mxu0
      %v829 = vpop.f32.mrf.mxu0
      %v830 = vadd.f32 0.0, %v829
      %v831 = vpop.f32.mrf.mxu0
      %832 = vmatprep.mubr.bf16.mxu0 0
      %833 = vmatmul.mubr.bf16.gmra.mxu0 %v730
      %v834 = vpop.f32.mrf.mxu0
      %v835 = vadd.f32 0.0, %v834
      %v836 = vpop.f32.mrf.mxu0
      %v837 = vpop.f32.mrf.mxu0
      %v838 = vadd.f32 0.0, %v837
      %v839 = vpop.f32.mrf.mxu0
      %840 = vmatprep.mubr.bf16.mxu0 0
      %841 = vmatmul.mubr.bf16.gmra.mxu0 %v731
      %v842 = vpop.f32.mrf.mxu0
      %v843 = vadd.f32 0.0, %v842
      %v844 = vpop.f32.mrf.mxu0
      %v845 = vpop.f32.mrf.mxu0
      %v846 = vadd.f32 0.0, %v845
      %v847 = vpop.f32.mrf.mxu0
      %848 = vdwg.mxu0
      %v857 = vunpack.c.l.b16 %v557
      %v858 = vunpack.c.l.b16 %v558
      %v859 = vunpack.c.l.b16 %v559
      %v860 = vunpack.c.l.b16 %v560
      %v861 = vunpack.c.l.b16 %v561
      %v862 = vunpack.c.l.b16 %v562
      %v863 = vunpack.c.l.b16 %v563
      %v864 = vunpack.c.l.b16 %v564
      %v865 = vpack.c.b16 %v858, %v857
      %v866 = vpack.c.b16 %v860, %v859
      %v867 = vpack.c.b16 %v862, %v861
      %v868 = vpack.c.b16 %v864, %v863
      %v889 = vunpack.c.l.b16 %v565
      %v890 = vunpack.c.l.b16 %v566
      %v891 = vunpack.c.l.b16 %v567
      %v892 = vunpack.c.l.b16 %v568
      %v893 = vunpack.c.l.b16 %v569
      %v894 = vunpack.c.l.b16 %v570
      %v895 = vunpack.c.l.b16 %v571
      %v896 = vunpack.c.l.b16 %v572
      %v897 = vunpack.c.l.b16 %v573
      %v898 = vunpack.c.l.b16 %v574
      %v899 = vunpack.c.l.b16 %v575
      %v900 = vunpack.c.l.b16 %v576
      %v901 = vunpack.c.l.b16 %v577
      %v902 = vunpack.c.l.b16 %v578
      %v903 = vunpack.c.l.b16 %v579
      %v904 = vunpack.c.l.b16 %v580
      %v905 = vpack.c.b16 %v890, %v889
      %v906 = vpack.c.b16 %v892, %v891
      %v907 = vpack.c.b16 %v894, %v893
      %v908 = vpack.c.b16 %v896, %v895
      %v909 = vpack.c.b16 %v898, %v897
      %v910 = vpack.c.b16 %v900, %v899
      %v911 = vpack.c.b16 %v902, %v901
      %v912 = vpack.c.b16 %v904, %v903
      %921 = vmatprep.subr.bf16.mxu0 0
      %922 = vmatpush1.bf16.msra.mxu0 %v912
      %923 = vmatprep.subr.bf16.mxu0 0
      %924 = vmatpush1.bf16.msra.mxu0 %v911
      %925 = vmatprep.subr.bf16.mxu0 0
      %926 = vmatpush1.bf16.msra.mxu0 %v910
      %927 = vmatprep.subr.bf16.mxu0 0
      %928 = vmatpush1.bf16.msra.mxu0 %v909
      %929 = vmatprep.subr.bf16.mxu0 0
      %930 = vmatpush1.bf16.msra.mxu0 %v908
      %931 = vmatprep.subr.bf16.mxu0 0
      %932 = vmatpush1.bf16.msra.mxu0 %v907
      %933 = vmatprep.subr.bf16.mxu0 0
      %934 = vmatpush1.bf16.msra.mxu0 %v906
      %935 = vmatprep.subr.bf16.mxu0 0
      %936 = vmatpush1.bf16.msra.mxu0 %v905
      %937 = vmatprep.subr.bf16.mxu0 0
      %938 = vmatpush2.bf16.msra.mxu0 0
      %939 = vmatprep.subr.bf16.mxu0 0
      %940 = vmatpush2.bf16.msra.mxu0 0
      %941 = vmatprep.subr.bf16.mxu0 0
      %942 = vmatpush2.bf16.msra.mxu0 0
      %943 = vmatprep.subr.bf16.mxu0 0
      %944 = vmatpush2.bf16.msra.mxu0 0
      %945 = vmatprep.subr.bf16.mxu0 0
      %946 = vmatpush2.bf16.msra.mxu0 0
      %947 = vmatprep.subr.bf16.mxu0 0
      %948 = vmatpush2.bf16.msra.mxu0 0
      %949 = vmatprep.subr.bf16.mxu0 0
      %950 = vmatpush2.bf16.msra.mxu0 0
      %951 = vmatprep.subr.bf16.mxu0 0
      %952 = vmatpush2.bf16.msra.mxu0 0
      %953 = vmatprep.mubr.bf16.mxu0 0
      %954 = vmatmul.mubr.bf16.gmra.mxu0 %v865
      %v955 = vpop.f32.mrf.mxu0
      %v956 = vadd.f32 %v819, %v955
      %v957 = vpop.f32.mrf.mxu0
      %v958 = vpop.f32.mrf.mxu0
      %v959 = vadd.f32 %v822, %v958
      %v960 = vpop.f32.mrf.mxu0
      %961 = vmatprep.mubr.bf16.mxu0 0
      %962 = vmatmul.mubr.bf16.gmra.mxu0 %v866
      %v963 = vpop.f32.mrf.mxu0
      %v964 = vadd.f32 %v827, %v963
      %v965 = vpop.f32.mrf.mxu0
      %v966 = vpop.f32.mrf.mxu0
      %v967 = vadd.f32 %v830, %v966
      %v968 = vpop.f32.mrf.mxu0
      %969 = vmatprep.mubr.bf16.mxu0 0
      %970 = vmatmul.mubr.bf16.gmra.mxu0 %v867
      %v971 = vpop.f32.mrf.mxu0
      %v972 = vadd.f32 %v835, %v971
      %v973 = vpop.f32.mrf.mxu0
      %v974 = vpop.f32.mrf.mxu0
      %v975 = vadd.f32 %v838, %v974
      %v976 = vpop.f32.mrf.mxu0
      %977 = vmatprep.mubr.bf16.mxu0 0
      %978 = vmatmul.mubr.bf16.gmra.mxu0 %v868
      %v979 = vpop.f32.mrf.mxu0
      %v980 = vadd.f32 %v843, %v979
      %v981 = vpop.f32.mrf.mxu0
      %v982 = vpop.f32.mrf.mxu0
      %v983 = vadd.f32 %v846, %v982
      %v984 = vpop.f32.mrf.mxu0
      %985 = vdwg.mxu0
      %v986 = vld [vmem:[#allocation2] sm:$0xe]
      %v987 = vld [vmem:[#allocation2 + $0x8] sm:$0xe]
      %v988 = vld [vmem:[#allocation2 + $0x10] sm:$0xe]
      %v989 = vld [vmem:[#allocation2 + $0x18] sm:$0xe]
      %v990 = vld [vmem:[#allocation2 + $0x20] sm:$0xe]
      %v991 = vld [vmem:[#allocation2 + $0x28] sm:$0xe]
      %v992 = vld [vmem:[#allocation2 + $0x30] sm:$0xe]
      %v993 = vld [vmem:[#allocation2 + $0x38] sm:$0xe]
      %vm1010 = vcmask 1042432
      %vm1011 = vcmask 1046532
      %vm1012 = vmor %vm1010, %vm1011
      %v1013 = vrot.slane %v986, 5
      %v1014 = vrot.slane %v1013, 4
      %v1015 = vrot.slane %v581, 5
      %v1016 = vsel %vm1012, %v1014, %v1015
      %v1017 = vrot.slane %v987, 5
      %v1018 = vrot.slane %v1017, 4
      %v1019 = vrot.slane %v582, 5
      %v1020 = vsel %vm1012, %v1018, %v1019
      %v1021 = vrot.slane %v988, 5
      %v1022 = vrot.slane %v1021, 4
      %v1023 = vrot.slane %v583, 5
      %v1024 = vsel %vm1012, %v1022, %v1023
      %v1025 = vrot.slane %v989, 5
      %v1026 = vrot.slane %v1025, 4
      %v1027 = vrot.slane %v584, 5
      %v1028 = vsel %vm1012, %v1026, %v1027
      %v1029 = vrot.slane %v990, 5
      %v1030 = vrot.slane %v1029, 4
      %v1031 = vrot.slane %v585, 5
      %v1032 = vsel %vm1012, %v1030, %v1031
      %v1033 = vrot.slane %v991, 5
      %v1034 = vrot.slane %v1033, 4
      %v1035 = vrot.slane %v586, 5
      %v1036 = vsel %vm1012, %v1034, %v1035
      %v1037 = vrot.slane %v992, 5
      %v1038 = vrot.slane %v1037, 4
      %v1039 = vrot.slane %v587, 5
      %v1040 = vsel %vm1012, %v1038, %v1039
      %v1041 = vrot.slane %v993, 5
      %v1042 = vrot.slane %v1041, 4
      %v1043 = vrot.slane %v588, 5
      %v1044 = vsel %vm1012, %v1042, %v1043
      %v1045 = vld [vmem:[%s1 + $0x80] sm:$0xf]
      %v1046 = vld [vmem:[%s1 + $0x84] sm:$0xf]
      %v1047 = vld [vmem:[%s1 + $0x88] sm:$0xf]
      %v1048 = vld [vmem:[%s1 + $0x8c] sm:$0xf]
      %v1049 = vld [vmem:[%s1 + $0x90] sm:$0xf]
      %v1050 = vld [vmem:[%s1 + $0x94] sm:$0xf]
      %v1051 = vld [vmem:[%s1 + $0x98] sm:$0xf]
      %v1052 = vld [vmem:[%s1 + $0x9c] sm:$0xf]
      %v1053 = vld [vmem:[%s1 + $0xa0] sm:$0xf]
      %v1054 = vld [vmem:[%s1 + $0xa4] sm:$0xf]
      %v1055 = vld [vmem:[%s1 + $0xa8] sm:$0xf]
      %v1056 = vld [vmem:[%s1 + $0xac] sm:$0xf]
      %v1057 = vld [vmem:[%s1 + $0xb0] sm:$0xf]
      %v1058 = vld [vmem:[%s1 + $0xb4] sm:$0xf]
      %v1059 = vld [vmem:[%s1 + $0xb8] sm:$0xf]
      %v1060 = vld [vmem:[%s1 + $0xbc] sm:$0xf]
      %v1061 = vunpack.c.l.b16 %v1016
      %v1062 = vunpack.c.l.b16 %v1020
      %v1063 = vunpack.c.l.b16 %v1024
      %v1064 = vunpack.c.l.b16 %v1028
      %v1065 = vunpack.c.l.b16 %v1032
      %v1066 = vunpack.c.l.b16 %v1036
      %v1067 = vunpack.c.l.b16 %v1040
      %v1068 = vunpack.c.l.b16 %v1044
      %v1069 = vpack.c.b16 %v1062, %v1061
      %v1070 = vpack.c.b16 %v1064, %v1063
      %v1071 = vpack.c.b16 %v1066, %v1065
      %v1072 = vpack.c.b16 %v1068, %v1067
      %v1093 = vunpack.c.l.b16 %v1045
      %v1094 = vunpack.c.l.b16 %v1046
      %v1095 = vunpack.c.l.b16 %v1047
      %v1096 = vunpack.c.l.b16 %v1048
      %v1097 = vunpack.c.l.b16 %v1049
      %v1098 = vunpack.c.l.b16 %v1050
      %v1099 = vunpack.c.l.b16 %v1051
      %v1100 = vunpack.c.l.b16 %v1052
      %v1101 = vunpack.c.l.b16 %v1053
      %v1102 = vunpack.c.l.b16 %v1054
      %v1103 = vunpack.c.l.b16 %v1055
      %v1104 = vunpack.c.l.b16 %v1056
      %v1105 = vunpack.c.l.b16 %v1057
      %v1106 = vunpack.c.l.b16 %v1058
      %v1107 = vunpack.c.l.b16 %v1059
      %v1108 = vunpack.c.l.b16 %v1060
      %v1109 = vpack.c.b16 %v1094, %v1093
      %v1110 = vpack.c.b16 %v1096, %v1095
      %v1111 = vpack.c.b16 %v1098, %v1097
      %v1112 = vpack.c.b16 %v1100, %v1099
      %v1113 = vpack.c.b16 %v1102, %v1101
      %v1114 = vpack.c.b16 %v1104, %v1103
      %v1115 = vpack.c.b16 %v1106, %v1105
      %v1116 = vpack.c.b16 %v1108, %v1107
      %1125 = vmatprep.subr.bf16.mxu0 0
      %1126 = vmatpush1.bf16.msra.mxu0 %v1116
      %1127 = vmatprep.subr.bf16.mxu0 0
      %1128 = vmatpush1.bf16.msra.mxu0 %v1115
      %1129 = vmatprep.subr.bf16.mxu0 0
      %1130 = vmatpush1.bf16.msra.mxu0 %v1114
      %1131 = vmatprep.subr.bf16.mxu0 0
      %1132 = vmatpush1.bf16.msra.mxu0 %v1113
      %1133 = vmatprep.subr.bf16.mxu0 0
      %1134 = vmatpush1.bf16.msra.mxu0 %v1112
      %1135 = vmatprep.subr.bf16.mxu0 0
      %1136 = vmatpush1.bf16.msra.mxu0 %v1111
      %1137 = vmatprep.subr.bf16.mxu0 0
      %1138 = vmatpush1.bf16.msra.mxu0 %v1110
      %1139 = vmatprep.subr.bf16.mxu0 0
      %1140 = vmatpush1.bf16.msra.mxu0 %v1109
      %1141 = vmatprep.subr.bf16.mxu0 0
      %1142 = vmatpush2.bf16.msra.mxu0 0
      %1143 = vmatprep.subr.bf16.mxu0 0
      %1144 = vmatpush2.bf16.msra.mxu0 0
      %1145 = vmatprep.subr.bf16.mxu0 0
      %1146 = vmatpush2.bf16.msra.mxu0 0
      %1147 = vmatprep.subr.bf16.mxu0 0
      %1148 = vmatpush2.bf16.msra.mxu0 0
      %1149 = vmatprep.subr.bf16.mxu0 0
      %1150 = vmatpush2.bf16.msra.mxu0 0
      %1151 = vmatprep.subr.bf16.mxu0 0
      %1152 = vmatpush2.bf16.msra.mxu0 0
      %1153 = vmatprep.subr.bf16.mxu0 0
      %1154 = vmatpush2.bf16.msra.mxu0 0
      %1155 = vmatprep.subr.bf16.mxu0 0
      %1156 = vmatpush2.bf16.msra.mxu0 0
      %1157 = vmatprep.mubr.bf16.mxu0 0
      %1158 = vmatmul.mubr.bf16.gmra.mxu0 %v1069
      %v1159 = vpop.f32.mrf.mxu0
      %v1160 = vadd.f32 0.0, %v1159
      %v1161 = vpop.f32.mrf.mxu0
      %v1162 = vpop.f32.mrf.mxu0
      %v1163 = vadd.f32 0.0, %v1162
      %v1164 = vpop.f32.mrf.mxu0
      %1165 = vmatprep.mubr.bf16.mxu0 0
      %1166 = vmatmul.mubr.bf16.gmra.mxu0 %v1070
      %v1167 = vpop.f32.mrf.mxu0
      %v1168 = vadd.f32 0.0, %v1167
      %v1169 = vpop.f32.mrf.mxu0
      %v1170 = vpop.f32.mrf.mxu0
      %v1171 = vadd.f32 0.0, %v1170
      %v1172 = vpop.f32.mrf.mxu0
      %1173 = vmatprep.mubr.bf16.mxu0 0
      %1174 = vmatmul.mubr.bf16.gmra.mxu0 %v1071
      %v1175 = vpop.f32.mrf.mxu0
      %v1176 = vadd.f32 0.0, %v1175
      %v1177 = vpop.f32.mrf.mxu0
      %v1178 = vpop.f32.mrf.mxu0
      %v1179 = vadd.f32 0.0, %v1178
      %v1180 = vpop.f32.mrf.mxu0
      %1181 = vmatprep.mubr.bf16.mxu0 0
      %1182 = vmatmul.mubr.bf16.gmra.mxu0 %v1072
      %v1183 = vpop.f32.mrf.mxu0
      %v1184 = vadd.f32 0.0, %v1183
      %v1185 = vpop.f32.mrf.mxu0
      %v1186 = vpop.f32.mrf.mxu0
      %v1187 = vadd.f32 0.0, %v1186
      %v1188 = vpop.f32.mrf.mxu0
      %1189 = vdwg.mxu0
      %v1190 = vadd.f32 %v956, %v1160
      %v1191 = vadd.f32 %v959, %v1163
      %v1192 = vadd.f32 %v964, %v1168
      %v1193 = vadd.f32 %v967, %v1171
      %v1194 = vadd.f32 %v972, %v1176
      %v1195 = vadd.f32 %v975, %v1179
      %v1196 = vadd.f32 %v980, %v1184
      %v1197 = vadd.f32 %v983, %v1187
      %v1198 = vld [vmem:[%s506] sm:$0xf]
      %v1199 = vld [vmem:[%s506 + $0x8] sm:$0xf]
      %v1200 = vld [vmem:[%s506 + $0x10] sm:$0xf]
      %v1201 = vld [vmem:[%s506 + $0x18] sm:$0xf]
      %v1202 = vld [vmem:[%s506 + $0x20] sm:$0xf]
      %v1203 = vld [vmem:[%s506 + $0x28] sm:$0xf]
      %v1204 = vld [vmem:[%s506 + $0x30] sm:$0xf]
      %v1205 = vld [vmem:[%s506 + $0x38] sm:$0xf]
      %v1206 = vld [vmem:[%s1 + $0xc0] sm:$0xf]
      %v1207 = vld [vmem:[%s1 + $0xc4] sm:$0xf]
      %v1208 = vld [vmem:[%s1 + $0xc8] sm:$0xf]
      %v1209 = vld [vmem:[%s1 + $0xcc] sm:$0xf]
      %v1210 = vld [vmem:[%s1 + $0xd0] sm:$0xf]
      %v1211 = vld [vmem:[%s1 + $0xd4] sm:$0xf]
      %v1212 = vld [vmem:[%s1 + $0xd8] sm:$0xf]
      %v1213 = vld [vmem:[%s1 + $0xdc] sm:$0xf]
      %v1214 = vld [vmem:[%s1 + $0xe0] sm:$0xf]
      %v1215 = vld [vmem:[%s1 + $0xe4] sm:$0xf]
      %v1216 = vld [vmem:[%s1 + $0xe8] sm:$0xf]
      %v1217 = vld [vmem:[%s1 + $0xec] sm:$0xf]
      %v1218 = vld [vmem:[%s1 + $0xf0] sm:$0xf]
      %v1219 = vld [vmem:[%s1 + $0xf4] sm:$0xf]
      %v1220 = vld [vmem:[%s1 + $0xf8] sm:$0xf]
      %v1221 = vld [vmem:[%s1 + $0xfc] sm:$0xf]
      %v1230 = vunpack.c.l.b16 %v1198
      %v1231 = vunpack.c.l.b16 %v1199
      %v1232 = vunpack.c.l.b16 %v1200
      %v1233 = vunpack.c.l.b16 %v1201
      %v1234 = vunpack.c.l.b16 %v1202
      %v1235 = vunpack.c.l.b16 %v1203
      %v1236 = vunpack.c.l.b16 %v1204
      %v1237 = vunpack.c.l.b16 %v1205
      %v1238 = vpack.c.b16 %v1231, %v1230
      %v1239 = vpack.c.b16 %v1233, %v1232
      %v1240 = vpack.c.b16 %v1235, %v1234
      %v1241 = vpack.c.b16 %v1237, %v1236
      %v1262 = vunpack.c.l.b16 %v1206
      %v1263 = vunpack.c.l.b16 %v1207
      %v1264 = vunpack.c.l.b16 %v1208
      %v1265 = vunpack.c.l.b16 %v1209
      %v1266 = vunpack.c.l.b16 %v1210
      %v1267 = vunpack.c.l.b16 %v1211
      %v1268 = vunpack.c.l.b16 %v1212
      %v1269 = vunpack.c.l.b16 %v1213
      %v1270 = vunpack.c.l.b16 %v1214
      %v1271 = vunpack.c.l.b16 %v1215
      %v1272 = vunpack.c.l.b16 %v1216
      %v1273 = vunpack.c.l.b16 %v1217
      %v1274 = vunpack.c.l.b16 %v1218
      %v1275 = vunpack.c.l.b16 %v1219
      %v1276 = vunpack.c.l.b16 %v1220
      %v1277 = vunpack.c.l.b16 %v1221
      %v1278 = vpack.c.b16 %v1263, %v1262
      %v1279 = vpack.c.b16 %v1265, %v1264
      %v1280 = vpack.c.b16 %v1267, %v1266
      %v1281 = vpack.c.b16 %v1269, %v1268
      %v1282 = vpack.c.b16 %v1271, %v1270
      %v1283 = vpack.c.b16 %v1273, %v1272
      %v1284 = vpack.c.b16 %v1275, %v1274
      %v1285 = vpack.c.b16 %v1277, %v1276
      %1294 = vmatprep.subr.bf16.mxu0 0
      %1295 = vmatpush1.bf16.msra.mxu0 %v1285
      %1296 = vmatprep.subr.bf16.mxu0 0
      %1297 = vmatpush1.bf16.msra.mxu0 %v1284
      %1298 = vmatprep.subr.bf16.mxu0 0
      %1299 = vmatpush1.bf16.msra.mxu0 %v1283
      %1300 = vmatprep.subr.bf16.mxu0 0
      %1301 = vmatpush1.bf16.msra.mxu0 %v1282
      %1302 = vmatprep.subr.bf16.mxu0 0
      %1303 = vmatpush1.bf16.msra.mxu0 %v1281
      %1304 = vmatprep.subr.bf16.mxu0 0
      %1305 = vmatpush1.bf16.msra.mxu0 %v1280
      %1306 = vmatprep.subr.bf16.mxu0 0
      %1307 = vmatpush1.bf16.msra.mxu0 %v1279
      %1308 = vmatprep.subr.bf16.mxu0 0
      %1309 = vmatpush1.bf16.msra.mxu0 %v1278
      %1310 = vmatprep.subr.bf16.mxu0 0
      %1311 = vmatpush2.bf16.msra.mxu0 0
      %1312 = vmatprep.subr.bf16.mxu0 0
      %1313 = vmatpush2.bf16.msra.mxu0 0
      %1314 = vmatprep.subr.bf16.mxu0 0
      %1315 = vmatpush2.bf16.msra.mxu0 0
      %1316 = vmatprep.subr.bf16.mxu0 0
      %1317 = vmatpush2.bf16.msra.mxu0 0
      %1318 = vmatprep.subr.bf16.mxu0 0
      %1319 = vmatpush2.bf16.msra.mxu0 0
      %1320 = vmatprep.subr.bf16.mxu0 0
      %1321 = vmatpush2.bf16.msra.mxu0 0
      %1322 = vmatprep.subr.bf16.mxu0 0
      %1323 = vmatpush2.bf16.msra.mxu0 0
      %1324 = vmatprep.subr.bf16.mxu0 0
      %1325 = vmatpush2.bf16.msra.mxu0 0
      %1326 = vmatprep.mubr.bf16.mxu0 0
      %1327 = vmatmul.mubr.bf16.gmra.mxu0 %v1238
      %v1328 = vpop.f32.mrf.mxu0
      %v1329 = vadd.f32 0.0, %v1328
      %v1330 = vpop.f32.mrf.mxu0
      %v1331 = vpop.f32.mrf.mxu0
      %v1332 = vadd.f32 0.0, %v1331
      %v1333 = vpop.f32.mrf.mxu0
      %1334 = vmatprep.mubr.bf16.mxu0 0
      %1335 = vmatmul.mubr.bf16.gmra.mxu0 %v1239
      %v1336 = vpop.f32.mrf.mxu0
      %v1337 = vadd.f32 0.0, %v1336
      %v1338 = vpop.f32.mrf.mxu0
      %v1339 = vpop.f32.mrf.mxu0
      %v1340 = vadd.f32 0.0, %v1339
      %v1341 = vpop.f32.mrf.mxu0
      %1342 = vmatprep.mubr.bf16.mxu0 0
      %1343 = vmatmul.mubr.bf16.gmra.mxu0 %v1240
      %v1344 = vpop.f32.mrf.mxu0
      %v1345 = vadd.f32 0.0, %v1344
      %v1346 = vpop.f32.mrf.mxu0
      %v1347 = vpop.f32.mrf.mxu0
      %v1348 = vadd.f32 0.0, %v1347
      %v1349 = vpop.f32.mrf.mxu0
      %1350 = vmatprep.mubr.bf16.mxu0 0
      %1351 = vmatmul.mubr.bf16.gmra.mxu0 %v1241
      %v1352 = vpop.f32.mrf.mxu0
      %v1353 = vadd.f32 0.0, %v1352
      %v1354 = vpop.f32.mrf.mxu0
      %v1355 = vpop.f32.mrf.mxu0
      %v1356 = vadd.f32 0.0, %v1355
      %v1357 = vpop.f32.mrf.mxu0
      %1358 = vdwg.mxu0
      %v1359 = vadd.f32 %v1190, %v1329
      %v1360 = vadd.f32 %v1191, %v1332
      %v1361 = vadd.f32 %v1192, %v1337
      %v1362 = vadd.f32 %v1193, %v1340
      %v1363 = vadd.f32 %v1194, %v1345
      %v1364 = vadd.f32 %v1195, %v1348
      %v1365 = vadd.f32 %v1196, %v1353
      %v1366 = vadd.f32 %v1197, %v1356
      %v1367 = vld [vmem:[%s506] sm:$0xf]
      %v1368 = vld [vmem:[%s506 + $0x4] sm:$0x1]
      %v1369 = vld [vmem:[%s506 + $0x8] sm:$0xf]
      %v1370 = vld [vmem:[%s506 + $0xc] sm:$0x1]
      %v1371 = vld [vmem:[%s506 + $0x10] sm:$0xf]
      %v1372 = vld [vmem:[%s506 + $0x14] sm:$0x1]
      %v1373 = vld [vmem:[%s506 + $0x18] sm:$0xf]
      %v1374 = vld [vmem:[%s506 + $0x1c] sm:$0x1]
      %v1375 = vld [vmem:[%s506 + $0x20] sm:$0xf]
      %v1376 = vld [vmem:[%s506 + $0x24] sm:$0x1]
      %v1377 = vld [vmem:[%s506 + $0x28] sm:$0xf]
      %v1378 = vld [vmem:[%s506 + $0x2c] sm:$0x1]
      %v1379 = vld [vmem:[%s506 + $0x30] sm:$0xf]
      %v1380 = vld [vmem:[%s506 + $0x34] sm:$0x1]
      %v1381 = vld [vmem:[%s506 + $0x38] sm:$0xf]
      %v1382 = vld [vmem:[%s506 + $0x3c] sm:$0x1]
      %v1384 = vshrl.u32 %v1367, 16
      %v1386 = vrot.slane %v1384, 4
      %v1387 = vshll.u32 %v1367, 16
      %v1389 = vrot.slane %v1387, 5
      %v1390 = vor.u32 %v1386, %v1389
      %v1391 = vrot.slane %v1390, 4
      %v1393 = vshll.u32 %v1368, 16
      %v1395 = vrot.slane %v1393, 5
      %v1396 = vsel %vm591, %v1391, %v1395
      %v1398 = vshrl.u32 %v1369, 16
      %v1400 = vrot.slane %v1398, 4
      %v1401 = vshll.u32 %v1369, 16
      %v1403 = vrot.slane %v1401, 5
      %v1404 = vor.u32 %v1400, %v1403
      %v1405 = vrot.slane %v1404, 4
      %v1407 = vshll.u32 %v1370, 16
      %v1409 = vrot.slane %v1407, 5
      %v1410 = vsel %vm591, %v1405, %v1409
      %v1412 = vshrl.u32 %v1371, 16
      %v1414 = vrot.slane %v1412, 4
      %v1415 = vshll.u32 %v1371, 16
      %v1417 = vrot.slane %v1415, 5
      %v1418 = vor.u32 %v1414, %v1417
      %v1419 = vrot.slane %v1418, 4
      %v1421 = vshll.u32 %v1372, 16
      %v1423 = vrot.slane %v1421, 5
      %v1424 = vsel %vm591, %v1419, %v1423
      %v1426 = vshrl.u32 %v1373, 16
      %v1428 = vrot.slane %v1426, 4
      %v1429 = vshll.u32 %v1373, 16
      %v1431 = vrot.slane %v1429, 5
      %v1432 = vor.u32 %v1428, %v1431
      %v1433 = vrot.slane %v1432, 4
      %v1435 = vshll.u32 %v1374, 16
      %v1437 = vrot.slane %v1435, 5
      %v1438 = vsel %vm591, %v1433, %v1437
      %v1440 = vshrl.u32 %v1375, 16
      %v1442 = vrot.slane %v1440, 4
      %v1443 = vshll.u32 %v1375, 16
      %v1445 = vrot.slane %v1443, 5
      %v1446 = vor.u32 %v1442, %v1445
      %v1447 = vrot.slane %v1446, 4
      %v1449 = vshll.u32 %v1376, 16
      %v1451 = vrot.slane %v1449, 5
      %v1452 = vsel %vm591, %v1447, %v1451
      %v1454 = vshrl.u32 %v1377, 16
      %v1456 = vrot.slane %v1454, 4
      %v1457 = vshll.u32 %v1377, 16
      %v1459 = vrot.slane %v1457, 5
      %v1460 = vor.u32 %v1456, %v1459
      %v1461 = vrot.slane %v1460, 4
      %v1463 = vshll.u32 %v1378, 16
      %v1465 = vrot.slane %v1463, 5
      %v1466 = vsel %vm591, %v1461, %v1465
      %v1468 = vshrl.u32 %v1379, 16
      %v1470 = vrot.slane %v1468, 4
      %v1471 = vshll.u32 %v1379, 16
      %v1473 = vrot.slane %v1471, 5
      %v1474 = vor.u32 %v1470, %v1473
      %v1475 = vrot.slane %v1474, 4
      %v1477 = vshll.u32 %v1380, 16
      %v1479 = vrot.slane %v1477, 5
      %v1480 = vsel %vm591, %v1475, %v1479
      %v1482 = vshrl.u32 %v1381, 16
      %v1484 = vrot.slane %v1482, 4
      %v1485 = vshll.u32 %v1381, 16
      %v1487 = vrot.slane %v1485, 5
      %v1488 = vor.u32 %v1484, %v1487
      %v1489 = vrot.slane %v1488, 4
      %v1491 = vshll.u32 %v1382, 16
      %v1493 = vrot.slane %v1491, 5
      %v1494 = vsel %vm591, %v1489, %v1493
      %v1495 = vld [vmem:[%s1 + $0x100] sm:$0xf]
      %v1496 = vld [vmem:[%s1 + $0x104] sm:$0xf]
      %v1497 = vld [vmem:[%s1 + $0x108] sm:$0xf]
      %v1498 = vld [vmem:[%s1 + $0x10c] sm:$0xf]
      %v1499 = vld [vmem:[%s1 + $0x110] sm:$0xf]
      %v1500 = vld [vmem:[%s1 + $0x114] sm:$0xf]
      %v1501 = vld [vmem:[%s1 + $0x118] sm:$0xf]
      %v1502 = vld [vmem:[%s1 + $0x11c] sm:$0xf]
      %v1503 = vld [vmem:[%s1 + $0x120] sm:$0xf]
      %v1504 = vld [vmem:[%s1 + $0x124] sm:$0xf]
      %v1505 = vld [vmem:[%s1 + $0x128] sm:$0xf]
      %v1506 = vld [vmem:[%s1 + $0x12c] sm:$0xf]
      %v1507 = vld [vmem:[%s1 + $0x130] sm:$0xf]
      %v1508 = vld [vmem:[%s1 + $0x134] sm:$0xf]
      %v1509 = vld [vmem:[%s1 + $0x138] sm:$0xf]
      %v1510 = vld [vmem:[%s1 + $0x13c] sm:$0xf]
      %v1511 = vunpack.c.l.b16 %v1396
      %v1512 = vunpack.c.l.b16 %v1410
      %v1513 = vunpack.c.l.b16 %v1424
      %v1514 = vunpack.c.l.b16 %v1438
      %v1515 = vunpack.c.l.b16 %v1452
      %v1516 = vunpack.c.l.b16 %v1466
      %v1517 = vunpack.c.l.b16 %v1480
      %v1518 = vunpack.c.l.b16 %v1494
      %v1519 = vpack.c.b16 %v1512, %v1511
      %v1520 = vpack.c.b16 %v1514, %v1513
      %v1521 = vpack.c.b16 %v1516, %v1515
      %v1522 = vpack.c.b16 %v1518, %v1517
      %v1543 = vunpack.c.l.b16 %v1495
      %v1544 = vunpack.c.l.b16 %v1496
      %v1545 = vunpack.c.l.b16 %v1497
      %v1546 = vunpack.c.l.b16 %v1498
      %v1547 = vunpack.c.l.b16 %v1499
      %v1548 = vunpack.c.l.b16 %v1500
      %v1549 = vunpack.c.l.b16 %v1501
      %v1550 = vunpack.c.l.b16 %v1502
      %v1551 = vunpack.c.l.b16 %v1503
      %v1552 = vunpack.c.l.b16 %v1504
      %v1553 = vunpack.c.l.b16 %v1505
      %v1554 = vunpack.c.l.b16 %v1506
      %v1555 = vunpack.c.l.b16 %v1507
      %v1556 = vunpack.c.l.b16 %v1508
      %v1557 = vunpack.c.l.b16 %v1509
      %v1558 = vunpack.c.l.b16 %v1510
      %v1559 = vpack.c.b16 %v1544, %v1543
      %v1560 = vpack.c.b16 %v1546, %v1545
      %v1561 = vpack.c.b16 %v1548, %v1547
      %v1562 = vpack.c.b16 %v1550, %v1549
      %v1563 = vpack.c.b16 %v1552, %v1551
      %v1564 = vpack.c.b16 %v1554, %v1553
      %v1565 = vpack.c.b16 %v1556, %v1555
      %v1566 = vpack.c.b16 %v1558, %v1557
      %1575 = vmatprep.subr.bf16.mxu0 0
      %1576 = vmatpush1.bf16.msra.mxu0 %v1566
      %1577 = vmatprep.subr.bf16.mxu0 0
      %1578 = vmatpush1.bf16.msra.mxu0 %v1565
      %1579 = vmatprep.subr.bf16.mxu0 0
      %1580 = vmatpush1.bf16.msra.mxu0 %v1564
      %1581 = vmatprep.subr.bf16.mxu0 0
      %1582 = vmatpush1.bf16.msra.mxu0 %v1563
      %1583 = vmatprep.subr.bf16.mxu0 0
      %1584 = vmatpush1.bf16.msra.mxu0 %v1562
      %1585 = vmatprep.subr.bf16.mxu0 0
      %1586 = vmatpush1.bf16.msra.mxu0 %v1561
      %1587 = vmatprep.subr.bf16.mxu0 0
      %1588 = vmatpush1.bf16.msra.mxu0 %v1560
      %1589 = vmatprep.subr.bf16.mxu0 0
      %1590 = vmatpush1.bf16.msra.mxu0 %v1559
      %1591 = vmatprep.subr.bf16.mxu0 0
      %1592 = vmatpush2.bf16.msra.mxu0 0
      %1593 = vmatprep.subr.bf16.mxu0 0
      %1594 = vmatpush2.bf16.msra.mxu0 0
      %1595 = vmatprep.subr.bf16.mxu0 0
      %1596 = vmatpush2.bf16.msra.mxu0 0
      %1597 = vmatprep.subr.bf16.mxu0 0
      %1598 = vmatpush2.bf16.msra.mxu0 0
      %1599 = vmatprep.subr.bf16.mxu0 0
      %1600 = vmatpush2.bf16.msra.mxu0 0
      %1601 = vmatprep.subr.bf16.mxu0 0
      %1602 = vmatpush2.bf16.msra.mxu0 0
      %1603 = vmatprep.subr.bf16.mxu0 0
      %1604 = vmatpush2.bf16.msra.mxu0 0
      %1605 = vmatprep.subr.bf16.mxu0 0
      %1606 = vmatpush2.bf16.msra.mxu0 0
      %1607 = vmatprep.mubr.bf16.mxu0 0
      %1608 = vmatmul.mubr.bf16.gmra.mxu0 %v1519
      %v1609 = vpop.f32.mrf.mxu0
      %v1610 = vadd.f32 0.0, %v1609
      %v1611 = vpop.f32.mrf.mxu0
      %v1612 = vpop.f32.mrf.mxu0
      %v1613 = vadd.f32 0.0, %v1612
      %v1614 = vpop.f32.mrf.mxu0
      %1615 = vmatprep.mubr.bf16.mxu0 0
      %1616 = vmatmul.mubr.bf16.gmra.mxu0 %v1520
      %v1617 = vpop.f32.mrf.mxu0
      %v1618 = vadd.f32 0.0, %v1617
      %v1619 = vpop.f32.mrf.mxu0
      %v1620 = vpop.f32.mrf.mxu0
      %v1621 = vadd.f32 0.0, %v1620
      %v1622 = vpop.f32.mrf.mxu0
      %1623 = vmatprep.mubr.bf16.mxu0 0
      %1624 = vmatmul.mubr.bf16.gmra.mxu0 %v1521
      %v1625 = vpop.f32.mrf.mxu0
      %v1626 = vadd.f32 0.0, %v1625
      %v1627 = vpop.f32.mrf.mxu0
      %v1628 = vpop.f32.mrf.mxu0
      %v1629 = vadd.f32 0.0, %v1628
      %v1630 = vpop.f32.mrf.mxu0
      %1631 = vmatprep.mubr.bf16.mxu0 0
      %1632 = vmatmul.mubr.bf16.gmra.mxu0 %v1522
      %v1633 = vpop.f32.mrf.mxu0
      %v1634 = vadd.f32 0.0, %v1633
      %v1635 = vpop.f32.mrf.mxu0
      %v1636 = vpop.f32.mrf.mxu0
      %v1637 = vadd.f32 0.0, %v1636
      %v1638 = vpop.f32.mrf.mxu0
      %1639 = vdwg.mxu0
      %v1640 = vadd.f32 %v1359, %v1610
      %v1641 = vadd.f32 %v1360, %v1613
      %v1642 = vadd.f32 %v1361, %v1618
      %v1643 = vadd.f32 %v1362, %v1621
      %v1644 = vadd.f32 %v1363, %v1626
      %v1645 = vadd.f32 %v1364, %v1629
      %v1646 = vadd.f32 %v1365, %v1634
      %v1647 = vadd.f32 %v1366, %v1637
      %v1648 = vld [vmem:[%s506] sm:$0xe]
      %v1649 = vld [vmem:[%s506 + $0x8] sm:$0xe]
      %v1650 = vld [vmem:[%s506 + $0x10] sm:$0xe]
      %v1651 = vld [vmem:[%s506 + $0x18] sm:$0xe]
      %v1652 = vld [vmem:[%s506 + $0x20] sm:$0xe]
      %v1653 = vld [vmem:[%s506 + $0x28] sm:$0xe]
      %v1654 = vld [vmem:[%s506 + $0x30] sm:$0xe]
      %v1655 = vld [vmem:[%s506 + $0x38] sm:$0xe]
      %v1672 = vrot.slane %v1648, 5
      %v1673 = vrot.slane %v1672, 4
      %v1674 = vrot.slane %v1368, 5
      %v1675 = vsel %vm1012, %v1673, %v1674
      %v1676 = vrot.slane %v1649, 5
      %v1677 = vrot.slane %v1676, 4
      %v1678 = vrot.slane %v1370, 5
      %v1679 = vsel %vm1012, %v1677, %v1678
      %v1680 = vrot.slane %v1650, 5
      %v1681 = vrot.slane %v1680, 4
      %v1682 = vrot.slane %v1372, 5
      %v1683 = vsel %vm1012, %v1681, %v1682
      %v1684 = vrot.slane %v1651, 5
      %v1685 = vrot.slane %v1684, 4
      %v1686 = vrot.slane %v1374, 5
      %v1687 = vsel %vm1012, %v1685, %v1686
      %v1688 = vrot.slane %v1652, 5
      %v1689 = vrot.slane %v1688, 4
      %v1690 = vrot.slane %v1376, 5
      %v1691 = vsel %vm1012, %v1689, %v1690
      %v1692 = vrot.slane %v1653, 5
      %v1693 = vrot.slane %v1692, 4
      %v1694 = vrot.slane %v1378, 5
      %v1695 = vsel %vm1012, %v1693, %v1694
      %v1696 = vrot.slane %v1654, 5
      %v1697 = vrot.slane %v1696, 4
      %v1698 = vrot.slane %v1380, 5
      %v1699 = vsel %vm1012, %v1697, %v1698
      %v1700 = vrot.slane %v1655, 5
      %v1701 = vrot.slane %v1700, 4
      %v1702 = vrot.slane %v1382, 5
      %v1703 = vsel %vm1012, %v1701, %v1702
      %v1704 = vld [vmem:[%s1 + $0x140] sm:$0xf]
      %v1705 = vld [vmem:[%s1 + $0x144] sm:$0xf]
      %v1706 = vld [vmem:[%s1 + $0x148] sm:$0xf]
      %v1707 = vld [vmem:[%s1 + $0x14c] sm:$0xf]
      %v1708 = vld [vmem:[%s1 + $0x150] sm:$0xf]
      %v1709 = vld [vmem:[%s1 + $0x154] sm:$0xf]
      %v1710 = vld [vmem:[%s1 + $0x158] sm:$0xf]
      %v1711 = vld [vmem:[%s1 + $0x15c] sm:$0xf]
      %v1712 = vld [vmem:[%s1 + $0x160] sm:$0xf]
      %v1713 = vld [vmem:[%s1 + $0x164] sm:$0xf]
      %v1714 = vld [vmem:[%s1 + $0x168] sm:$0xf]
      %v1715 = vld [vmem:[%s1 + $0x16c] sm:$0xf]
      %v1716 = vld [vmem:[%s1 + $0x170] sm:$0xf]
      %v1717 = vld [vmem:[%s1 + $0x174] sm:$0xf]
      %v1718 = vld [vmem:[%s1 + $0x178] sm:$0xf]
      %v1719 = vld [vmem:[%s1 + $0x17c] sm:$0xf]
      %v1720 = vunpack.c.l.b16 %v1675
      %v1721 = vunpack.c.l.b16 %v1679
      %v1722 = vunpack.c.l.b16 %v1683
      %v1723 = vunpack.c.l.b16 %v1687
      %v1724 = vunpack.c.l.b16 %v1691
      %v1725 = vunpack.c.l.b16 %v1695
      %v1726 = vunpack.c.l.b16 %v1699
      %v1727 = vunpack.c.l.b16 %v1703
      %v1728 = vpack.c.b16 %v1721, %v1720
      %v1729 = vpack.c.b16 %v1723, %v1722
      %v1730 = vpack.c.b16 %v1725, %v1724
      %v1731 = vpack.c.b16 %v1727, %v1726
      %v1752 = vunpack.c.l.b16 %v1704
      %v1753 = vunpack.c.l.b16 %v1705
      %v1754 = vunpack.c.l.b16 %v1706
      %v1755 = vunpack.c.l.b16 %v1707
      %v1756 = vunpack.c.l.b16 %v1708
      %v1757 = vunpack.c.l.b16 %v1709
      %v1758 = vunpack.c.l.b16 %v1710
      %v1759 = vunpack.c.l.b16 %v1711
      %v1760 = vunpack.c.l.b16 %v1712
      %v1761 = vunpack.c.l.b16 %v1713
      %v1762 = vunpack.c.l.b16 %v1714
      %v1763 = vunpack.c.l.b16 %v1715
      %v1764 = vunpack.c.l.b16 %v1716
      %v1765 = vunpack.c.l.b16 %v1717
      %v1766 = vunpack.c.l.b16 %v1718
      %v1767 = vunpack.c.l.b16 %v1719
      %v1768 = vpack.c.b16 %v1753, %v1752
      %v1769 = vpack.c.b16 %v1755, %v1754
      %v1770 = vpack.c.b16 %v1757, %v1756
      %v1771 = vpack.c.b16 %v1759, %v1758
      %v1772 = vpack.c.b16 %v1761, %v1760
      %v1773 = vpack.c.b16 %v1763, %v1762
      %v1774 = vpack.c.b16 %v1765, %v1764
      %v1775 = vpack.c.b16 %v1767, %v1766
      %1784 = vmatprep.subr.bf16.mxu0 0
      %1785 = vmatpush1.bf16.msra.mxu0 %v1775
      %1786 = vmatprep.subr.bf16.mxu0 0
      %1787 = vmatpush1.bf16.msra.mxu0 %v1774
      %1788 = vmatprep.subr.bf16.mxu0 0
      %1789 = vmatpush1.bf16.msra.mxu0 %v1773
      %1790 = vmatprep.subr.bf16.mxu0 0
      %1791 = vmatpush1.bf16.msra.mxu0 %v1772
      %1792 = vmatprep.subr.bf16.mxu0 0
      %1793 = vmatpush1.bf16.msra.mxu0 %v1771
      %1794 = vmatprep.subr.bf16.mxu0 0
      %1795 = vmatpush1.bf16.msra.mxu0 %v1770
      %1796 = vmatprep.subr.bf16.mxu0 0
      %1797 = vmatpush1.bf16.msra.mxu0 %v1769
      %1798 = vmatprep.subr.bf16.mxu0 0
      %1799 = vmatpush1.bf16.msra.mxu0 %v1768
      %1800 = vmatprep.subr.bf16.mxu0 0
      %1801 = vmatpush2.bf16.msra.mxu0 0
      %1802 = vmatprep.subr.bf16.mxu0 0
      %1803 = vmatpush2.bf16.msra.mxu0 0
      %1804 = vmatprep.subr.bf16.mxu0 0
      %1805 = vmatpush2.bf16.msra.mxu0 0
      %1806 = vmatprep.subr.bf16.mxu0 0
      %1807 = vmatpush2.bf16.msra.mxu0 0
      %1808 = vmatprep.subr.bf16.mxu0 0
      %1809 = vmatpush2.bf16.msra.mxu0 0
      %1810 = vmatprep.subr.bf16.mxu0 0
      %1811 = vmatpush2.bf16.msra.mxu0 0
      %1812 = vmatprep.subr.bf16.mxu0 0
      %1813 = vmatpush2.bf16.msra.mxu0 0
      %1814 = vmatprep.subr.bf16.mxu0 0
      %1815 = vmatpush2.bf16.msra.mxu0 0
      %1816 = vmatprep.mubr.bf16.mxu0 0
      %1817 = vmatmul.mubr.bf16.gmra.mxu0 %v1728
      %v1818 = vpop.f32.mrf.mxu0
      %v1819 = vadd.f32 0.0, %v1818
      %v1820 = vpop.f32.mrf.mxu0
      %v1821 = vpop.f32.mrf.mxu0
      %v1822 = vadd.f32 0.0, %v1821
      %v1823 = vpop.f32.mrf.mxu0
      %1824 = vmatprep.mubr.bf16.mxu0 0
      %1825 = vmatmul.mubr.bf16.gmra.mxu0 %v1729
      %v1826 = vpop.f32.mrf.mxu0
      %v1827 = vadd.f32 0.0, %v1826
      %v1828 = vpop.f32.mrf.mxu0
      %v1829 = vpop.f32.mrf.mxu0
      %v1830 = vadd.f32 0.0, %v1829
      %v1831 = vpop.f32.mrf.mxu0
      %1832 = vmatprep.mubr.bf16.mxu0 0
      %1833 = vmatmul.mubr.bf16.gmra.mxu0 %v1730
      %v1834 = vpop.f32.mrf.mxu0
      %v1835 = vadd.f32 0.0, %v1834
      %v1836 = vpop.f32.mrf.mxu0
      %v1837 = vpop.f32.mrf.mxu0
      %v1838 = vadd.f32 0.0, %v1837
      %v1839 = vpop.f32.mrf.mxu0
      %1840 = vmatprep.mubr.bf16.mxu0 0
      %1841 = vmatmul.mubr.bf16.gmra.mxu0 %v1731
      %v1842 = vpop.f32.mrf.mxu0
      %v1843 = vadd.f32 0.0, %v1842
      %v1844 = vpop.f32.mrf.mxu0
      %v1845 = vpop.f32.mrf.mxu0
      %v1846 = vadd.f32 0.0, %v1845
      %v1847 = vpop.f32.mrf.mxu0
      %1848 = vdwg.mxu0
      %v1849 = vadd.f32 %v1640, %v1819
      %v1850 = vadd.f32 %v1641, %v1822
      %v1851 = vadd.f32 %v1642, %v1827
      %v1852 = vadd.f32 %v1643, %v1830
      %v1853 = vadd.f32 %v1644, %v1835
      %v1854 = vadd.f32 %v1645, %v1838
      %v1855 = vadd.f32 %v1646, %v1843
      %v1856 = vadd.f32 %v1647, %v1846
      %s1857 = scalar_lea.vmem [#allocation2], 16
      %v1858 = vld [vmem:[%s1857] sm:$0xf]
      %v1859 = vld [vmem:[%s1857 + $0x8] sm:$0xf]
      %v1860 = vld [vmem:[%s1857 + $0x10] sm:$0xf]
      %v1861 = vld [vmem:[%s1857 + $0x18] sm:$0xf]
      %v1862 = vld [vmem:[%s1857 + $0x20] sm:$0xf]
      %v1863 = vld [vmem:[%s1857 + $0x28] sm:$0xf]
      %v1864 = vld [vmem:[%s1857 + $0x30] sm:$0xf]
      %v1865 = vld [vmem:[%s1857 + $0x38] sm:$0xf]
      %v1866 = vld [vmem:[%s1 + $0x180] sm:$0xf]
      %v1867 = vld [vmem:[%s1 + $0x184] sm:$0xf]
      %v1868 = vld [vmem:[%s1 + $0x188] sm:$0xf]
      %v1869 = vld [vmem:[%s1 + $0x18c] sm:$0xf]
      %v1870 = vld [vmem:[%s1 + $0x190] sm:$0xf]
      %v1871 = vld [vmem:[%s1 + $0x194] sm:$0xf]
      %v1872 = vld [vmem:[%s1 + $0x198] sm:$0xf]
      %v1873 = vld [vmem:[%s1 + $0x19c] sm:$0xf]
      %v1874 = vld [vmem:[%s1 + $0x1a0] sm:$0xf]
      %v1875 = vld [vmem:[%s1 + $0x1a4] sm:$0xf]
      %v1876 = vld [vmem:[%s1 + $0x1a8] sm:$0xf]
      %v1877 = vld [vmem:[%s1 + $0x1ac] sm:$0xf]
      %v1878 = vld [vmem:[%s1 + $0x1b0] sm:$0xf]
      %v1879 = vld [vmem:[%s1 + $0x1b4] sm:$0xf]
      %v1880 = vld [vmem:[%s1 + $0x1b8] sm:$0xf]
      %v1881 = vld [vmem:[%s1 + $0x1bc] sm:$0xf]
      %v1890 = vunpack.c.l.b16 %v1858
      %v1891 = vunpack.c.l.b16 %v1859
      %v1892 = vunpack.c.l.b16 %v1860
      %v1893 = vunpack.c.l.b16 %v1861
      %v1894 = vunpack.c.l.b16 %v1862
      %v1895 = vunpack.c.l.b16 %v1863
      %v1896 = vunpack.c.l.b16 %v1864
      %v1897 = vunpack.c.l.b16 %v1865
      %v1898 = vpack.c.b16 %v1891, %v1890
      %v1899 = vpack.c.b16 %v1893, %v1892
      %v1900 = vpack.c.b16 %v1895, %v1894
      %v1901 = vpack.c.b16 %v1897, %v1896
      %v1922 = vunpack.c.l.b16 %v1866
      %v1923 = vunpack.c.l.b16 %v1867
      %v1924 = vunpack.c.l.b16 %v1868
      %v1925 = vunpack.c.l.b16 %v1869
      %v1926 = vunpack.c.l.b16 %v1870
      %v1927 = vunpack.c.l.b16 %v1871
      %v1928 = vunpack.c.l.b16 %v1872
      %v1929 = vunpack.c.l.b16 %v1873
      %v1930 = vunpack.c.l.b16 %v1874
      %v1931 = vunpack.c.l.b16 %v1875
      %v1932 = vunpack.c.l.b16 %v1876
      %v1933 = vunpack.c.l.b16 %v1877
      %v1934 = vunpack.c.l.b16 %v1878
      %v1935 = vunpack.c.l.b16 %v1879
      %v1936 = vunpack.c.l.b16 %v1880
      %v1937 = vunpack.c.l.b16 %v1881
      %v1938 = vpack.c.b16 %v1923, %v1922
      %v1939 = vpack.c.b16 %v1925, %v1924
      %v1940 = vpack.c.b16 %v1927, %v1926
      %v1941 = vpack.c.b16 %v1929, %v1928
      %v1942 = vpack.c.b16 %v1931, %v1930
      %v1943 = vpack.c.b16 %v1933, %v1932
      %v1944 = vpack.c.b16 %v1935, %v1934
      %v1945 = vpack.c.b16 %v1937, %v1936
      %1954 = vmatprep.subr.bf16.mxu0 0
      %1955 = vmatpush1.bf16.msra.mxu0 %v1945
      %1956 = vmatprep.subr.bf16.mxu0 0
      %1957 = vmatpush1.bf16.msra.mxu0 %v1944
      %1958 = vmatprep.subr.bf16.mxu0 0
      %1959 = vmatpush1.bf16.msra.mxu0 %v1943
      %1960 = vmatprep.subr.bf16.mxu0 0
      %1961 = vmatpush1.bf16.msra.mxu0 %v1942
      %1962 = vmatprep.subr.bf16.mxu0 0
      %1963 = vmatpush1.bf16.msra.mxu0 %v1941
      %1964 = vmatprep.subr.bf16.mxu0 0
      %1965 = vmatpush1.bf16.msra.mxu0 %v1940
      %1966 = vmatprep.subr.bf16.mxu0 0
      %1967 = vmatpush1.bf16.msra.mxu0 %v1939
      %1968 = vmatprep.subr.bf16.mxu0 0
      %1969 = vmatpush1.bf16.msra.mxu0 %v1938
      %1970 = vmatprep.subr.bf16.mxu0 0
      %1971 = vmatpush2.bf16.msra.mxu0 0
      %1972 = vmatprep.subr.bf16.mxu0 0
      %1973 = vmatpush2.bf16.msra.mxu0 0
      %1974 = vmatprep.subr.bf16.mxu0 0
      %1975 = vmatpush2.bf16.msra.mxu0 0
      %1976 = vmatprep.subr.bf16.mxu0 0
      %1977 = vmatpush2.bf16.msra.mxu0 0
      %1978 = vmatprep.subr.bf16.mxu0 0
      %1979 = vmatpush2.bf16.msra.mxu0 0
      %1980 = vmatprep.subr.bf16.mxu0 0
      %1981 = vmatpush2.bf16.msra.mxu0 0
      %1982 = vmatprep.subr.bf16.mxu0 0
      %1983 = vmatpush2.bf16.msra.mxu0 0
      %1984 = vmatprep.subr.bf16.mxu0 0
      %1985 = vmatpush2.bf16.msra.mxu0 0
      %1986 = vmatprep.mubr.bf16.mxu0 0
      %1987 = vmatmul.mubr.bf16.gmra.mxu0 %v1898
      %v1988 = vpop.f32.mrf.mxu0
      %v1989 = vadd.f32 0.0, %v1988
      %v1990 = vpop.f32.mrf.mxu0
      %v1991 = vpop.f32.mrf.mxu0
      %v1992 = vadd.f32 0.0, %v1991
      %v1993 = vpop.f32.mrf.mxu0
      %1994 = vmatprep.mubr.bf16.mxu0 0
      %1995 = vmatmul.mubr.bf16.gmra.mxu0 %v1899
      %v1996 = vpop.f32.mrf.mxu0
      %v1997 = vadd.f32 0.0, %v1996
      %v1998 = vpop.f32.mrf.mxu0
      %v1999 = vpop.f32.mrf.mxu0
      %v2000 = vadd.f32 0.0, %v1999
      %v2001 = vpop.f32.mrf.mxu0
      %2002 = vmatprep.mubr.bf16.mxu0 0
      %2003 = vmatmul.mubr.bf16.gmra.mxu0 %v1900
      %v2004 = vpop.f32.mrf.mxu0
      %v2005 = vadd.f32 0.0, %v2004
      %v2006 = vpop.f32.mrf.mxu0
      %v2007 = vpop.f32.mrf.mxu0
      %v2008 = vadd.f32 0.0, %v2007
      %v2009 = vpop.f32.mrf.mxu0
      %2010 = vmatprep.mubr.bf16.mxu0 0
      %2011 = vmatmul.mubr.bf16.gmra.mxu0 %v1901
      %v2012 = vpop.f32.mrf.mxu0
      %v2013 = vadd.f32 0.0, %v2012
      %v2014 = vpop.f32.mrf.mxu0
      %v2015 = vpop.f32.mrf.mxu0
      %v2016 = vadd.f32 0.0, %v2015
      %v2017 = vpop.f32.mrf.mxu0
      %2018 = vdwg.mxu0
      %v2019 = vadd.f32 %v1849, %v1989
      %v2020 = vadd.f32 %v1850, %v1992
      %v2021 = vadd.f32 %v1851, %v1997
      %v2022 = vadd.f32 %v1852, %v2000
      %v2023 = vadd.f32 %v1853, %v2005
      %v2024 = vadd.f32 %v1854, %v2008
      %v2025 = vadd.f32 %v1855, %v2013
      %v2026 = vadd.f32 %v1856, %v2016
      %v2027 = vld [vmem:[%s1857] sm:$0xf]
      %v2028 = vld [vmem:[%s1857 + $0x4] sm:$0x1]
      %v2029 = vld [vmem:[%s1857 + $0x8] sm:$0xf]
      %v2030 = vld [vmem:[%s1857 + $0xc] sm:$0x1]
      %v2031 = vld [vmem:[%s1857 + $0x10] sm:$0xf]
      %v2032 = vld [vmem:[%s1857 + $0x14] sm:$0x1]
      %v2033 = vld [vmem:[%s1857 + $0x18] sm:$0xf]
      %v2034 = vld [vmem:[%s1857 + $0x1c] sm:$0x1]
      %v2035 = vld [vmem:[%s1857 + $0x20] sm:$0xf]
      %v2036 = vld [vmem:[%s1857 + $0x24] sm:$0x1]
      %v2037 = vld [vmem:[%s1857 + $0x28] sm:$0xf]
      %v2038 = vld [vmem:[%s1857 + $0x2c] sm:$0x1]
      %v2039 = vld [vmem:[%s1857 + $0x30] sm:$0xf]
      %v2040 = vld [vmem:[%s1857 + $0x34] sm:$0x1]
      %v2041 = vld [vmem:[%s1857 + $0x38] sm:$0xf]
      %v2042 = vld [vmem:[%s1857 + $0x3c] sm:$0x1]
      %v2044 = vshrl.u32 %v2027, 16
      %v2046 = vrot.slane %v2044, 4
      %v2047 = vshll.u32 %v2027, 16
      %v2049 = vrot.slane %v2047, 5
      %v2050 = vor.u32 %v2046, %v2049
      %v2051 = vrot.slane %v2050, 4
      %v2053 = vshll.u32 %v2028, 16
      %v2055 = vrot.slane %v2053, 5
      %v2056 = vsel %vm591, %v2051, %v2055
      %v2058 = vshrl.u32 %v2029, 16
      %v2060 = vrot.slane %v2058, 4
      %v2061 = vshll.u32 %v2029, 16
      %v2063 = vrot.slane %v2061, 5
      %v2064 = vor.u32 %v2060, %v2063
      %v2065 = vrot.slane %v2064, 4
      %v2067 = vshll.u32 %v2030, 16
      %v2069 = vrot.slane %v2067, 5
      %v2070 = vsel %vm591, %v2065, %v2069
      %v2072 = vshrl.u32 %v2031, 16
      %v2074 = vrot.slane %v2072, 4
      %v2075 = vshll.u32 %v2031, 16
      %v2077 = vrot.slane %v2075, 5
      %v2078 = vor.u32 %v2074, %v2077
      %v2079 = vrot.slane %v2078, 4
      %v2081 = vshll.u32 %v2032, 16
      %v2083 = vrot.slane %v2081, 5
      %v2084 = vsel %vm591, %v2079, %v2083
      %v2086 = vshrl.u32 %v2033, 16
      %v2088 = vrot.slane %v2086, 4
      %v2089 = vshll.u32 %v2033, 16
      %v2091 = vrot.slane %v2089, 5
      %v2092 = vor.u32 %v2088, %v2091
      %v2093 = vrot.slane %v2092, 4
      %v2095 = vshll.u32 %v2034, 16
      %v2097 = vrot.slane %v2095, 5
      %v2098 = vsel %vm591, %v2093, %v2097
      %v2100 = vshrl.u32 %v2035, 16
      %v2102 = vrot.slane %v2100, 4
      %v2103 = vshll.u32 %v2035, 16
      %v2105 = vrot.slane %v2103, 5
      %v2106 = vor.u32 %v2102, %v2105
      %v2107 = vrot.slane %v2106, 4
      %v2109 = vshll.u32 %v2036, 16
      %v2111 = vrot.slane %v2109, 5
      %v2112 = vsel %vm591, %v2107, %v2111
      %v2114 = vshrl.u32 %v2037, 16
      %v2116 = vrot.slane %v2114, 4
      %v2117 = vshll.u32 %v2037, 16
      %v2119 = vrot.slane %v2117, 5
      %v2120 = vor.u32 %v2116, %v2119
      %v2121 = vrot.slane %v2120, 4
      %v2123 = vshll.u32 %v2038, 16
      %v2125 = vrot.slane %v2123, 5
      %v2126 = vsel %vm591, %v2121, %v2125
      %v2128 = vshrl.u32 %v2039, 16
      %v2130 = vrot.slane %v2128, 4
      %v2131 = vshll.u32 %v2039, 16
      %v2133 = vrot.slane %v2131, 5
      %v2134 = vor.u32 %v2130, %v2133
      %v2135 = vrot.slane %v2134, 4
      %v2137 = vshll.u32 %v2040, 16
      %v2139 = vrot.slane %v2137, 5
      %v2140 = vsel %vm591, %v2135, %v2139
      %v2142 = vshrl.u32 %v2041, 16
      %v2144 = vrot.slane %v2142, 4
      %v2145 = vshll.u32 %v2041, 16
      %v2147 = vrot.slane %v2145, 5
      %v2148 = vor.u32 %v2144, %v2147
      %v2149 = vrot.slane %v2148, 4
      %v2151 = vshll.u32 %v2042, 16
      %v2153 = vrot.slane %v2151, 5
      %v2154 = vsel %vm591, %v2149, %v2153
      %v2155 = vld [vmem:[%s1 + $0x1c0] sm:$0xf]
      %v2156 = vld [vmem:[%s1 + $0x1c4] sm:$0xf]
      %v2157 = vld [vmem:[%s1 + $0x1c8] sm:$0xf]
      %v2158 = vld [vmem:[%s1 + $0x1cc] sm:$0xf]
      %v2159 = vld [vmem:[%s1 + $0x1d0] sm:$0xf]
      %v2160 = vld [vmem:[%s1 + $0x1d4] sm:$0xf]
      %v2161 = vld [vmem:[%s1 + $0x1d8] sm:$0xf]
      %v2162 = vld [vmem:[%s1 + $0x1dc] sm:$0xf]
      %v2163 = vld [vmem:[%s1 + $0x1e0] sm:$0xf]
      %v2164 = vld [vmem:[%s1 + $0x1e4] sm:$0xf]
      %v2165 = vld [vmem:[%s1 + $0x1e8] sm:$0xf]
      %v2166 = vld [vmem:[%s1 + $0x1ec] sm:$0xf]
      %v2167 = vld [vmem:[%s1 + $0x1f0] sm:$0xf]
      %v2168 = vld [vmem:[%s1 + $0x1f4] sm:$0xf]
      %v2169 = vld [vmem:[%s1 + $0x1f8] sm:$0xf]
      %v2170 = vld [vmem:[%s1 + $0x1fc] sm:$0xf]
      %v2171 = vunpack.c.l.b16 %v2056
      %v2172 = vunpack.c.l.b16 %v2070
      %v2173 = vunpack.c.l.b16 %v2084
      %v2174 = vunpack.c.l.b16 %v2098
      %v2175 = vunpack.c.l.b16 %v2112
      %v2176 = vunpack.c.l.b16 %v2126
      %v2177 = vunpack.c.l.b16 %v2140
      %v2178 = vunpack.c.l.b16 %v2154
      %v2179 = vpack.c.b16 %v2172, %v2171
      %v2180 = vpack.c.b16 %v2174, %v2173
      %v2181 = vpack.c.b16 %v2176, %v2175
      %v2182 = vpack.c.b16 %v2178, %v2177
      %v2203 = vunpack.c.l.b16 %v2155
      %v2204 = vunpack.c.l.b16 %v2156
      %v2205 = vunpack.c.l.b16 %v2157
      %v2206 = vunpack.c.l.b16 %v2158
      %v2207 = vunpack.c.l.b16 %v2159
      %v2208 = vunpack.c.l.b16 %v2160
      %v2209 = vunpack.c.l.b16 %v2161
      %v2210 = vunpack.c.l.b16 %v2162
      %v2211 = vunpack.c.l.b16 %v2163
      %v2212 = vunpack.c.l.b16 %v2164
      %v2213 = vunpack.c.l.b16 %v2165
      %v2214 = vunpack.c.l.b16 %v2166
      %v2215 = vunpack.c.l.b16 %v2167
      %v2216 = vunpack.c.l.b16 %v2168
      %v2217 = vunpack.c.l.b16 %v2169
      %v2218 = vunpack.c.l.b16 %v2170
      %v2219 = vpack.c.b16 %v2204, %v2203
      %v2220 = vpack.c.b16 %v2206, %v2205
      %v2221 = vpack.c.b16 %v2208, %v2207
      %v2222 = vpack.c.b16 %v2210, %v2209
      %v2223 = vpack.c.b16 %v2212, %v2211
      %v2224 = vpack.c.b16 %v2214, %v2213
      %v2225 = vpack.c.b16 %v2216, %v2215
      %v2226 = vpack.c.b16 %v2218, %v2217
      %2235 = vmatprep.subr.bf16.mxu0 0
      %2236 = vmatpush1.bf16.msra.mxu0 %v2226
      %2237 = vmatprep.subr.bf16.mxu0 0
      %2238 = vmatpush1.bf16.msra.mxu0 %v2225
      %2239 = vmatprep.subr.bf16.mxu0 0
      %2240 = vmatpush1.bf16.msra.mxu0 %v2224
      %2241 = vmatprep.subr.bf16.mxu0 0
      %2242 = vmatpush1.bf16.msra.mxu0 %v2223
      %2243 = vmatprep.subr.bf16.mxu0 0
      %2244 = vmatpush1.bf16.msra.mxu0 %v2222
      %2245 = vmatprep.subr.bf16.mxu0 0
      %2246 = vmatpush1.bf16.msra.mxu0 %v2221
      %2247 = vmatprep.subr.bf16.mxu0 0
      %2248 = vmatpush1.bf16.msra.mxu0 %v2220
      %2249 = vmatprep.subr.bf16.mxu0 0
      %2250 = vmatpush1.bf16.msra.mxu0 %v2219
      %2251 = vmatprep.subr.bf16.mxu0 0
      %2252 = vmatpush2.bf16.msra.mxu0 0
      %2253 = vmatprep.subr.bf16.mxu0 0
      %2254 = vmatpush2.bf16.msra.mxu0 0
      %2255 = vmatprep.subr.bf16.mxu0 0
      %2256 = vmatpush2.bf16.msra.mxu0 0
      %2257 = vmatprep.subr.bf16.mxu0 0
      %2258 = vmatpush2.bf16.msra.mxu0 0
      %2259 = vmatprep.subr.bf16.mxu0 0
      %2260 = vmatpush2.bf16.msra.mxu0 0
      %2261 = vmatprep.subr.bf16.mxu0 0
      %2262 = vmatpush2.bf16.msra.mxu0 0
      %2263 = vmatprep.subr.bf16.mxu0 0
      %2264 = vmatpush2.bf16.msra.mxu0 0
      %2265 = vmatprep.subr.bf16.mxu0 0
      %2266 = vmatpush2.bf16.msra.mxu0 0
      %2267 = vmatprep.mubr.bf16.mxu0 0
      %2268 = vmatmul.mubr.bf16.gmra.mxu0 %v2179
      %v2269 = vpop.f32.mrf.mxu0
      %v2270 = vadd.f32 0.0, %v2269
      %v2271 = vpop.f32.mrf.mxu0
      %v2272 = vpop.f32.mrf.mxu0
      %v2273 = vadd.f32 0.0, %v2272
      %v2274 = vpop.f32.mrf.mxu0
      %2275 = vmatprep.mubr.bf16.mxu0 0
      %2276 = vmatmul.mubr.bf16.gmra.mxu0 %v2180
      %v2277 = vpop.f32.mrf.mxu0
      %v2278 = vadd.f32 0.0, %v2277
      %v2279 = vpop.f32.mrf.mxu0
      %v2280 = vpop.f32.mrf.mxu0
      %v2281 = vadd.f32 0.0, %v2280
      %v2282 = vpop.f32.mrf.mxu0
      %2283 = vmatprep.mubr.bf16.mxu0 0
      %2284 = vmatmul.mubr.bf16.gmra.mxu0 %v2181
      %v2285 = vpop.f32.mrf.mxu0
      %v2286 = vadd.f32 0.0, %v2285
      %v2287 = vpop.f32.mrf.mxu0
      %v2288 = vpop.f32.mrf.mxu0
      %v2289 = vadd.f32 0.0, %v2288
      %v2290 = vpop.f32.mrf.mxu0
      %2291 = vmatprep.mubr.bf16.mxu0 0
      %2292 = vmatmul.mubr.bf16.gmra.mxu0 %v2182
      %v2293 = vpop.f32.mrf.mxu0
      %v2294 = vadd.f32 0.0, %v2293
      %v2295 = vpop.f32.mrf.mxu0
      %v2296 = vpop.f32.mrf.mxu0
      %v2297 = vadd.f32 0.0, %v2296
      %v2298 = vpop.f32.mrf.mxu0
      %2299 = vdwg.mxu0
      %v2300 = vadd.f32 %v2019, %v2270
      %v2301 = vadd.f32 %v2020, %v2273
      %v2302 = vadd.f32 %v2021, %v2278
      %v2303 = vadd.f32 %v2022, %v2281
      %v2304 = vadd.f32 %v2023, %v2286
      %v2305 = vadd.f32 %v2024, %v2289
      %v2306 = vadd.f32 %v2025, %v2294
      %v2307 = vadd.f32 %v2026, %v2297
      %v2308 = vld [vmem:[%s1857] sm:$0xe]
      %v2309 = vld [vmem:[%s1857 + $0x8] sm:$0xe]
      %v2310 = vld [vmem:[%s1857 + $0x10] sm:$0xe]
      %v2311 = vld [vmem:[%s1857 + $0x18] sm:$0xe]
      %v2312 = vld [vmem:[%s1857 + $0x20] sm:$0xe]
      %v2313 = vld [vmem:[%s1857 + $0x28] sm:$0xe]
      %v2314 = vld [vmem:[%s1857 + $0x30] sm:$0xe]
      %v2315 = vld [vmem:[%s1857 + $0x38] sm:$0xe]
      %v2332 = vrot.slane %v2308, 5
      %v2333 = vrot.slane %v2332, 4
      %v2334 = vrot.slane %v2028, 5
      %v2335 = vsel %vm1012, %v2333, %v2334
      %v2336 = vrot.slane %v2309, 5
      %v2337 = vrot.slane %v2336, 4
      %v2338 = vrot.slane %v2030, 5
      %v2339 = vsel %vm1012, %v2337, %v2338
      %v2340 = vrot.slane %v2310, 5
      %v2341 = vrot.slane %v2340, 4
      %v2342 = vrot.slane %v2032, 5
      %v2343 = vsel %vm1012, %v2341, %v2342
      %v2344 = vrot.slane %v2311, 5
      %v2345 = vrot.slane %v2344, 4
      %v2346 = vrot.slane %v2034, 5
      %v2347 = vsel %vm1012, %v2345, %v2346
      %v2348 = vrot.slane %v2312, 5
      %v2349 = vrot.slane %v2348, 4
      %v2350 = vrot.slane %v2036, 5
      %v2351 = vsel %vm1012, %v2349, %v2350
      %v2352 = vrot.slane %v2313, 5
      %v2353 = vrot.slane %v2352, 4
      %v2354 = vrot.slane %v2038, 5
      %v2355 = vsel %vm1012, %v2353, %v2354
      %v2356 = vrot.slane %v2314, 5
      %v2357 = vrot.slane %v2356, 4
      %v2358 = vrot.slane %v2040, 5
      %v2359 = vsel %vm1012, %v2357, %v2358
      %v2360 = vrot.slane %v2315, 5
      %v2361 = vrot.slane %v2360, 4
      %v2362 = vrot.slane %v2042, 5
      %v2363 = vsel %vm1012, %v2361, %v2362
      %v2364 = vld [vmem:[%s1 + $0x200] sm:$0xf]
      %v2365 = vld [vmem:[%s1 + $0x204] sm:$0xf]
      %v2366 = vld [vmem:[%s1 + $0x208] sm:$0xf]
      %v2367 = vld [vmem:[%s1 + $0x20c] sm:$0xf]
      %v2368 = vld [vmem:[%s1 + $0x210] sm:$0xf]
      %v2369 = vld [vmem:[%s1 + $0x214] sm:$0xf]
      %v2370 = vld [vmem:[%s1 + $0x218] sm:$0xf]
      %v2371 = vld [vmem:[%s1 + $0x21c] sm:$0xf]
      %v2372 = vld [vmem:[%s1 + $0x220] sm:$0xf]
      %v2373 = vld [vmem:[%s1 + $0x224] sm:$0xf]
      %v2374 = vld [vmem:[%s1 + $0x228] sm:$0xf]
      %v2375 = vld [vmem:[%s1 + $0x22c] sm:$0xf]
      %v2376 = vld [vmem:[%s1 + $0x230] sm:$0xf]
      %v2377 = vld [vmem:[%s1 + $0x234] sm:$0xf]
      %v2378 = vld [vmem:[%s1 + $0x238] sm:$0xf]
      %v2379 = vld [vmem:[%s1 + $0x23c] sm:$0xf]
      %v2380 = vunpack.c.l.b16 %v2335
      %v2381 = vunpack.c.l.b16 %v2339
      %v2382 = vunpack.c.l.b16 %v2343
      %v2383 = vunpack.c.l.b16 %v2347
      %v2384 = vunpack.c.l.b16 %v2351
      %v2385 = vunpack.c.l.b16 %v2355
      %v2386 = vunpack.c.l.b16 %v2359
      %v2387 = vunpack.c.l.b16 %v2363
      %v2388 = vpack.c.b16 %v2381, %v2380
      %v2389 = vpack.c.b16 %v2383, %v2382
      %v2390 = vpack.c.b16 %v2385, %v2384
      %v2391 = vpack.c.b16 %v2387, %v2386
      %v2412 = vunpack.c.l.b16 %v2364
      %v2413 = vunpack.c.l.b16 %v2365
      %v2414 = vunpack.c.l.b16 %v2366
      %v2415 = vunpack.c.l.b16 %v2367
      %v2416 = vunpack.c.l.b16 %v2368
      %v2417 = vunpack.c.l.b16 %v2369
      %v2418 = vunpack.c.l.b16 %v2370
      %v2419 = vunpack.c.l.b16 %v2371
      %v2420 = vunpack.c.l.b16 %v2372
      %v2421 = vunpack.c.l.b16 %v2373
      %v2422 = vunpack.c.l.b16 %v2374
      %v2423 = vunpack.c.l.b16 %v2375
      %v2424 = vunpack.c.l.b16 %v2376
      %v2425 = vunpack.c.l.b16 %v2377
      %v2426 = vunpack.c.l.b16 %v2378
      %v2427 = vunpack.c.l.b16 %v2379
      %v2428 = vpack.c.b16 %v2413, %v2412
      %v2429 = vpack.c.b16 %v2415, %v2414
      %v2430 = vpack.c.b16 %v2417, %v2416
      %v2431 = vpack.c.b16 %v2419, %v2418
      %v2432 = vpack.c.b16 %v2421, %v2420
      %v2433 = vpack.c.b16 %v2423, %v2422
      %v2434 = vpack.c.b16 %v2425, %v2424
      %v2435 = vpack.c.b16 %v2427, %v2426
      %2444 = vmatprep.subr.bf16.mxu0 0
      %2445 = vmatpush1.bf16.msra.mxu0 %v2435
      %2446 = vmatprep.subr.bf16.mxu0 0
      %2447 = vmatpush1.bf16.msra.mxu0 %v2434
      %2448 = vmatprep.subr.bf16.mxu0 0
      %2449 = vmatpush1.bf16.msra.mxu0 %v2433
      %2450 = vmatprep.subr.bf16.mxu0 0
      %2451 = vmatpush1.bf16.msra.mxu0 %v2432
      %2452 = vmatprep.subr.bf16.mxu0 0
      %2453 = vmatpush1.bf16.msra.mxu0 %v2431
      %2454 = vmatprep.subr.bf16.mxu0 0
      %2455 = vmatpush1.bf16.msra.mxu0 %v2430
      %2456 = vmatprep.subr.bf16.mxu0 0
      %2457 = vmatpush1.bf16.msra.mxu0 %v2429
      %2458 = vmatprep.subr.bf16.mxu0 0
      %2459 = vmatpush1.bf16.msra.mxu0 %v2428
      %2460 = vmatprep.subr.bf16.mxu0 0
      %2461 = vmatpush2.bf16.msra.mxu0 0
      %2462 = vmatprep.subr.bf16.mxu0 0
      %2463 = vmatpush2.bf16.msra.mxu0 0
      %2464 = vmatprep.subr.bf16.mxu0 0
      %2465 = vmatpush2.bf16.msra.mxu0 0
      %2466 = vmatprep.subr.bf16.mxu0 0
      %2467 = vmatpush2.bf16.msra.mxu0 0
      %2468 = vmatprep.subr.bf16.mxu0 0
      %2469 = vmatpush2.bf16.msra.mxu0 0
      %2470 = vmatprep.subr.bf16.mxu0 0
      %2471 = vmatpush2.bf16.msra.mxu0 0
      %2472 = vmatprep.subr.bf16.mxu0 0
      %2473 = vmatpush2.bf16.msra.mxu0 0
      %2474 = vmatprep.subr.bf16.mxu0 0
      %2475 = vmatpush2.bf16.msra.mxu0 0
      %2476 = vmatprep.mubr.bf16.mxu0 0
      %2477 = vmatmul.mubr.bf16.gmra.mxu0 %v2388
      %v2478 = vpop.f32.mrf.mxu0
      %v2479 = vadd.f32 0.0, %v2478
      %v2480 = vpop.f32.mrf.mxu0
      %v2481 = vpop.f32.mrf.mxu0
      %v2482 = vadd.f32 0.0, %v2481
      %v2483 = vpop.f32.mrf.mxu0
      %2484 = vmatprep.mubr.bf16.mxu0 0
      %2485 = vmatmul.mubr.bf16.gmra.mxu0 %v2389
      %v2486 = vpop.f32.mrf.mxu0
      %v2487 = vadd.f32 0.0, %v2486
      %v2488 = vpop.f32.mrf.mxu0
      %v2489 = vpop.f32.mrf.mxu0
      %v2490 = vadd.f32 0.0, %v2489
      %v2491 = vpop.f32.mrf.mxu0
      %2492 = vmatprep.mubr.bf16.mxu0 0
      %2493 = vmatmul.mubr.bf16.gmra.mxu0 %v2390
      %v2494 = vpop.f32.mrf.mxu0
      %v2495 = vadd.f32 0.0, %v2494
      %v2496 = vpop.f32.mrf.mxu0
      %v2497 = vpop.f32.mrf.mxu0
      %v2498 = vadd.f32 0.0, %v2497
      %v2499 = vpop.f32.mrf.mxu0
      %2500 = vmatprep.mubr.bf16.mxu0 0
      %2501 = vmatmul.mubr.bf16.gmra.mxu0 %v2391
      %v2502 = vpop.f32.mrf.mxu0
      %v2503 = vadd.f32 0.0, %v2502
      %v2504 = vpop.f32.mrf.mxu0
      %v2505 = vpop.f32.mrf.mxu0
      %v2506 = vadd.f32 0.0, %v2505
      %v2507 = vpop.f32.mrf.mxu0
      %2508 = vdwg.mxu0
      %v2509 = vadd.f32 %v2300, %v2479
      %v2510 = vadd.f32 %v2301, %v2482
      %v2511 = vadd.f32 %v2302, %v2487
      %v2512 = vadd.f32 %v2303, %v2490
      %v2513 = vadd.f32 %v2304, %v2495
      %v2514 = vadd.f32 %v2305, %v2498
      %v2515 = vadd.f32 %v2306, %v2503
      %v2516 = vadd.f32 %v2307, %v2506
      %v2517 = vpack.c.bf16 %v2510, %v2509
      %v2518 = vpack.c.bf16 %v2512, %v2511
      %v2519 = vpack.c.bf16 %v2514, %v2513
      %v2520 = vpack.c.bf16 %v2516, %v2515
      %v2525 = vunpack.c.l.b16 %v2517
      %v2526 = vunpack.c.h.b16 %v2517
      %v2527 = vunpack.c.l.b16 %v2518
      %v2528 = vunpack.c.h.b16 %v2518
      %v2529 = vunpack.c.l.b16 %v2519
      %v2530 = vunpack.c.h.b16 %v2519
      %v2531 = vunpack.c.l.b16 %v2520
      %v2532 = vunpack.c.h.b16 %v2520
      %v2533 = vpack.c.b16 %v2525, %v2525
      %v2534 = vpack.c.b16 %v2526, %v2526
      %v2535 = vpack.c.b16 %v2527, %v2527
      %v2536 = vpack.c.b16 %v2528, %v2528
      %v2537 = vpack.c.b16 %v2529, %v2529
      %v2538 = vpack.c.b16 %v2530, %v2530
      %v2539 = vpack.c.b16 %v2531, %v2531
      %v2540 = vpack.c.b16 %v2532, %v2532
      %2549 = vst [vmem:[%s262] sm:$0xf] %v2533
      %2550 = vst [vmem:[%s262 + $0x4] sm:$0xf] %v2534
      %2551 = vst [vmem:[%s262 + $0x8] sm:$0xf] %v2535
      %2552 = vst [vmem:[%s262 + $0xc] sm:$0xf] %v2536
      %2553 = vst [vmem:[%s262 + $0x10] sm:$0xf] %v2537
      %2554 = vst [vmem:[%s262 + $0x14] sm:$0xf] %v2538
      %2555 = vst [vmem:[%s262 + $0x18] sm:$0xf] %v2539
      %2556 = vst [vmem:[%s262 + $0x1c] sm:$0xf] %v2540
      %v2557 = vadd.f32 %v2509, %v2510
      %v2558 = vadd.f32 %v2557, %v2511
      %v2559 = vadd.f32 %v2558, %v2512
      %v2560 = vadd.f32 %v2559, %v2513
      %v2561 = vadd.f32 %v2560, %v2514
      %v2562 = vadd.f32 %v2561, %v2515
      %v2563 = vadd.f32 %v2562, %v2516
      %v2564 = vrot.slane %v2563, 4
      %v2565 = vadd.f32 %v2563, %v2564
      %v2566 = vrot.slane %v2565, 2
      %v2567 = vadd.f32 %v2565, %v2566
      %v2568 = vrot.slane %v2567, 1
      %v2569 = vadd.f32 %v2567, %v2568
      %2570 = vst [vmem:[%s265] sm:$0x1] %v2569
      %v2571 = vmul.f32 %v2509, %v2509
      %v2572 = vmul.f32 %v2510, %v2510
      %v2573 = vmul.f32 %v2511, %v2511
      %v2574 = vmul.f32 %v2512, %v2512
      %v2575 = vmul.f32 %v2513, %v2513
      %v2576 = vmul.f32 %v2514, %v2514
      %v2577 = vmul.f32 %v2515, %v2515
      %v2578 = vmul.f32 %v2516, %v2516
      %v2579 = vadd.f32 %v2571, %v2572
      %v2580 = vadd.f32 %v2579, %v2573
      %v2581 = vadd.f32 %v2580, %v2574
      %v2582 = vadd.f32 %v2581, %v2575
      %v2583 = vadd.f32 %v2582, %v2576
      %v2584 = vadd.f32 %v2583, %v2577
      %v2585 = vadd.f32 %v2584, %v2578
      %v2586 = vrot.slane %v2585, 4
      %v2587 = vadd.f32 %v2585, %v2586
      %v2588 = vrot.slane %v2587, 2
      %v2589 = vadd.f32 %v2587, %v2588
      %v2590 = vrot.slane %v2589, 1
      %v2591 = vadd.f32 %v2589, %v2590
      %2592 = vst [vmem:[%s268] sm:$0x1] %v2591
      %p2593 = scmp.lt.s32.totalorder %s18, 1
      %s2594 = scalar_select %p2593, %s18, 1
      %s2595 = smul.addr %s2594, 8
      %s2596 = smul.addr %s2595, 4
      %s2597 = scalar_lea.vmem %s4, %s2596
      %p2598 = scmp.lt.s32.totalorder %s18, 1
      %s2599 = scalar_select %p2598, %s18, 1
      %s2600 = scalar_lea.vmem %s5, %s2599
      %p2601 = scmp.lt.s32.totalorder %s18, 1
      %s2602 = scalar_select %p2601, %s18, 1
      %s2603 = scalar_lea.vmem %s6, %s2602
      // Predicated region
      $region37: #{basic_block_forward.4} parent=35 // pred_check
        %p2604 = pneg %p125
      $region38: #{basic_block_forward.4} parent=35 // pred_check_branch
        %2606 = sbr.rel (%p2604) target = $region40
      $region39: #{basic_block_forward.4} parent=35 // pred_region
        _
      $region40: #{basic_block_forward.4} parent=35 // pred_fallthru
        _
      // Predicated region
      $region41: #{basic_block_forward.4} parent=35 // pred_check
        %p2607 = pneg %p151
      $region42: #{basic_block_forward.4} parent=35 // pred_check_branch
        %2609 = sbr.rel (%p2607) target = $region44
      $region43: #{basic_block_forward.4} parent=35 // pred_region
        _
      $region44: #{basic_block_forward.4} parent=35 // pred_fallthru
        _
      // Predicated region
      $region45: #{basic_block_forward.4} parent=35 // pred_check
        %p2610 = pneg %p177
      $region46: #{basic_block_forward.4} parent=35 // pred_check_branch
        %2612 = sbr.rel (%p2610) target = $region48
      $region47: #{basic_block_forward.4} parent=35 // pred_region
        _
      $region48: #{basic_block_forward.4} parent=35 // pred_fallthru
        _
    $region36: #{basic_block_forward.4} parent=5 // pred_fallthru
      _
    %p2613 = scmp.le.s32.totalorder 2, %s13
    // Predicated region
    $region49: #{basic_block_forward.4} parent=5 // pred_check
      %p2614 = pneg %p2613
    $region50: #{basic_block_forward.4} parent=5 // pred_check_branch
      %2616 = sbr.rel (%p2614) target = $region52
    $region51: #{basic_block_forward.4} parent=5 // pred_region
      %s2617 = ssub.s32 %s13, 2
      // Predicated region
      $region53: #{basic_block_forward.4} parent=51 // pred_check
        %p2618 = pneg %p131
      $region54: #{basic_block_forward.4} parent=51 // pred_check_branch
        %2620 = sbr.rel (%p2618) target = $region56
      $region55: #{basic_block_forward.4} parent=51 // pred_region
        %p2621 = scmp.lt.s32.totalorder %s19, 1
        %s2622 = scalar_select %p2621, %s19, 1
        %s2623 = smul.addr %s2622, 8
        %s2624 = smul.addr %s2623, 4
        %s2625 = scalar_lea.vmem %s4, %s2624
      $region56: #{basic_block_forward.4} parent=51 // pred_fallthru
        _
      // Predicated region
      $region57: #{basic_block_forward.4} parent=51 // pred_check
        %p2626 = pneg %p157
      $region58: #{basic_block_forward.4} parent=51 // pred_check_branch
        %2628 = sbr.rel (%p2626) target = $region60
      $region59: #{basic_block_forward.4} parent=51 // pred_region
        %p2629 = scmp.lt.s32.totalorder %s19, 1
        %s2630 = scalar_select %p2629, %s19, 1
        %s2631 = scalar_lea.vmem %s5, %s2630
      $region60: #{basic_block_forward.4} parent=51 // pred_fallthru
        _
      // Predicated region
      $region61: #{basic_block_forward.4} parent=51 // pred_check
        %p2632 = pneg %p183
      $region62: #{basic_block_forward.4} parent=51 // pred_check_branch
        %2634 = sbr.rel (%p2632) target = $region64
      $region63: #{basic_block_forward.4} parent=51 // pred_region
        %p2635 = scmp.lt.s32.totalorder %s19, 1
        %s2636 = scalar_select %p2635, %s19, 1
        %s2637 = scalar_lea.vmem %s6, %s2636
      $region64: #{basic_block_forward.4} parent=51 // pred_fallthru
        _
    $region52: #{basic_block_forward.4} parent=5 // pred_fallthru
      _
  $region6: #{basic_block_forward.4} parent=0 // loop_footer
    %s17 = sadd.s32 1, %s13
  $region7: #{basic_block_forward.4} parent=0 // loop_footer_branch
    %12 = sbr.rel target = $region3
  $region8: #{basic_block_forward.4} parent=0 // loop_exit
    _

</llo_original>
